<compile_context>
chip_gen: v7x
topology: tpu7x:2x2x1
jax: 0.10.0
libtpu: 0.0.40
codegen_flags: <defaults>
</compile_context>

<pallas_src>
import functools

import jax
import jax.numpy as jnp
import numpy as np
from jax.experimental import pallas as pl
from jax.experimental.pallas import tpu as pltpu


# ----------------------------------------------------------------------------
# Pallas kernels
# ----------------------------------------------------------------------------

def _conv_bn_act_kernel(x_ref, w_ref, p_ref, o_ref, *scratch,
                        K, S, H, W, Ho, Wo, pad, use_act, use_lab):
    """Standard (groups=1) KxK conv as per-tap MXU matmuls + bias (+ReLU +LAB).

    x_ref:    (1, H, W, Cin)       input tile (one image)
    w_ref:    (K*K, Cin, Cout)     conv weights with BN scale pre-folded
    p_ref:    (3, Cout)            rows: [bn_bias, lab_scale, lab_bias]
    o_ref:    (1, Ho, Wo, Cout)
    scratch:  (H+2p, W+2p, Cin)    VMEM padding scratch (only when pad > 0)
    """
    c_in = x_ref.shape[-1]
    c_out = w_ref.shape[-1]

    if pad > 0:
        xpad_ref = scratch[0]
        xpad_ref[...] = jnp.zeros_like(xpad_ref)          # zero border
        xpad_ref[pad:pad + H, pad:pad + W, :] = x_ref[0]   # interior copy
        xp = xpad_ref[...]
    else:
        xp = x_ref[0]

    acc = jnp.zeros((Ho * Wo, c_out), jnp.float32)
    for kh in range(K):
        for kw in range(K):
            if S == 1:
                xt = xp[kh:kh + Ho, kw:kw + Wo, :]
            else:
                xt = xp[kh:kh + S * (Ho - 1) + 1:S,
                        kw:kw + S * (Wo - 1) + 1:S, :]
            acc = acc + jnp.dot(xt.reshape(Ho * Wo, c_in),
                                w_ref[kh * K + kw],
                                preferred_element_type=jnp.float32)

    y = acc + p_ref[0:1, :]                                # folded BN bias
    if use_act:
        y = jnp.maximum(y, 0.0)
        if use_lab:
            y = y * p_ref[1:2, :] + p_ref[2:3, :]          # LearnableAffine
    o_ref[0] = y.reshape(Ho, Wo, c_out).astype(o_ref.dtype)


def _dwconv_bn_act_kernel(x_ref, w_ref, p_ref, o_ref, *scratch,
                          K, S, H, W, Ho, Wo, pad, use_act, use_lab):
    """Depthwise KxK conv (groups == Cin == Cout) on the VPU + bias (+ReLU +LAB).

    x_ref:    (1, H, W, C)
    w_ref:    (K*K, C)            weights with BN scale pre-folded
    p_ref:    (3, C)              rows: [bn_bias, lab_scale, lab_bias]
    o_ref:    (1, Ho, Wo, C)
    scratch:  (H+2p, W+2p, C)     VMEM padding scratch (only when pad > 0)
    """
    c = x_ref.shape[-1]

    if pad > 0:
        xpad_ref = scratch[0]
        xpad_ref[...] = jnp.zeros_like(xpad_ref)
        xpad_ref[pad:pad + H, pad:pad + W, :] = x_ref[0]
        xp = xpad_ref[...]
    else:
        xp = x_ref[0]

    acc = jnp.zeros((Ho, Wo, c), jnp.float32)
    for kh in range(K):
        for kw in range(K):
            if S == 1:
                xt = xp[kh:kh + Ho, kw:kw + Wo, :]
            else:
                xt = xp[kh:kh + S * (Ho - 1) + 1:S,
                        kw:kw + S * (Wo - 1) + 1:S, :]
            tap = kh * K + kw
            acc = acc + xt.astype(jnp.float32) * w_ref[tap:tap + 1, :]

    y = acc + p_ref[0:1, :]
    if use_act:
        y = jnp.maximum(y, 0.0)
        if use_lab:
            y = y * p_ref[1:2, :] + p_ref[2:3, :]
    o_ref[0] = y.astype(o_ref.dtype)


# ----------------------------------------------------------------------------
# Wrapper (public API mirrors the PyTorch module: NCHW in, NCHW out)
# ----------------------------------------------------------------------------

def conv_bn_act(x_nchw, params, *, kernel_size=3, stride=1, groups=1,
                use_act=True, use_lab=False):
    N, Cin, H, W = x_nchw.shape
    K, S = kernel_size, stride
    pad = (K - 1) // 2
    Hp, Wp = H + 2 * pad, W + 2 * pad
    Ho = (H + 2 * pad - K) // S + 1
    Wo = (W + 2 * pad - K) // S + 1

    p = params["p"]
    Cout = p.shape[1]

    # NCHW -> NHWC (channels-last so C rides the 128-lane axis).
    x = jnp.transpose(x_nchw, (0, 2, 3, 1))

    common = dict(K=K, S=S, H=H, W=W, Ho=Ho, Wo=Wo, pad=pad,
                  use_act=use_act, use_lab=use_lab)
    if groups == 1:
        kernel = functools.partial(_conv_bn_act_kernel, **common)
        w = params["w"].reshape(K * K, Cin, Cout)
        w_spec = pl.BlockSpec((K * K, Cin, Cout), lambda n: (0, 0, 0))
        scratch_c = Cin
    elif groups == Cin and Cin == Cout:
        kernel = functools.partial(_dwconv_bn_act_kernel, **common)
        w = params["w"].reshape(K * K, Cout)
        w_spec = pl.BlockSpec((K * K, Cout), lambda n: (0, 0))
        scratch_c = Cout
    else:
        # TODO(synk): grouped conv with 1 < groups < channels not implemented.
        raise NotImplementedError("only groups=1 or depthwise supported")

    scratch_shapes = ([pltpu.VMEM((Hp, Wp, scratch_c), x.dtype)]
                      if pad > 0 else [])

    out = pl.pallas_call(
        kernel,
        out_shape=jax.ShapeDtypeStruct((N, Ho, Wo, Cout), x.dtype),
        grid_spec=pltpu.PrefetchScalarGridSpec(
            num_scalar_prefetch=0,
            grid=(N,),
            in_specs=[
                pl.BlockSpec((1, H, W, Cin), lambda n: (n, 0, 0, 0)),
                w_spec,
                pl.BlockSpec((3, Cout), lambda n: (0, 0)),
            ],
            out_specs=pl.BlockSpec((1, Ho, Wo, Cout), lambda n: (n, 0, 0, 0)),
            scratch_shapes=scratch_shapes,
        ),
        compiler_params=pltpu.CompilerParams(
            dimension_semantics=("parallel",)),
    )(x, w, p)

    return jnp.transpose(out, (0, 3, 1, 2))  # NHWC -> NCHW


# ----------------------------------------------------------------------------
# Parameter construction (deterministic; BN scale folded into conv weights)
# ----------------------------------------------------------------------------

def make_conv_bn_act_params(key, in_ch, out_ch, kernel_size, groups, use_lab,
                            eps=1e-5):
    k1, k2, k3, k4, k5, k6, k7 = jax.random.split(key, 7)
    if groups == 1:
        w = 0.1 * jax.random.normal(
            k1, (kernel_size, kernel_size, in_ch, out_ch), jnp.float32)
    elif groups == in_ch and in_ch == out_ch:
        w = 0.3 * jax.random.normal(
            k1, (kernel_size, kernel_size, out_ch), jnp.float32)
    else:
        raise NotImplementedError("only groups=1 or depthwise supported")

    gamma = jax.random.uniform(k2, (out_ch,), jnp.float32, 0.5, 1.5)
    beta = 0.1 * jax.random.normal(k3, (out_ch,), jnp.float32)
    mean = 0.1 * jax.random.normal(k4, (out_ch,), jnp.float32)
    var = jax.random.uniform(k5, (out_ch,), jnp.float32, 0.5, 1.5)
    bn_scale = gamma / jnp.sqrt(var + eps)
    bn_bias = beta - mean * bn_scale

    if use_lab:
        lab_scale = 1.0 + 0.1 * jax.random.normal(k6, (), jnp.float32)
        lab_bias = 0.1 * jax.random.normal(k7, (), jnp.float32)
    else:
        lab_scale = jnp.float32(1.0)
        lab_bias = jnp.float32(0.0)

    # Fold BN scale into the conv weights (per-output-channel on last axis).
    w_folded = w * bn_scale
    p = jnp.stack([bn_bias,
                   jnp.full((out_ch,), lab_scale, jnp.float32),
                   jnp.full((out_ch,), lab_bias, jnp.float32)], axis=0)

    return {
        "w": w_folded, "p": p,
        "raw": {"w": w, "bn_scale": bn_scale, "bn_bias": bn_bias,
                "lab_scale": lab_scale, "lab_bias": lab_bias},
    }


# ----------------------------------------------------------------------------
# Pure-JAX reference (uses unfolded params) for correctness check
# ----------------------------------------------------------------------------

def conv_bn_act_reference(x_nchw, params, *, kernel_size, stride, groups,
                          use_act, use_lab):
    raw = params["raw"]
    pad = (kernel_size - 1) // 2
    x = jnp.transpose(x_nchw, (0, 2, 3, 1))
    w = raw["w"]
    if w.ndim == 3:                       # depthwise stored (K, K, C) -> HWIO
        w = w[:, :, None, :]
    y = jax.lax.conv_general_dilated(
        x, w, window_strides=(stride, stride),
        padding=[(pad, pad), (pad, pad)],
        dimension_numbers=("NHWC", "HWIO", "NHWC"),
        feature_group_count=groups)
    y = y * raw["bn_scale"] + raw["bn_bias"]
    if use_act:
        y = jnp.maximum(y, 0.0)
        if use_lab:
            y = raw["lab_scale"] * y + raw["lab_bias"]
    return jnp.transpose(y, (0, 3, 1, 2))


# ----------------------------------------------------------------------------
# Main
# ----------------------------------------------------------------------------

if __name__ == "__main__":
    key = jax.random.PRNGKey(0)
    kx, kp1, kp2, kp3 = jax.random.split(key, 4)

    N, H, W = 2, 16, 16
    cases = [
        # HGNetV2-style ConvBNAct configurations (all stride=1 here).
        dict(in_ch=16, out_ch=32, kernel_size=3, stride=1, groups=1,
             use_act=True, use_lab=True),       # 3x3 conv + BN + ReLU + LAB
        dict(in_ch=32, out_ch=32, kernel_size=3, stride=1, groups=32,
             use_act=True, use_lab=False),      # depthwise 3x3 + BN + ReLU
        dict(in_ch=16, out_ch=32, kernel_size=1, stride=1, groups=1,
             use_act=False, use_lab=False),     # 1x1 conv + BN (no act)
    ]
    pkeys = [kp1, kp2, kp3]

    for cfg, pk in zip(cases, pkeys):
        x = jax.random.normal(kx, (N, cfg["in_ch"], H, W), jnp.float32)
        params = make_conv_bn_act_params(
            pk, cfg["in_ch"], cfg["out_ch"], cfg["kernel_size"],
            cfg["groups"], cfg["use_lab"])

        out = conv_bn_act(
            x, params, kernel_size=cfg["kernel_size"], stride=cfg["stride"],
            groups=cfg["groups"], use_act=cfg["use_act"],
            use_lab=cfg["use_lab"])
        out = jax.block_until_ready(out)

        ref = jax.block_until_ready(conv_bn_act_reference(
            x, params, kernel_size=cfg["kernel_size"], stride=cfg["stride"],
            groups=cfg["groups"], use_act=cfg["use_act"],
            use_lab=cfg["use_lab"]))

        pad = (cfg["kernel_size"] - 1) // 2
        Ho = (H + 2 * pad - cfg["kernel_size"]) // cfg["stride"] + 1
        assert out.shape == (N, cfg["out_ch"], Ho, Ho), out.shape
        err = np.max(np.abs(np.asarray(out) - np.asarray(ref)))
        assert np.allclose(np.asarray(out), np.asarray(ref),
                           atol=2e-3, rtol=2e-3), err

    print("KERNEL_OK")
</pallas_src>

<mosaic_0001>
module attributes {stable_mosaic.version = 11 : i64} {
  func.func @_conv_bn_act_kernel(%arg0: i32, %arg1: memref<1x16x16x16xf32, #tpu.memory_space<vmem>>, %arg2: memref<9x16x32xf32, #tpu.memory_space<vmem>>, %arg3: memref<3x32xf32, #tpu.memory_space<vmem>>, %arg4: memref<1x16x16x32xf32, #tpu.memory_space<vmem>>, %arg5: memref<18x18x16xf32, #tpu.memory_space<vmem>>) attributes {dimension_semantics = [#tpu.dimension_semantics<parallel>], iteration_bounds = array<i64: 2>, scalar_prefetch = 0 : i64, scratch_operands = 1 : i64, tpu.core_type = #tpu.core_type<tc>, window_params = [{transform_indices = @transform_0, window_bounds = array<i64: 1, 16, 16, 16>}, {pipeline_mode = #tpu.pipeline_mode<synchronous>, transform_indices = @transform_1, window_bounds = array<i64: 9, 16, 32>}, {pipeline_mode = #tpu.pipeline_mode<synchronous>, transform_indices = @transform_2, window_bounds = array<i64: 3, 32>}, {transform_indices = @transform_3, window_bounds = array<i64: 1, 16, 16, 32>}]} {
    %cst = arith.constant 0.000000e+00 : f32
    %0 = vector.broadcast %cst : f32 to vector<18x18x16xf32>
    %c0 = arith.constant 0 : index
    %c0_0 = arith.constant 0 : index
    %c0_1 = arith.constant 0 : index
    %1 = vector.load %arg5[%c0, %c0_0, %c0_1] : memref<18x18x16xf32, #tpu.memory_space<vmem>>, vector<18x18x16xf32>
    tpu.vector_store %arg5[%c0, %c0_0, %c0_1], %0 {strides = array<i32>} : memref<18x18x16xf32, #tpu.memory_space<vmem>>, vector<18x18x16xf32>,
    %c0_2 = arith.constant 0 : index
    %c0_3 = arith.constant 0 : index
    %c0_4 = arith.constant 0 : index
    %c0_5 = arith.constant 0 : index
    %2 = vector.load %arg1[%c0_2, %c0_3, %c0_4, %c0_5] : memref<1x16x16x16xf32, #tpu.memory_space<vmem>>, vector<1x16x16x16xf32>
    %3 = vector.shape_cast %2 : vector<1x16x16x16xf32> to vector<16x16x16xf32>
    %c1 = arith.constant 1 : index
    %c1_6 = arith.constant 1 : index
    %c0_7 = arith.constant 0 : index
    %4 = vector.load %arg5[%c1, %c1_6, %c0_7] : memref<18x18x16xf32, #tpu.memory_space<vmem>>, vector<16x16x16xf32>
    tpu.vector_store %arg5[%c1, %c1_6, %c0_7], %3 {strides = array<i32>} : memref<18x18x16xf32, #tpu.memory_space<vmem>>, vector<16x16x16xf32>,
    %c0_8 = arith.constant 0 : index
    %c0_9 = arith.constant 0 : index
    %c0_10 = arith.constant 0 : index
    %5 = vector.load %arg5[%c0_8, %c0_9, %c0_10] : memref<18x18x16xf32, #tpu.memory_space<vmem>>, vector<18x18x16xf32>
    %cst_11 = arith.constant 0.000000e+00 : f32
    %6 = vector.broadcast %cst_11 : f32 to vector<256x32xf32>
    %7 = vector.extract_strided_slice %5 {offsets = [0, 0, 0], sizes = [16, 16, 16], strides = [1, 1, 1]} : vector<18x18x16xf32> to vector<16x16x16xf32>
    %8 = vector.shape_cast %7 : vector<16x16x16xf32> to vector<256x16xf32>
    %c0_12 = arith.constant 0 : index
    %c0_13 = arith.constant 0 : index
    %c0_14 = arith.constant 0 : index
    %9 = vector.load %arg2[%c0_12, %c0_13, %c0_14] : memref<9x16x32xf32, #tpu.memory_space<vmem>>, vector<1x16x32xf32>
    %10 = vector.shape_cast %9 : vector<1x16x32xf32> to vector<16x32xf32>
    %cst_15 = arith.constant dense<0.000000e+00> : vector<256x32xf32>
    %11 = tpu.matmul %8, %10, %cst_15 {dimension_numbers = #tpu.dot_dimension_numbers<[1], [0], [0], [1], [0, 0, 1, 1], [], []>} : vector<256x16xf32>, vector<16x32xf32>, vector<256x32xf32> -> vector<256x32xf32>
    %12 = arith.addf %6, %11 : vector<256x32xf32>
    %13 = vector.extract_strided_slice %5 {offsets = [0, 1, 0], sizes = [16, 16, 16], strides = [1, 1, 1]} : vector<18x18x16xf32> to vector<16x16x16xf32>
    %14 = vector.shape_cast %13 : vector<16x16x16xf32> to vector<256x16xf32>
    %c1_16 = arith.constant 1 : index
    %c0_17 = arith.constant 0 : index
    %c0_18 = arith.constant 0 : index
    %15 = vector.load %arg2[%c1_16, %c0_17, %c0_18] : memref<9x16x32xf32, #tpu.memory_space<vmem>>, vector<1x16x32xf32>
    %16 = vector.shape_cast %15 : vector<1x16x32xf32> to vector<16x32xf32>
    %cst_19 = arith.constant dense<0.000000e+00> : vector<256x32xf32>
    %17 = tpu.matmul %14, %16, %cst_19 {dimension_numbers = #tpu.dot_dimension_numbers<[1], [0], [0], [1], [0, 0, 1, 1], [], []>} : vector<256x16xf32>, vector<16x32xf32>, vector<256x32xf32> -> vector<256x32xf32>
    %18 = arith.addf %12, %17 : vector<256x32xf32>
    %19 = vector.extract_strided_slice %5 {offsets = [0, 2, 0], sizes = [16, 16, 16], strides = [1, 1, 1]} : vector<18x18x16xf32> to vector<16x16x16xf32>
    %20 = vector.shape_cast %19 : vector<16x16x16xf32> to vector<256x16xf32>
    %c2 = arith.constant 2 : index
    %c0_20 = arith.constant 0 : index
    %c0_21 = arith.constant 0 : index
    %21 = vector.load %arg2[%c2, %c0_20, %c0_21] : memref<9x16x32xf32, #tpu.memory_space<vmem>>, vector<1x16x32xf32>
    %22 = vector.shape_cast %21 : vector<1x16x32xf32> to vector<16x32xf32>
    %cst_22 = arith.constant dense<0.000000e+00> : vector<256x32xf32>
    %23 = tpu.matmul %20, %22, %cst_22 {dimension_numbers = #tpu.dot_dimension_numbers<[1], [0], [0], [1], [0, 0, 1, 1], [], []>} : vector<256x16xf32>, vector<16x32xf32>, vector<256x32xf32> -> vector<256x32xf32>
    %24 = arith.addf %18, %23 : vector<256x32xf32>
    %25 = vector.extract_strided_slice %5 {offsets = [1, 0, 0], sizes = [16, 16, 16], strides = [1, 1, 1]} : vector<18x18x16xf32> to vector<16x16x16xf32>
    %26 = vector.shape_cast %25 : vector<16x16x16xf32> to vector<256x16xf32>
    %c3 = arith.constant 3 : index
    %c0_23 = arith.constant 0 : index
    %c0_24 = arith.constant 0 : index
    %27 = vector.load %arg2[%c3, %c0_23, %c0_24] : memref<9x16x32xf32, #tpu.memory_space<vmem>>, vector<1x16x32xf32>
    %28 = vector.shape_cast %27 : vector<1x16x32xf32> to vector<16x32xf32>
    %cst_25 = arith.constant dense<0.000000e+00> : vector<256x32xf32>
    %29 = tpu.matmul %26, %28, %cst_25 {dimension_numbers = #tpu.dot_dimension_numbers<[1], [0], [0], [1], [0, 0, 1, 1], [], []>} : vector<256x16xf32>, vector<16x32xf32>, vector<256x32xf32> -> vector<256x32xf32>
    %30 = arith.addf %24, %29 : vector<256x32xf32>
    %31 = vector.extract_strided_slice %5 {offsets = [1, 1, 0], sizes = [16, 16, 16], strides = [1, 1, 1]} : vector<18x18x16xf32> to vector<16x16x16xf32>
    %32 = vector.shape_cast %31 : vector<16x16x16xf32> to vector<256x16xf32>
    %c4 = arith.constant 4 : index
    %c0_26 = arith.constant 0 : index
    %c0_27 = arith.constant 0 : index
    %33 = vector.load %arg2[%c4, %c0_26, %c0_27] : memref<9x16x32xf32, #tpu.memory_space<vmem>>, vector<1x16x32xf32>
    %34 = vector.shape_cast %33 : vector<1x16x32xf32> to vector<16x32xf32>
    %cst_28 = arith.constant dense<0.000000e+00> : vector<256x32xf32>
    %35 = tpu.matmul %32, %34, %cst_28 {dimension_numbers = #tpu.dot_dimension_numbers<[1], [0], [0], [1], [0, 0, 1, 1], [], []>} : vector<256x16xf32>, vector<16x32xf32>, vector<256x32xf32> -> vector<256x32xf32>
    %36 = arith.addf %30, %35 : vector<256x32xf32>
    %37 = vector.extract_strided_slice %5 {offsets = [1, 2, 0], sizes = [16, 16, 16], strides = [1, 1, 1]} : vector<18x18x16xf32> to vector<16x16x16xf32>
    %38 = vector.shape_cast %37 : vector<16x16x16xf32> to vector<256x16xf32>
    %c5 = arith.constant 5 : index
    %c0_29 = arith.constant 0 : index
    %c0_30 = arith.constant 0 : index
    %39 = vector.load %arg2[%c5, %c0_29, %c0_30] : memref<9x16x32xf32, #tpu.memory_space<vmem>>, vector<1x16x32xf32>
    %40 = vector.shape_cast %39 : vector<1x16x32xf32> to vector<16x32xf32>
    %cst_31 = arith.constant dense<0.000000e+00> : vector<256x32xf32>
    %41 = tpu.matmul %38, %40, %cst_31 {dimension_numbers = #tpu.dot_dimension_numbers<[1], [0], [0], [1], [0, 0, 1, 1], [], []>} : vector<256x16xf32>, vector<16x32xf32>, vector<256x32xf32> -> vector<256x32xf32>
    %42 = arith.addf %36, %41 : vector<256x32xf32>
    %43 = vector.extract_strided_slice %5 {offsets = [2, 0, 0], sizes = [16, 16, 16], strides = [1, 1, 1]} : vector<18x18x16xf32> to vector<16x16x16xf32>
    %44 = vector.shape_cast %43 : vector<16x16x16xf32> to vector<256x16xf32>
    %c6 = arith.constant 6 : index
    %c0_32 = arith.constant 0 : index
    %c0_33 = arith.constant 0 : index
    %45 = vector.load %arg2[%c6, %c0_32, %c0_33] : memref<9x16x32xf32, #tpu.memory_space<vmem>>, vector<1x16x32xf32>
    %46 = vector.shape_cast %45 : vector<1x16x32xf32> to vector<16x32xf32>
    %cst_34 = arith.constant dense<0.000000e+00> : vector<256x32xf32>
    %47 = tpu.matmul %44, %46, %cst_34 {dimension_numbers = #tpu.dot_dimension_numbers<[1], [0], [0], [1], [0, 0, 1, 1], [], []>} : vector<256x16xf32>, vector<16x32xf32>, vector<256x32xf32> -> vector<256x32xf32>
    %48 = arith.addf %42, %47 : vector<256x32xf32>
    %49 = vector.extract_strided_slice %5 {offsets = [2, 1, 0], sizes = [16, 16, 16], strides = [1, 1, 1]} : vector<18x18x16xf32> to vector<16x16x16xf32>
    %50 = vector.shape_cast %49 : vector<16x16x16xf32> to vector<256x16xf32>
    %c7 = arith.constant 7 : index
    %c0_35 = arith.constant 0 : index
    %c0_36 = arith.constant 0 : index
    %51 = vector.load %arg2[%c7, %c0_35, %c0_36] : memref<9x16x32xf32, #tpu.memory_space<vmem>>, vector<1x16x32xf32>
    %52 = vector.shape_cast %51 : vector<1x16x32xf32> to vector<16x32xf32>
    %cst_37 = arith.constant dense<0.000000e+00> : vector<256x32xf32>
    %53 = tpu.matmul %50, %52, %cst_37 {dimension_numbers = #tpu.dot_dimension_numbers<[1], [0], [0], [1], [0, 0, 1, 1], [], []>} : vector<256x16xf32>, vector<16x32xf32>, vector<256x32xf32> -> vector<256x32xf32>
    %54 = arith.addf %48, %53 : vector<256x32xf32>
    %55 = vector.extract_strided_slice %5 {offsets = [2, 2, 0], sizes = [16, 16, 16], strides = [1, 1, 1]} : vector<18x18x16xf32> to vector<16x16x16xf32>
    %56 = vector.shape_cast %55 : vector<16x16x16xf32> to vector<256x16xf32>
    %c8 = arith.constant 8 : index
    %c0_38 = arith.constant 0 : index
    %c0_39 = arith.constant 0 : index
    %57 = vector.load %arg2[%c8, %c0_38, %c0_39] : memref<9x16x32xf32, #tpu.memory_space<vmem>>, vector<1x16x32xf32>
    %58 = vector.shape_cast %57 : vector<1x16x32xf32> to vector<16x32xf32>
    %cst_40 = arith.constant dense<0.000000e+00> : vector<256x32xf32>
    %59 = tpu.matmul %56, %58, %cst_40 {dimension_numbers = #tpu.dot_dimension_numbers<[1], [0], [0], [1], [0, 0, 1, 1], [], []>} : vector<256x16xf32>, vector<16x32xf32>, vector<256x32xf32> -> vector<256x32xf32>
    %60 = arith.addf %54, %59 : vector<256x32xf32>
    %c0_41 = arith.constant 0 : index
    %c0_42 = arith.constant 0 : index
    %61 = vector.load %arg3[%c0_41, %c0_42] : memref<3x32xf32, #tpu.memory_space<vmem>>, vector<1x32xf32>
    %62 = vector.broadcast %61 : vector<1x32xf32> to vector<256x32xf32>
    %63 = arith.addf %60, %62 : vector<256x32xf32>
    %cst_43 = arith.constant 0.000000e+00 : f32
    %64 = vector.broadcast %cst_43 : f32 to vector<256x32xf32>
    %65 = arith.maximumf %63, %64 : vector<256x32xf32>
    %c1_44 = arith.constant 1 : index
    %c0_45 = arith.constant 0 : index
    %66 = vector.load %arg3[%c1_44, %c0_45] : memref<3x32xf32, #tpu.memory_space<vmem>>, vector<1x32xf32>
    %67 = vector.broadcast %66 : vector<1x32xf32> to vector<256x32xf32>
    %68 = arith.mulf %65, %67 : vector<256x32xf32>
    %c2_46 = arith.constant 2 : index
    %c0_47 = arith.constant 0 : index
    %69 = vector.load %arg3[%c2_46, %c0_47] : memref<3x32xf32, #tpu.memory_space<vmem>>, vector<1x32xf32>
    %70 = vector.broadcast %69 : vector<1x32xf32> to vector<256x32xf32>
    %71 = arith.addf %68, %70 : vector<256x32xf32>
    %72 = vector.shape_cast %71 : vector<256x32xf32> to vector<16x16x32xf32>
    %c0_48 = arith.constant 0 : index
    %c0_49 = arith.constant 0 : index
    %c0_50 = arith.constant 0 : index
    %c0_51 = arith.constant 0 : index
    %73 = vector.load %arg4[%c0_48, %c0_49, %c0_50, %c0_51] : memref<1x16x16x32xf32, #tpu.memory_space<vmem>>, vector<1x16x16x32xf32>
    %74 = vector.shape_cast %73 : vector<1x16x16x32xf32> to vector<16x16x32xf32>
    %75 = vector.shape_cast %72 : vector<16x16x32xf32> to vector<1x16x16x32xf32>
    tpu.vector_store %arg4[%c0_48, %c0_49, %c0_50, %c0_51], %75 {strides = array<i32>} : memref<1x16x16x32xf32, #tpu.memory_space<vmem>>, vector<1x16x16x32xf32>,
    return
  }
  func.func @transform_0(%arg0: i32) -> (i32, i32, i32, i32) {
    %c0_i32 = arith.constant 0 : i32
    %c0_i32_0 = arith.constant 0 : i32
    %c0_i32_1 = arith.constant 0 : i32
    %c0_i32_2 = arith.constant 0 : i32
    return %arg0, %c0_i32, %c0_i32_0, %c0_i32_1 : i32, i32, i32, i32
  }
  func.func @transform_1(%arg0: i32) -> (i32, i32, i32) {
    %c0_i32 = arith.constant 0 : i32
    %c0_i32_0 = arith.constant 0 : i32
    %c0_i32_1 = arith.constant 0 : i32
    %c0_i32_2 = arith.constant 0 : i32
    return %c0_i32, %c0_i32_0, %c0_i32_1 : i32, i32, i32
  }
  func.func @transform_2(%arg0: i32) -> (i32, i32) {
    %c0_i32 = arith.constant 0 : i32
    %c0_i32_0 = arith.constant 0 : i32
    %c0_i32_1 = arith.constant 0 : i32
    return %c0_i32, %c0_i32_0 : i32, i32
  }
  func.func @transform_3(%arg0: i32) -> (i32, i32, i32, i32) {
    %c0_i32 = arith.constant 0 : i32
    %c0_i32_0 = arith.constant 0 : i32
    %c0_i32_1 = arith.constant 0 : i32
    %c0_i32_2 = arith.constant 0 : i32
    return %arg0, %c0_i32, %c0_i32_0, %c0_i32_1 : i32, i32, i32, i32
  }
}

</mosaic_0001>

<llo_original>
// kernel: tpu_custom_call.1
$region0: #{tpu_custom_call.1}
  #allocation0 [shape = 'u32[]', space=smem, size = 0x4, offset = 0x4, fixed_abs, tag = 'smem constant byte address 0x4 - core index']
  #allocation1 [shape = 'u32[144,128]{1,0:T(1,128)}', space=vmem, size = 0x12000, scoped, tag = 'internal scratch']
  #allocation2 [shape = 'f32[18,18,16]{2,1,0:T(8,128)}', space=vmem, size = 0x36000, scoped, tag = 'scratch operand']
  %s0 = inlined_call_operand.hbm [shape: f32[2,16,16,16], index: 0, kind: input, shape index: {}]
  %s1 = inlined_call_operand.hbm [shape: f32[9,16,32], index: 1, kind: input, shape index: {}]
  %s2 = inlined_call_operand.vmem [shape: f32[3,32], index: 2, kind: input, shape index: {}]
  %s3 = inlined_call_operand.hbm [shape: f32[2,16,16,32], index: 3, kind: output, shape index: {}]
  %s4 = sld [smem:[#allocation0]]
  $region53: #{tpu_custom_call.1} parent=0
    _
  %s6 = ssub.s32 1, %s4
  %s7 = scalar_select 0, %s6, %s4
  $region1: #{tpu_custom_call.1} parent=0
    #allocation3 [shape = 'u8[262144]{0}', space=vmem, size = 0x40000, scoped, tag = 'input window, operand 0']
    #allocation4 [shape = 's32[2]{0}', space=sflag, size = 0x8, scoped, tag = 'scoped memory for tpu_custom_call.1']
    #allocation5 [shape = 's32[2]{0}', space=sflag, size = 0x8, scoped, tag = 'scoped memory for tpu_custom_call.1']
    #allocation6 [shape = 'u8[73728]{0}', space=vmem, size = 0x12000, scoped, tag = 'input window, operand 1, single buffered']
    #allocation7 [shape = 's32[1]{0}', space=sflag, size = 0x4, scoped, tag = 'scoped memory for tpu_custom_call.1']
    #allocation8 [shape = 'u8[262144]{0}', space=vmem, size = 0x40000, scoped, tag = 'output window, operand 0']
    %8 = vsyncpa [#allocation4], 0
    %s9 = scalar_lea.sflag [#allocation4], 1
    %10 = vsyncpa %s9, 0
    %11 = vsyncpa [#allocation7], 0
    %12 = vsyncpa [#allocation5], 0
    %s13 = scalar_lea.sflag [#allocation5], 1
    %14 = vsyncpa %s13, 0
    loop: start=0, step=1, limit=4
    $region2: #{tpu_custom_call.1} parent=1 // loop_pre_header
      _
    $region3: #{tpu_custom_call.1} parent=1 // loop_header
      %s16 = sphi 0, %s20
      %p17 = scmp.ge.s32.totalorder %s16, 4
      %s26 = sphi 0, %s28
      %s29 = sphi 0, %s26
      %s30 = sphi 0, %s29
      %s46 = sphi 0, %s30
      %s50 = sphi 0, %s50
      %s52 = sphi 0, %s50
      %s53 = sphi 0, %s52
      %s67 = sphi 0, %s53
      %s71 = sphi 0, %s71
      %s73 = sphi 0, %s71
      %s74 = sphi 0, %s73
      %s88 = sphi 0, %s74
      %s94 = sphi 0, %s96
      %s97 = sphi 0, %s94
      %s98 = sphi 0, %s97
      %s114 = sphi 0, %s98
    $region4: #{tpu_custom_call.1} parent=1 // loop_header_branch
      %19 = sbr.rel (%p17) target = $region8
    $region5: #{tpu_custom_call.1} parent=1 // loop_body
      %s21 = ssub.s32 %s16, 1
      %s22 = ssub.s32 %s16, 2
      %s23 = sadd.s32 %s16, 1
      %s24 = ssub.s32 %s16, %s23
      %p25 = scmp.eq.s32.totalorder %s24, 0
      %s27 = sadd.s32 %s26, 1
      %s28 = scalar_select %p25, %s26, %s27
      %p31 = pneg %p25
      %p32 = scmp.eq.s32.totalorder %s16, 1
      %p33 = por %p31, %p32
      %p34 = scmp.ne.s32.totalorder %s26, %s29
      %p35 = scmp.eq.s32.totalorder %s16, 0
      %p36 = por %p34, %p35
      %p37 = scmp.ne.s32.totalorder %s26, %s29
      %p38 = scmp.eq.s32.totalorder %s21, 1
      %p39 = por %p37, %p38
      %p40 = scmp.ne.s32.totalorder %s29, %s30
      %p41 = scmp.eq.s32.totalorder %s21, 0
      %p42 = por %p40, %p41
      %p43 = scmp.ne.s32.totalorder %s29, %s30
      %p44 = scmp.eq.s32.totalorder %s22, 1
      %p45 = por %p43, %p44
      %p47 = scmp.ne.s32.totalorder %s30, %s46
      %p48 = scmp.eq.s32.totalorder %s22, 0
      %p49 = por %p47, %p48
      %s51 = sadd.s32 %s50, 1
      %p54 = scmp.eq.s32.totalorder %s16, 1
      %p55 = scmp.ne.s32.totalorder %s50, %s52
      %p56 = scmp.eq.s32.totalorder %s16, 0
      %p57 = por %p55, %p56
      %p58 = scmp.ne.s32.totalorder %s50, %s52
      %p59 = scmp.eq.s32.totalorder %s21, 1
      %p60 = por %p58, %p59
      %p61 = scmp.ne.s32.totalorder %s52, %s53
      %p62 = scmp.eq.s32.totalorder %s21, 0
      %p63 = por %p61, %p62
      %p64 = scmp.ne.s32.totalorder %s52, %s53
      %p65 = scmp.eq.s32.totalorder %s22, 1
      %p66 = por %p64, %p65
      %p68 = scmp.ne.s32.totalorder %s53, %s67
      %p69 = scmp.eq.s32.totalorder %s22, 0
      %p70 = por %p68, %p69
      %s72 = sadd.s32 %s71, 1
      %p75 = scmp.eq.s32.totalorder %s16, 1
      %p76 = scmp.ne.s32.totalorder %s71, %s73
      %p77 = scmp.eq.s32.totalorder %s16, 0
      %p78 = por %p76, %p77
      %p79 = scmp.ne.s32.totalorder %s71, %s73
      %p80 = scmp.eq.s32.totalorder %s21, 1
      %p81 = por %p79, %p80
      %p82 = scmp.ne.s32.totalorder %s73, %s74
      %p83 = scmp.eq.s32.totalorder %s21, 0
      %p84 = por %p82, %p83
      %p85 = scmp.ne.s32.totalorder %s73, %s74
      %p86 = scmp.eq.s32.totalorder %s22, 1
      %p87 = por %p85, %p86
      %p89 = scmp.ne.s32.totalorder %s74, %s88
      %p90 = scmp.eq.s32.totalorder %s22, 0
      %p91 = por %p89, %p90
      %s92 = ssub.s32 %s16, %s23
      %p93 = scmp.eq.s32.totalorder %s92, 0
      %s95 = sadd.s32 %s94, 1
      %s96 = scalar_select %p93, %s94, %s95
      %p99 = pneg %p93
      %p100 = scmp.eq.s32.totalorder %s16, 1
      %p101 = por %p99, %p100
      %p102 = scmp.ne.s32.totalorder %s94, %s97
      %p103 = scmp.eq.s32.totalorder %s16, 0
      %p104 = por %p102, %p103
      %p105 = scmp.ne.s32.totalorder %s94, %s97
      %p106 = scmp.eq.s32.totalorder %s21, 1
      %p107 = por %p105, %p106
      %p108 = scmp.ne.s32.totalorder %s97, %s98
      %p109 = scmp.eq.s32.totalorder %s21, 0
      %p110 = por %p108, %p109
      %p111 = scmp.ne.s32.totalorder %s97, %s98
      %p112 = scmp.eq.s32.totalorder %s22, 1
      %p113 = por %p111, %p112
      %p115 = scmp.ne.s32.totalorder %s98, %s114
      %p116 = scmp.eq.s32.totalorder %s22, 0
      %p117 = por %p115, %p116
      %p118 = scmp.le.s32.totalorder 1, %s16
      %p119 = scmp.lt.s32.totalorder %s16, 3
      %p120 = pnand %p118, %p119
      %p121 = pneg %p120
      // Predicated region
      $region9: #{tpu_custom_call.1} parent=5 // pred_check
        _
      $region10: #{tpu_custom_call.1} parent=5 // pred_check_branch
        %123 = sbr.rel (%p120) target = $region12
      $region11: #{tpu_custom_call.1} parent=5 // pred_region
        %s124 = ssub.s32 %s16, 1
        // Predicated region
        $region13: #{tpu_custom_call.1} parent=11 // pred_check
          %p125 = pneg %p63
        $region14: #{tpu_custom_call.1} parent=11 // pred_check_branch
          %127 = sbr.rel (%p125) target = $region16
        $region15: #{tpu_custom_call.1} parent=11 // pred_region
          %s129 = ssub.s32 2304, 2304
          %130 = vsyncadd [#allocation7], %s129
          %s131 = sshll.u32 [#allocation6], 4
          %s132 = int_to_ptr.vmem [resolvable:$true] %s131
          %137 = dma.hbm_to_vmem [thread:$0]  %s1, 2304, %s132, [#allocation7], 128, 128, 8
        $region16: #{tpu_custom_call.1} parent=11 // pred_fallthru
          _
        // Predicated region
        $region17: #{tpu_custom_call.1} parent=11 // pred_check
          %p138 = pneg %p84
        $region18: #{tpu_custom_call.1} parent=11 // pred_check_branch
          %140 = sbr.rel (%p138) target = $region20
        $region19: #{tpu_custom_call.1} parent=11 // pred_region
          _
        $region20: #{tpu_custom_call.1} parent=11 // pred_fallthru
          _
      $region12: #{tpu_custom_call.1} parent=5 // pred_fallthru
        _
      %p141 = scmp.lt.s32.totalorder %s16, 2
      // Predicated region
      $region21: #{tpu_custom_call.1} parent=5 // pred_check
        %p142 = pneg %p141
      $region22: #{tpu_custom_call.1} parent=5 // pred_check_branch
        %144 = sbr.rel (%p142) target = $region24
      $region23: #{tpu_custom_call.1} parent=5 // pred_region
        // Predicated region
        $region25: #{tpu_custom_call.1} parent=23 // pred_check
          %p145 = pneg %p36
        $region26: #{tpu_custom_call.1} parent=23 // pred_check_branch
          %147 = sbr.rel (%p145) target = $region28
        $region27: #{tpu_custom_call.1} parent=23 // pred_region
          %s148 = sand.u32 %s26, 1
          %s149 = scalar_lea.sflag [#allocation4], %s148
          %s150 = sand.u32 %s26, 1
          %s151 = smul.addr %s150, 256
          %s152 = scalar_lea.vmem [#allocation3], %s151
          %s154 = ssub.s32 4096, 4096
          %155 = vsyncadd %s149, %s154
          %s156 = smul.addr %s16, 32
          %s157 = smul.addr %s156, 128
          %s158 = scalar_lea.hbm %s0, %s157
          %s159 = sshll.u32 %s152, 4
          %s160 = int_to_ptr.vmem [resolvable:$true] %s159
          %165 = dma.hbm_to_vmem [thread:$0]  %s158, 4096, %s160, %s149, 128, 128, 8
        $region28: #{tpu_custom_call.1} parent=23 // pred_fallthru
          _
      $region24: #{tpu_custom_call.1} parent=5 // pred_fallthru
        _
      %p166 = scmp.le.s32.totalorder 1, %s16
      %p167 = scmp.lt.s32.totalorder %s16, 3
      %p168 = pnand %p166, %p167
      %p169 = pneg %p168
      // Predicated region
      $region29: #{tpu_custom_call.1} parent=5 // pred_check
        _
      $region30: #{tpu_custom_call.1} parent=5 // pred_check_branch
        %171 = sbr.rel (%p168) target = $region32
      $region31: #{tpu_custom_call.1} parent=5 // pred_region
        %s172 = ssub.s32 %s16, 1
        %s173 = sand.u32 %s29, 1
        %s174 = scalar_lea.sflag [#allocation4], %s173
        %s175 = sand.u32 %s29, 1
        %s176 = smul.addr %s175, 256
        %s177 = scalar_lea.vmem [#allocation3], %s176
        // Predicated region
        $region33: #{tpu_custom_call.1} parent=31 // pred_check
          %p178 = pneg %p42
        $region34: #{tpu_custom_call.1} parent=31 // pred_check_branch
          %180 = sbr.rel (%p178) target = $region36
        $region35: #{tpu_custom_call.1} parent=31 // pred_region
          %181 = dma.done %s174, 4096
        $region36: #{tpu_custom_call.1} parent=31 // pred_fallthru
          _
        // Predicated region
        $region37: #{tpu_custom_call.1} parent=31 // pred_check
          %p182 = pneg %p63
        $region38: #{tpu_custom_call.1} parent=31 // pred_check_branch
          %184 = sbr.rel (%p182) target = $region40
        $region39: #{tpu_custom_call.1} parent=31 // pred_region
          %185 = dma.done [#allocation7], 2304
        $region40: #{tpu_custom_call.1} parent=31 // pred_fallthru
          _
        %s186 = sand.u32 %s29, 1
        %s187 = scalar_lea.sflag [#allocation4], %s186
        %s188 = sand.u32 %s29, 1
        %s189 = smul.addr %s188, 256
        %s190 = scalar_lea.vmem [#allocation3], %s189
        %p191 = pneg %p42
        %p192 = pneg %p39
        %p193 = pneg %p63
        %p194 = pneg %p60
        %p195 = pneg %p84
        %p196 = pneg %p81
        %p197 = pneg %p110
        %p198 = pneg %p107
        %s199 = sand.u32 %s97, 1
        %s200 = scalar_lea.sflag [#allocation5], %s199
        %s201 = sand.u32 %s97, 1
        %s202 = smul.addr %s201, 256
        %s203 = scalar_lea.vmem [#allocation8], %s202
        %vm204 = vcmask 130048
        %205 = vst.msk [vmem:[#allocation2] sm:$0xff] %vm204, 0.0
        %206 = vst.msk [vmem:[#allocation2 + $0x8] sm:$0xff] %vm204, 0.0
        %vm207 = vcmask 123904
        %208 = vst.msk [vmem:[#allocation2 + $0x10] sm:$0x3] %vm207, 0.0
        %209 = vst.msk [vmem:[#allocation2 + $0x18] sm:$0xff] %vm204, 0.0
        %210 = vst.msk [vmem:[#allocation2 + $0x20] sm:$0xff] %vm204, 0.0
        %211 = vst.msk [vmem:[#allocation2 + $0x28] sm:$0x3] %vm207, 0.0
        %212 = vst.msk [vmem:[#allocation2 + $0x30] sm:$0xff] %vm204, 0.0
        %213 = vst.msk [vmem:[#allocation2 + $0x38] sm:$0xff] %vm204, 0.0
        %214 = vst.msk [vmem:[#allocation2 + $0x40] sm:$0x3] %vm207, 0.0
        %215 = vst.msk [vmem:[#allocation2 + $0x48] sm:$0xff] %vm204, 0.0
        %216 = vst.msk [vmem:[#allocation2 + $0x50] sm:$0xff] %vm204, 0.0
        %217 = vst.msk [vmem:[#allocation2 + $0x58] sm:$0x3] %vm207, 0.0
        %218 = vst.msk [vmem:[#allocation2 + $0x60] sm:$0xff] %vm204, 0.0
        %219 = vst.msk [vmem:[#allocation2 + $0x68] sm:$0xff] %vm204, 0.0
        %220 = vst.msk [vmem:[#allocation2 + $0x70] sm:$0x3] %vm207, 0.0
        %221 = vst.msk [vmem:[#allocation2 + $0x78] sm:$0xff] %vm204, 0.0
        %222 = vst.msk [vmem:[#allocation2 + $0x80] sm:$0xff] %vm204, 0.0
        %223 = vst.msk [vmem:[#allocation2 + $0x88] sm:$0x3] %vm207, 0.0
        %224 = vst.msk [vmem:[#allocation2 + $0x90] sm:$0xff] %vm204, 0.0
        %225 = vst.msk [vmem:[#allocation2 + $0x98] sm:$0xff] %vm204, 0.0
        %226 = vst.msk [vmem:[#allocation2 + $0xa0] sm:$0x3] %vm207, 0.0
        %227 = vst.msk [vmem:[#allocation2 + $0xa8] sm:$0xff] %vm204, 0.0
        %228 = vst.msk [vmem:[#allocation2 + $0xb0] sm:$0xff] %vm204, 0.0
        %229 = vst.msk [vmem:[#allocation2 + $0xb8] sm:$0x3] %vm207, 0.0
        %230 = vst.msk [vmem:[#allocation2 + $0xc0] sm:$0xff] %vm204, 0.0
        %231 = vst.msk [vmem:[#allocation2 + $0xc8] sm:$0xff] %vm204, 0.0
        %232 = vst.msk [vmem:[#allocation2 + $0xd0] sm:$0x3] %vm207, 0.0
        %233 = vst.msk [vmem:[#allocation2 + $0xd8] sm:$0xff] %vm204, 0.0
        %234 = vst.msk [vmem:[#allocation2 + $0xe0] sm:$0xff] %vm204, 0.0
        %235 = vst.msk [vmem:[#allocation2 + $0xe8] sm:$0x3] %vm207, 0.0
        %236 = vst.msk [vmem:[#allocation2 + $0xf0] sm:$0xff] %vm204, 0.0
        %237 = vst.msk [vmem:[#allocation2 + $0xf8] sm:$0xff] %vm204, 0.0
        %238 = vst.msk [vmem:[#allocation2 + $0x100] sm:$0x3] %vm207, 0.0
        %239 = vst.msk [vmem:[#allocation2 + $0x108] sm:$0xff] %vm204, 0.0
        %240 = vst.msk [vmem:[#allocation2 + $0x110] sm:$0xff] %vm204, 0.0
        %241 = vst.msk [vmem:[#allocation2 + $0x118] sm:$0x3] %vm207, 0.0
        %242 = vst.msk [vmem:[#allocation2 + $0x120] sm:$0xff] %vm204, 0.0
        %243 = vst.msk [vmem:[#allocation2 + $0x128] sm:$0xff] %vm204, 0.0
        %244 = vst.msk [vmem:[#allocation2 + $0x130] sm:$0x3] %vm207, 0.0
        %245 = vst.msk [vmem:[#allocation2 + $0x138] sm:$0xff] %vm204, 0.0
        %246 = vst.msk [vmem:[#allocation2 + $0x140] sm:$0xff] %vm204, 0.0
        %247 = vst.msk [vmem:[#allocation2 + $0x148] sm:$0x3] %vm207, 0.0
        %248 = vst.msk [vmem:[#allocation2 + $0x150] sm:$0xff] %vm204, 0.0
        %249 = vst.msk [vmem:[#allocation2 + $0x158] sm:$0xff] %vm204, 0.0
        %250 = vst.msk [vmem:[#allocation2 + $0x160] sm:$0x3] %vm207, 0.0
        %251 = vst.msk [vmem:[#allocation2 + $0x168] sm:$0xff] %vm204, 0.0
        %252 = vst.msk [vmem:[#allocation2 + $0x170] sm:$0xff] %vm204, 0.0
        %253 = vst.msk [vmem:[#allocation2 + $0x178] sm:$0x3] %vm207, 0.0
        %254 = vst.msk [vmem:[#allocation2 + $0x180] sm:$0xff] %vm204, 0.0
        %255 = vst.msk [vmem:[#allocation2 + $0x188] sm:$0xff] %vm204, 0.0
        %256 = vst.msk [vmem:[#allocation2 + $0x190] sm:$0x3] %vm207, 0.0
        %257 = vst.msk [vmem:[#allocation2 + $0x198] sm:$0xff] %vm204, 0.0
        %258 = vst.msk [vmem:[#allocation2 + $0x1a0] sm:$0xff] %vm204, 0.0
        %259 = vst.msk [vmem:[#allocation2 + $0x1a8] sm:$0x3] %vm207, 0.0
        %v260 = vld [vmem:[%s177] sm:$0xff]
        %v261 = vld [vmem:[%s177 + $0x8] sm:$0xff]
        %v262 = vld [vmem:[%s177 + $0x10] sm:$0xff]
        %v263 = vld [vmem:[%s177 + $0x18] sm:$0xff]
        %v264 = vld [vmem:[%s177 + $0x20] sm:$0xff]
        %v265 = vld [vmem:[%s177 + $0x28] sm:$0xff]
        %v266 = vld [vmem:[%s177 + $0x30] sm:$0xff]
        %v267 = vld [vmem:[%s177 + $0x38] sm:$0xff]
        %v268 = vld [vmem:[%s177 + $0x40] sm:$0xff]
        %v269 = vld [vmem:[%s177 + $0x48] sm:$0xff]
        %v270 = vld [vmem:[%s177 + $0x50] sm:$0xff]
        %v271 = vld [vmem:[%s177 + $0x58] sm:$0xff]
        %v272 = vld [vmem:[%s177 + $0x60] sm:$0xff]
        %v273 = vld [vmem:[%s177 + $0x68] sm:$0xff]
        %v274 = vld [vmem:[%s177 + $0x70] sm:$0xff]
        %v275 = vld [vmem:[%s177 + $0x78] sm:$0xff]
        %v276 = vld [vmem:[%s177 + $0x80] sm:$0xff]
        %v277 = vld [vmem:[%s177 + $0x88] sm:$0xff]
        %v278 = vld [vmem:[%s177 + $0x90] sm:$0xff]
        %v279 = vld [vmem:[%s177 + $0x98] sm:$0xff]
        %v280 = vld [vmem:[%s177 + $0xa0] sm:$0xff]
        %v281 = vld [vmem:[%s177 + $0xa8] sm:$0xff]
        %v282 = vld [vmem:[%s177 + $0xb0] sm:$0xff]
        %v283 = vld [vmem:[%s177 + $0xb8] sm:$0xff]
        %v284 = vld [vmem:[%s177 + $0xc0] sm:$0xff]
        %v285 = vld [vmem:[%s177 + $0xc8] sm:$0xff]
        %v286 = vld [vmem:[%s177 + $0xd0] sm:$0xff]
        %v287 = vld [vmem:[%s177 + $0xd8] sm:$0xff]
        %v288 = vld [vmem:[%s177 + $0xe0] sm:$0xff]
        %v289 = vld [vmem:[%s177 + $0xe8] sm:$0xff]
        %v290 = vld [vmem:[%s177 + $0xf0] sm:$0xff]
        %v291 = vld [vmem:[%s177 + $0xf8] sm:$0xff]
        %s292 = scalar_lea.vmem [#allocation2], 24
        %293 = vst.msk [vmem:[%s292 + $0x1] sm:$0xff] %vm204, %v260
        %294 = vst.msk [vmem:[%s292 + $0x9] sm:$0xff] %vm204, %v261
        %295 = vst.msk [vmem:[%s292 + $0x19] sm:$0xff] %vm204, %v262
        %296 = vst.msk [vmem:[%s292 + $0x21] sm:$0xff] %vm204, %v263
        %297 = vst.msk [vmem:[%s292 + $0x31] sm:$0xff] %vm204, %v264
        %298 = vst.msk [vmem:[%s292 + $0x39] sm:$0xff] %vm204, %v265
        %299 = vst.msk [vmem:[%s292 + $0x49] sm:$0xff] %vm204, %v266
        %300 = vst.msk [vmem:[%s292 + $0x51] sm:$0xff] %vm204, %v267
        %301 = vst.msk [vmem:[%s292 + $0x61] sm:$0xff] %vm204, %v268
        %302 = vst.msk [vmem:[%s292 + $0x69] sm:$0xff] %vm204, %v269
        %303 = vst.msk [vmem:[%s292 + $0x79] sm:$0xff] %vm204, %v270
        %304 = vst.msk [vmem:[%s292 + $0x81] sm:$0xff] %vm204, %v271
        %305 = vst.msk [vmem:[%s292 + $0x91] sm:$0xff] %vm204, %v272
        %306 = vst.msk [vmem:[%s292 + $0x99] sm:$0xff] %vm204, %v273
        %307 = vst.msk [vmem:[%s292 + $0xa9] sm:$0xff] %vm204, %v274
        %308 = vst.msk [vmem:[%s292 + $0xb1] sm:$0xff] %vm204, %v275
        %309 = vst.msk [vmem:[%s292 + $0xc1] sm:$0xff] %vm204, %v276
        %310 = vst.msk [vmem:[%s292 + $0xc9] sm:$0xff] %vm204, %v277
        %311 = vst.msk [vmem:[%s292 + $0xd9] sm:$0xff] %vm204, %v278
        %312 = vst.msk [vmem:[%s292 + $0xe1] sm:$0xff] %vm204, %v279
        %313 = vst.msk [vmem:[%s292 + $0xf1] sm:$0xff] %vm204, %v280
        %314 = vst.msk [vmem:[%s292 + $0xf9] sm:$0xff] %vm204, %v281
        %315 = vst.msk [vmem:[%s292 + $0x109] sm:$0xff] %vm204, %v282
        %316 = vst.msk [vmem:[%s292 + $0x111] sm:$0xff] %vm204, %v283
        %317 = vst.msk [vmem:[%s292 + $0x121] sm:$0xff] %vm204, %v284
        %318 = vst.msk [vmem:[%s292 + $0x129] sm:$0xff] %vm204, %v285
        %319 = vst.msk [vmem:[%s292 + $0x139] sm:$0xff] %vm204, %v286
        %320 = vst.msk [vmem:[%s292 + $0x141] sm:$0xff] %vm204, %v287
        %321 = vst.msk [vmem:[%s292 + $0x151] sm:$0xff] %vm204, %v288
        %322 = vst.msk [vmem:[%s292 + $0x159] sm:$0xff] %vm204, %v289
        %323 = vst.msk [vmem:[%s292 + $0x169] sm:$0xff] %vm204, %v290
        %324 = vst.msk [vmem:[%s292 + $0x171] sm:$0xff] %vm204, %v291
        %v325 = vld [vmem:[#allocation2] sm:$0xff]
        %v326 = vld [vmem:[#allocation2 + $0x8] sm:$0xff]
        %v327 = vld [vmem:[#allocation2 + $0x10] sm:$0x3]
        %v328 = vld [vmem:[#allocation2 + $0x18] sm:$0xff]
        %v329 = vld [vmem:[#allocation2 + $0x20] sm:$0xff]
        %v330 = vld [vmem:[#allocation2 + $0x28] sm:$0x3]
        %v331 = vld [vmem:[#allocation2 + $0x30] sm:$0xff]
        %v332 = vld [vmem:[#allocation2 + $0x38] sm:$0xff]
        %v333 = vld [vmem:[#allocation2 + $0x40] sm:$0x3]
        %v334 = vld [vmem:[#allocation2 + $0x48] sm:$0xff]
        %v335 = vld [vmem:[#allocation2 + $0x50] sm:$0xff]
        %v336 = vld [vmem:[#allocation2 + $0x58] sm:$0x3]
        %v337 = vld [vmem:[#allocation2 + $0x60] sm:$0xff]
        %v338 = vld [vmem:[#allocation2 + $0x68] sm:$0xff]
        %v339 = vld [vmem:[#allocation2 + $0x70] sm:$0x3]
        %v340 = vld [vmem:[#allocation2 + $0x78] sm:$0xff]
        %v341 = vld [vmem:[#allocation2 + $0x80] sm:$0xff]
        %v342 = vld [vmem:[#allocation2 + $0x88] sm:$0x3]
        %v343 = vld [vmem:[#allocation2 + $0x90] sm:$0xff]
        %v344 = vld [vmem:[#allocation2 + $0x98] sm:$0xff]
        %v345 = vld [vmem:[#allocation2 + $0xa0] sm:$0x3]
        %v346 = vld [vmem:[#allocation2 + $0xa8] sm:$0xff]
        %v347 = vld [vmem:[#allocation2 + $0xb0] sm:$0xff]
        %v348 = vld [vmem:[#allocation2 + $0xb8] sm:$0x3]
        %v349 = vld [vmem:[#allocation2 + $0xc0] sm:$0xff]
        %v350 = vld [vmem:[#allocation2 + $0xc8] sm:$0xff]
        %v351 = vld [vmem:[#allocation2 + $0xd0] sm:$0x3]
        %v352 = vld [vmem:[#allocation2 + $0xd8] sm:$0xff]
        %v353 = vld [vmem:[#allocation2 + $0xe0] sm:$0xff]
        %v354 = vld [vmem:[#allocation2 + $0xe8] sm:$0x3]
        %v355 = vld [vmem:[#allocation2 + $0xf0] sm:$0xff]
        %v356 = vld [vmem:[#allocation2 + $0xf8] sm:$0xff]
        %v357 = vld [vmem:[#allocation2 + $0x100] sm:$0x3]
        %v358 = vld [vmem:[#allocation2 + $0x108] sm:$0xff]
        %v359 = vld [vmem:[#allocation2 + $0x110] sm:$0xff]
        %v360 = vld [vmem:[#allocation2 + $0x118] sm:$0x3]
        %v361 = vld [vmem:[#allocation2 + $0x120] sm:$0xff]
        %v362 = vld [vmem:[#allocation2 + $0x128] sm:$0xff]
        %v363 = vld [vmem:[#allocation2 + $0x130] sm:$0x3]
        %v364 = vld [vmem:[#allocation2 + $0x138] sm:$0xff]
        %v365 = vld [vmem:[#allocation2 + $0x140] sm:$0xff]
        %v366 = vld [vmem:[#allocation2 + $0x148] sm:$0x3]
        %v367 = vld [vmem:[#allocation2 + $0x150] sm:$0xff]
        %v368 = vld [vmem:[#allocation2 + $0x158] sm:$0xff]
        %v369 = vld [vmem:[#allocation2 + $0x160] sm:$0x3]
        %v370 = vld [vmem:[#allocation2 + $0x168] sm:$0xff]
        %v371 = vld [vmem:[#allocation2 + $0x170] sm:$0xff]
        %v372 = vld [vmem:[#allocation2 + $0x178] sm:$0x3]
        %v373 = vld [vmem:[#allocation2 + $0x180] sm:$0xff]
        %v374 = vld [vmem:[#allocation2 + $0x188] sm:$0xff]
        %v375 = vld [vmem:[#allocation2 + $0x190] sm:$0x3]
        %v376 = vld [vmem:[#allocation2 + $0x198] sm:$0xff]
        %v377 = vld [vmem:[#allocation2 + $0x1a0] sm:$0xff]
        %v378 = vld [vmem:[#allocation2 + $0x1a8] sm:$0x3]
        %v379 = vld [vmem:[#allocation6] sm:$0xff]
        %v380 = vld [vmem:[#allocation6 + $0x8] sm:$0xff]
        %vm429 = vcmask 1046528
        %v430 = vrot.slane %v325, 1
        %v431 = vrot.slane %v326, 1
        %v432 = vsel %vm429, %v430, %v431
        %v433 = vrot.slane %v327, 1
        %v434 = vsel %vm429, %v431, %v433
        %v435 = vrot.slane %v328, 1
        %v436 = vrot.slane %v329, 1
        %v437 = vsel %vm429, %v435, %v436
        %v438 = vrot.slane %v330, 1
        %v439 = vsel %vm429, %v436, %v438
        %v440 = vrot.slane %v331, 1
        %v441 = vrot.slane %v332, 1
        %v442 = vsel %vm429, %v440, %v441
        %v443 = vrot.slane %v333, 1
        %v444 = vsel %vm429, %v441, %v443
        %v445 = vrot.slane %v334, 1
        %v446 = vrot.slane %v335, 1
        %v447 = vsel %vm429, %v445, %v446
        %v448 = vrot.slane %v336, 1
        %v449 = vsel %vm429, %v446, %v448
        %v450 = vrot.slane %v337, 1
        %v451 = vrot.slane %v338, 1
        %v452 = vsel %vm429, %v450, %v451
        %v453 = vrot.slane %v339, 1
        %v454 = vsel %vm429, %v451, %v453
        %v455 = vrot.slane %v340, 1
        %v456 = vrot.slane %v341, 1
        %v457 = vsel %vm429, %v455, %v456
        %v458 = vrot.slane %v342, 1
        %v459 = vsel %vm429, %v456, %v458
        %v460 = vrot.slane %v343, 1
        %v461 = vrot.slane %v344, 1
        %v462 = vsel %vm429, %v460, %v461
        %v463 = vrot.slane %v345, 1
        %v464 = vsel %vm429, %v461, %v463
        %v465 = vrot.slane %v346, 1
        %v466 = vrot.slane %v347, 1
        %v467 = vsel %vm429, %v465, %v466
        %v468 = vrot.slane %v348, 1
        %v469 = vsel %vm429, %v466, %v468
        %v470 = vrot.slane %v349, 1
        %v471 = vrot.slane %v350, 1
        %v472 = vsel %vm429, %v470, %v471
        %v473 = vrot.slane %v351, 1
        %v474 = vsel %vm429, %v471, %v473
        %v475 = vrot.slane %v352, 1
        %v476 = vrot.slane %v353, 1
        %v477 = vsel %vm429, %v475, %v476
        %v478 = vrot.slane %v354, 1
        %v479 = vsel %vm429, %v476, %v478
        %v480 = vrot.slane %v355, 1
        %v481 = vrot.slane %v356, 1
        %v482 = vsel %vm429, %v480, %v481
        %v483 = vrot.slane %v357, 1
        %v484 = vsel %vm429, %v481, %v483
        %v485 = vrot.slane %v358, 1
        %v486 = vrot.slane %v359, 1
        %v487 = vsel %vm429, %v485, %v486
        %v488 = vrot.slane %v360, 1
        %v489 = vsel %vm429, %v486, %v488
        %v490 = vrot.slane %v361, 1
        %v491 = vrot.slane %v362, 1
        %v492 = vsel %vm429, %v490, %v491
        %v493 = vrot.slane %v363, 1
        %v494 = vsel %vm429, %v491, %v493
        %v495 = vrot.slane %v364, 1
        %v496 = vrot.slane %v365, 1
        %v497 = vsel %vm429, %v495, %v496
        %v498 = vrot.slane %v366, 1
        %v499 = vsel %vm429, %v496, %v498
        %v500 = vrot.slane %v367, 1
        %v501 = vrot.slane %v368, 1
        %v502 = vsel %vm429, %v500, %v501
        %v503 = vrot.slane %v369, 1
        %v504 = vsel %vm429, %v501, %v503
        %v505 = vrot.slane %v370, 1
        %v506 = vrot.slane %v371, 1
        %v507 = vsel %vm429, %v505, %v506
        %v508 = vrot.slane %v372, 1
        %v509 = vsel %vm429, %v506, %v508
        %s510 = scalar_lea.vmem [#allocation6], 16
        %v511 = vld [vmem:[%s510] sm:$0xff]
        %v512 = vld [vmem:[%s510 + $0x8] sm:$0xff]
        %v513 = vsel %vm204, %v432, 0
        %v515 = vsel %vm204, %v434, 0
        %v517 = vsel %vm204, %v437, 0
        %v519 = vsel %vm204, %v439, 0
        %v521 = vsel %vm204, %v442, 0
        %v523 = vsel %vm204, %v444, 0
        %v525 = vsel %vm204, %v447, 0
        %v527 = vsel %vm204, %v449, 0
        %v529 = vsel %vm204, %v452, 0
        %v531 = vsel %vm204, %v454, 0
        %v533 = vsel %vm204, %v457, 0
        %v535 = vsel %vm204, %v459, 0
        %v537 = vsel %vm204, %v462, 0
        %v539 = vsel %vm204, %v464, 0
        %v541 = vsel %vm204, %v467, 0
        %v543 = vsel %vm204, %v469, 0
        %v545 = vsel %vm204, %v472, 0
        %v547 = vsel %vm204, %v474, 0
        %v549 = vsel %vm204, %v477, 0
        %v551 = vsel %vm204, %v479, 0
        %v553 = vsel %vm204, %v482, 0
        %v555 = vsel %vm204, %v484, 0
        %v557 = vsel %vm204, %v487, 0
        %v559 = vsel %vm204, %v489, 0
        %v561 = vsel %vm204, %v492, 0
        %v563 = vsel %vm204, %v494, 0
        %v565 = vsel %vm204, %v497, 0
        %v567 = vsel %vm204, %v499, 0
        %v569 = vsel %vm204, %v502, 0
        %v571 = vsel %vm204, %v504, 0
        %v573 = vsel %vm204, %v507, 0
        %v575 = vsel %vm204, %v509, 0
        %577 = vmatprep.subr.mxu0 0.0
        %578 = vmatpush1.msra.mxu0 %v511
        %579 = vmatprep.subr.mxu0 0.0
        %580 = vmatpush1.msra.mxu0 %v512
        %581 = vmatprep.subr.mxu0 0.0
        %582 = vmatpush1.msra.mxu0 0.0
        %583 = vmatprep.subr.mxu0 0.0
        %584 = vmatpush1.msra.mxu0 0.0
        %585 = vmatprep.subr.mxu0 0.0
        %586 = vmatpush1.msra.mxu0 0.0
        %587 = vmatprep.subr.mxu0 0.0
        %588 = vmatpush1.msra.mxu0 0.0
        %589 = vmatprep.subr.mxu0 0.0
        %590 = vmatpush1.msra.mxu0 0.0
        %591 = vmatprep.subr.mxu0 0.0
        %592 = vmatpush1.msra.mxu0 0.0
        %593 = vmatprep.subr.mxu0 0.0
        %594 = vmatpush1.msra.mxu0 0.0
        %595 = vmatprep.subr.mxu0 0.0
        %596 = vmatpush1.msra.mxu0 0.0
        %597 = vmatprep.subr.mxu0 0.0
        %598 = vmatpush1.msra.mxu0 0.0
        %599 = vmatprep.subr.mxu0 0.0
        %600 = vmatpush1.msra.mxu0 0.0
        %601 = vmatprep.subr.mxu0 0.0
        %602 = vmatpush1.msra.mxu0 0.0
        %603 = vmatprep.subr.mxu0 0.0
        %604 = vmatpush1.msra.mxu0 0.0
        %605 = vmatprep.subr.mxu0 0.0
        %606 = vmatpush1.msra.mxu0 0.0
        %607 = vmatprep.subr.mxu0 0.0
        %608 = vmatpush1.msra.mxu0 0.0
        %609 = vmatprep.subr.mxu0 0.0
        %610 = vmatpush1.msra.mxu0 0.0
        %611 = vmatprep.subr.mxu0 0.0
        %612 = vmatpush1.msra.mxu0 0.0
        %613 = vmatprep.subr.mxu0 0.0
        %614 = vmatpush1.msra.mxu0 0.0
        %615 = vmatprep.subr.mxu0 0.0
        %616 = vmatpush1.msra.mxu0 0.0
        %617 = vmatprep.subr.mxu0 0.0
        %618 = vmatpush1.msra.mxu0 0.0
        %619 = vmatprep.subr.mxu0 0.0
        %620 = vmatpush1.msra.mxu0 0.0
        %621 = vmatprep.subr.mxu0 0.0
        %622 = vmatpush1.msra.mxu0 0.0
        %623 = vmatprep.subr.mxu0 0.0
        %624 = vmatpush1.msra.mxu0 0.0
        %625 = vmatprep.subr.mxu0 0.0
        %626 = vmatpush1.msra.mxu0 0.0
        %627 = vmatprep.subr.mxu0 0.0
        %628 = vmatpush1.msra.mxu0 0.0
        %629 = vmatprep.subr.mxu0 0.0
        %630 = vmatpush1.msra.mxu0 0.0
        %631 = vmatprep.subr.mxu0 0.0
        %632 = vmatpush1.msra.mxu0 0.0
        %633 = vmatprep.subr.mxu0 0.0
        %634 = vmatpush1.msra.mxu0 0.0
        %635 = vmatprep.subr.mxu0 0.0
        %636 = vmatpush1.msra.mxu0 0.0
        %637 = vmatprep.subr.mxu0 0.0
        %638 = vmatpush1.msra.mxu0 0.0
        %639 = vmatprep.subr.mxu0 0.0
        %640 = vmatpush1.msra.mxu0 0.0
        %641 = vmatprep.mubr.f32.mxu0 0.0
        %642 = vmatmul.mubr.f32.gmra.mrb[0].mxu0 %v513
        %v643 = vpop.f32.mrb[0].mxu0
        %v644 = vadd.f32 0.0, %v643
        %v645 = vpop.f32.mrb[0].mxu0
        %646 = vmatprep.mubr.f32.mxu0 0.0
        %647 = vmatmul.mubr.f32.gmra.mrb[0].mxu0 %v515
        %v648 = vpop.f32.mrb[0].mxu0
        %v649 = vadd.f32 0.0, %v648
        %v650 = vpop.f32.mrb[0].mxu0
        %651 = vmatprep.mubr.f32.mxu0 0.0
        %652 = vmatmul.mubr.f32.gmra.mrb[0].mxu0 %v517
        %v653 = vpop.f32.mrb[0].mxu0
        %v654 = vadd.f32 0.0, %v653
        %v655 = vpop.f32.mrb[0].mxu0
        %656 = vmatprep.mubr.f32.mxu0 0.0
        %657 = vmatmul.mubr.f32.gmra.mrb[0].mxu0 %v519
        %v658 = vpop.f32.mrb[0].mxu0
        %v659 = vadd.f32 0.0, %v658
        %v660 = vpop.f32.mrb[0].mxu0
        %661 = vmatprep.mubr.f32.mxu0 0.0
        %662 = vmatmul.mubr.f32.gmra.mrb[0].mxu0 %v521
        %v663 = vpop.f32.mrb[0].mxu0
        %v664 = vadd.f32 0.0, %v663
        %v665 = vpop.f32.mrb[0].mxu0
        %666 = vmatprep.mubr.f32.mxu0 0.0
        %667 = vmatmul.mubr.f32.gmra.mrb[0].mxu0 %v523
        %v668 = vpop.f32.mrb[0].mxu0
        %v669 = vadd.f32 0.0, %v668
        %v670 = vpop.f32.mrb[0].mxu0
        %671 = vmatprep.mubr.f32.mxu0 0.0
        %672 = vmatmul.mubr.f32.gmra.mrb[0].mxu0 %v525
        %v673 = vpop.f32.mrb[0].mxu0
        %v674 = vadd.f32 0.0, %v673
        %v675 = vpop.f32.mrb[0].mxu0
        %676 = vmatprep.mubr.f32.mxu0 0.0
        %677 = vmatmul.mubr.f32.gmra.mrb[0].mxu0 %v527
        %v678 = vpop.f32.mrb[0].mxu0
        %v679 = vadd.f32 0.0, %v678
        %v680 = vpop.f32.mrb[0].mxu0
        %681 = vmatprep.mubr.f32.mxu0 0.0
        %682 = vmatmul.mubr.f32.gmra.mrb[0].mxu0 %v529
        %v683 = vpop.f32.mrb[0].mxu0
        %v684 = vadd.f32 0.0, %v683
        %v685 = vpop.f32.mrb[0].mxu0
        %686 = vmatprep.mubr.f32.mxu0 0.0
        %687 = vmatmul.mubr.f32.gmra.mrb[0].mxu0 %v531
        %v688 = vpop.f32.mrb[0].mxu0
        %v689 = vadd.f32 0.0, %v688
        %v690 = vpop.f32.mrb[0].mxu0
        %691 = vmatprep.mubr.f32.mxu0 0.0
        %692 = vmatmul.mubr.f32.gmra.mrb[0].mxu0 %v533
        %v693 = vpop.f32.mrb[0].mxu0
        %v694 = vadd.f32 0.0, %v693
        %v695 = vpop.f32.mrb[0].mxu0
        %696 = vmatprep.mubr.f32.mxu0 0.0
        %697 = vmatmul.mubr.f32.gmra.mrb[0].mxu0 %v535
        %v698 = vpop.f32.mrb[0].mxu0
        %v699 = vadd.f32 0.0, %v698
        %v700 = vpop.f32.mrb[0].mxu0
        %701 = vmatprep.mubr.f32.mxu0 0.0
        %702 = vmatmul.mubr.f32.gmra.mrb[0].mxu0 %v537
        %v703 = vpop.f32.mrb[0].mxu0
        %v704 = vadd.f32 0.0, %v703
        %v705 = vpop.f32.mrb[0].mxu0
        %706 = vmatprep.mubr.f32.mxu0 0.0
        %707 = vmatmul.mubr.f32.gmra.mrb[0].mxu0 %v539
        %v708 = vpop.f32.mrb[0].mxu0
        %v709 = vadd.f32 0.0, %v708
        %v710 = vpop.f32.mrb[0].mxu0
        %711 = vmatprep.mubr.f32.mxu0 0.0
        %712 = vmatmul.mubr.f32.gmra.mrb[0].mxu0 %v541
        %v713 = vpop.f32.mrb[0].mxu0
        %v714 = vadd.f32 0.0, %v713
        %v715 = vpop.f32.mrb[0].mxu0
        %716 = vmatprep.mubr.f32.mxu0 0.0
        %717 = vmatmul.mubr.f32.gmra.mrb[0].mxu0 %v543
        %v718 = vpop.f32.mrb[0].mxu0
        %v719 = vadd.f32 0.0, %v718
        %v720 = vpop.f32.mrb[0].mxu0
        %721 = vmatprep.mubr.f32.mxu0 0.0
        %722 = vmatmul.mubr.f32.gmra.mrb[0].mxu0 %v545
        %v723 = vpop.f32.mrb[0].mxu0
        %v724 = vadd.f32 0.0, %v723
        %v725 = vpop.f32.mrb[0].mxu0
        %726 = vmatprep.mubr.f32.mxu0 0.0
        %727 = vmatmul.mubr.f32.gmra.mrb[0].mxu0 %v547
        %v728 = vpop.f32.mrb[0].mxu0
        %v729 = vadd.f32 0.0, %v728
        %v730 = vpop.f32.mrb[0].mxu0
        %731 = vmatprep.mubr.f32.mxu0 0.0
        %732 = vmatmul.mubr.f32.gmra.mrb[0].mxu0 %v549
        %v733 = vpop.f32.mrb[0].mxu0
        %v734 = vadd.f32 0.0, %v733
        %v735 = vpop.f32.mrb[0].mxu0
        %736 = vmatprep.mubr.f32.mxu0 0.0
        %737 = vmatmul.mubr.f32.gmra.mrb[0].mxu0 %v551
        %v738 = vpop.f32.mrb[0].mxu0
        %v739 = vadd.f32 0.0, %v738
        %v740 = vpop.f32.mrb[0].mxu0
        %741 = vmatprep.mubr.f32.mxu0 0.0
        %742 = vmatmul.mubr.f32.gmra.mrb[0].mxu0 %v553
        %v743 = vpop.f32.mrb[0].mxu0
        %v744 = vadd.f32 0.0, %v743
        %v745 = vpop.f32.mrb[0].mxu0
        %746 = vmatprep.mubr.f32.mxu0 0.0
        %747 = vmatmul.mubr.f32.gmra.mrb[0].mxu0 %v555
        %v748 = vpop.f32.mrb[0].mxu0
        %v749 = vadd.f32 0.0, %v748
        %v750 = vpop.f32.mrb[0].mxu0
        %751 = vmatprep.mubr.f32.mxu0 0.0
        %752 = vmatmul.mubr.f32.gmra.mrb[0].mxu0 %v557
        %v753 = vpop.f32.mrb[0].mxu0
        %v754 = vadd.f32 0.0, %v753
        %v755 = vpop.f32.mrb[0].mxu0
        %756 = vmatprep.mubr.f32.mxu0 0.0
        %757 = vmatmul.mubr.f32.gmra.mrb[0].mxu0 %v559
        %v758 = vpop.f32.mrb[0].mxu0
        %v759 = vadd.f32 0.0, %v758
        %v760 = vpop.f32.mrb[0].mxu0
        %761 = vmatprep.mubr.f32.mxu0 0.0
        %762 = vmatmul.mubr.f32.gmra.mrb[0].mxu0 %v561
        %v763 = vpop.f32.mrb[0].mxu0
        %v764 = vadd.f32 0.0, %v763
        %v765 = vpop.f32.mrb[0].mxu0
        %766 = vmatprep.mubr.f32.mxu0 0.0
        %767 = vmatmul.mubr.f32.gmra.mrb[0].mxu0 %v563
        %v768 = vpop.f32.mrb[0].mxu0
        %v769 = vadd.f32 0.0, %v768
        %v770 = vpop.f32.mrb[0].mxu0
        %771 = vmatprep.mubr.f32.mxu0 0.0
        %772 = vmatmul.mubr.f32.gmra.mrb[0].mxu0 %v565
        %v773 = vpop.f32.mrb[0].mxu0
        %v774 = vadd.f32 0.0, %v773
        %v775 = vpop.f32.mrb[0].mxu0
        %776 = vmatprep.mubr.f32.mxu0 0.0
        %777 = vmatmul.mubr.f32.gmra.mrb[0].mxu0 %v567
        %v778 = vpop.f32.mrb[0].mxu0
        %v779 = vadd.f32 0.0, %v778
        %v780 = vpop.f32.mrb[0].mxu0
        %781 = vmatprep.mubr.f32.mxu0 0.0
        %782 = vmatmul.mubr.f32.gmra.mrb[0].mxu0 %v569
        %v783 = vpop.f32.mrb[0].mxu0
        %v784 = vadd.f32 0.0, %v783
        %v785 = vpop.f32.mrb[0].mxu0
        %786 = vmatprep.mubr.f32.mxu0 0.0
        %787 = vmatmul.mubr.f32.gmra.mrb[0].mxu0 %v571
        %v788 = vpop.f32.mrb[0].mxu0
        %v789 = vadd.f32 0.0, %v788
        %v790 = vpop.f32.mrb[0].mxu0
        %791 = vmatprep.mubr.f32.mxu0 0.0
        %792 = vmatmul.mubr.f32.gmra.mrb[0].mxu0 %v573
        %v793 = vpop.f32.mrb[0].mxu0
        %v794 = vadd.f32 0.0, %v793
        %v795 = vpop.f32.mrb[0].mxu0
        %796 = vmatprep.mubr.f32.mxu0 0.0
        %797 = vmatmul.mubr.f32.gmra.mrb[0].mxu0 %v575
        %v798 = vpop.f32.mrb[0].mxu0
        %v799 = vadd.f32 0.0, %v798
        %v800 = vpop.f32.mrb[0].mxu0
        %801 = vdwg.mxu0
        %v802 = vsel %vm204, %v325, 0
        %v804 = vsel %vm204, %v326, 0
        %v806 = vsel %vm204, %v328, 0
        %v808 = vsel %vm204, %v329, 0
        %v810 = vsel %vm204, %v331, 0
        %v812 = vsel %vm204, %v332, 0
        %v814 = vsel %vm204, %v334, 0
        %v816 = vsel %vm204, %v335, 0
        %v818 = vsel %vm204, %v337, 0
        %v820 = vsel %vm204, %v338, 0
        %v822 = vsel %vm204, %v340, 0
        %v824 = vsel %vm204, %v341, 0
        %v826 = vsel %vm204, %v343, 0
        %v828 = vsel %vm204, %v344, 0
        %v830 = vsel %vm204, %v346, 0
        %v832 = vsel %vm204, %v347, 0
        %v834 = vsel %vm204, %v349, 0
        %v836 = vsel %vm204, %v350, 0
        %v838 = vsel %vm204, %v352, 0
        %v840 = vsel %vm204, %v353, 0
        %v842 = vsel %vm204, %v355, 0
        %v844 = vsel %vm204, %v356, 0
        %v846 = vsel %vm204, %v358, 0
        %v848 = vsel %vm204, %v359, 0
        %v850 = vsel %vm204, %v361, 0
        %v852 = vsel %vm204, %v362, 0
        %v854 = vsel %vm204, %v364, 0
        %v856 = vsel %vm204, %v365, 0
        %v858 = vsel %vm204, %v367, 0
        %v860 = vsel %vm204, %v368, 0
        %v862 = vsel %vm204, %v370, 0
        %v864 = vsel %vm204, %v371, 0
        %866 = vmatprep.subr.mxu0 0.0
        %867 = vmatpush1.msra.mxu0 %v379
        %868 = vmatprep.subr.mxu0 0.0
        %869 = vmatpush1.msra.mxu0 %v380
        %870 = vmatprep.subr.mxu0 0.0
        %871 = vmatpush1.msra.mxu0 0.0
        %872 = vmatprep.subr.mxu0 0.0
        %873 = vmatpush1.msra.mxu0 0.0
        %874 = vmatprep.subr.mxu0 0.0
        %875 = vmatpush1.msra.mxu0 0.0
        %876 = vmatprep.subr.mxu0 0.0
        %877 = vmatpush1.msra.mxu0 0.0
        %878 = vmatprep.subr.mxu0 0.0
        %879 = vmatpush1.msra.mxu0 0.0
        %880 = vmatprep.subr.mxu0 0.0
        %881 = vmatpush1.msra.mxu0 0.0
        %882 = vmatprep.subr.mxu0 0.0
        %883 = vmatpush1.msra.mxu0 0.0
        %884 = vmatprep.subr.mxu0 0.0
        %885 = vmatpush1.msra.mxu0 0.0
        %886 = vmatprep.subr.mxu0 0.0
        %887 = vmatpush1.msra.mxu0 0.0
        %888 = vmatprep.subr.mxu0 0.0
        %889 = vmatpush1.msra.mxu0 0.0
        %890 = vmatprep.subr.mxu0 0.0
        %891 = vmatpush1.msra.mxu0 0.0
        %892 = vmatprep.subr.mxu0 0.0
        %893 = vmatpush1.msra.mxu0 0.0
        %894 = vmatprep.subr.mxu0 0.0
        %895 = vmatpush1.msra.mxu0 0.0
        %896 = vmatprep.subr.mxu0 0.0
        %897 = vmatpush1.msra.mxu0 0.0
        %898 = vmatprep.subr.mxu0 0.0
        %899 = vmatpush1.msra.mxu0 0.0
        %900 = vmatprep.subr.mxu0 0.0
        %901 = vmatpush1.msra.mxu0 0.0
        %902 = vmatprep.subr.mxu0 0.0
        %903 = vmatpush1.msra.mxu0 0.0
        %904 = vmatprep.subr.mxu0 0.0
        %905 = vmatpush1.msra.mxu0 0.0
        %906 = vmatprep.subr.mxu0 0.0
        %907 = vmatpush1.msra.mxu0 0.0
        %908 = vmatprep.subr.mxu0 0.0
        %909 = vmatpush1.msra.mxu0 0.0
        %910 = vmatprep.subr.mxu0 0.0
        %911 = vmatpush1.msra.mxu0 0.0
        %912 = vmatprep.subr.mxu0 0.0
        %913 = vmatpush1.msra.mxu0 0.0
        %914 = vmatprep.subr.mxu0 0.0
        %915 = vmatpush1.msra.mxu0 0.0
        %916 = vmatprep.subr.mxu0 0.0
        %917 = vmatpush1.msra.mxu0 0.0
        %918 = vmatprep.subr.mxu0 0.0
        %919 = vmatpush1.msra.mxu0 0.0
        %920 = vmatprep.subr.mxu0 0.0
        %921 = vmatpush1.msra.mxu0 0.0
        %922 = vmatprep.subr.mxu0 0.0
        %923 = vmatpush1.msra.mxu0 0.0
        %924 = vmatprep.subr.mxu0 0.0
        %925 = vmatpush1.msra.mxu0 0.0
        %926 = vmatprep.subr.mxu0 0.0
        %927 = vmatpush1.msra.mxu0 0.0
        %928 = vmatprep.subr.mxu0 0.0
        %929 = vmatpush1.msra.mxu0 0.0
        %930 = vmatprep.mubr.f32.mxu0 0.0
        %931 = vmatmul.mubr.f32.gmra.mrb[0].mxu0 %v802
        %v932 = vpop.f32.mrb[0].mxu0
        %v933 = vadd.f32 %v644, %v932
        %v934 = vpop.f32.mrb[0].mxu0
        %935 = vmatprep.mubr.f32.mxu0 0.0
        %936 = vmatmul.mubr.f32.gmra.mrb[0].mxu0 %v804
        %v937 = vpop.f32.mrb[0].mxu0
        %v938 = vadd.f32 %v649, %v937
        %v939 = vpop.f32.mrb[0].mxu0
        %940 = vmatprep.mubr.f32.mxu0 0.0
        %941 = vmatmul.mubr.f32.gmra.mrb[0].mxu0 %v806
        %v942 = vpop.f32.mrb[0].mxu0
        %v943 = vadd.f32 %v654, %v942
        %v944 = vpop.f32.mrb[0].mxu0
        %945 = vmatprep.mubr.f32.mxu0 0.0
        %946 = vmatmul.mubr.f32.gmra.mrb[0].mxu0 %v808
        %v947 = vpop.f32.mrb[0].mxu0
        %v948 = vadd.f32 %v659, %v947
        %v949 = vpop.f32.mrb[0].mxu0
        %950 = vmatprep.mubr.f32.mxu0 0.0
        %951 = vmatmul.mubr.f32.gmra.mrb[0].mxu0 %v810
        %v952 = vpop.f32.mrb[0].mxu0
        %v953 = vadd.f32 %v664, %v952
        %v954 = vpop.f32.mrb[0].mxu0
        %955 = vmatprep.mubr.f32.mxu0 0.0
        %956 = vmatmul.mubr.f32.gmra.mrb[0].mxu0 %v812
        %v957 = vpop.f32.mrb[0].mxu0
        %v958 = vadd.f32 %v669, %v957
        %v959 = vpop.f32.mrb[0].mxu0
        %960 = vmatprep.mubr.f32.mxu0 0.0
        %961 = vmatmul.mubr.f32.gmra.mrb[0].mxu0 %v814
        %v962 = vpop.f32.mrb[0].mxu0
        %v963 = vadd.f32 %v674, %v962
        %v964 = vpop.f32.mrb[0].mxu0
        %965 = vmatprep.mubr.f32.mxu0 0.0
        %966 = vmatmul.mubr.f32.gmra.mrb[0].mxu0 %v816
        %v967 = vpop.f32.mrb[0].mxu0
        %v968 = vadd.f32 %v679, %v967
        %v969 = vpop.f32.mrb[0].mxu0
        %970 = vmatprep.mubr.f32.mxu0 0.0
        %971 = vmatmul.mubr.f32.gmra.mrb[0].mxu0 %v818
        %v972 = vpop.f32.mrb[0].mxu0
        %v973 = vadd.f32 %v684, %v972
        %v974 = vpop.f32.mrb[0].mxu0
        %975 = vmatprep.mubr.f32.mxu0 0.0
        %976 = vmatmul.mubr.f32.gmra.mrb[0].mxu0 %v820
        %v977 = vpop.f32.mrb[0].mxu0
        %v978 = vadd.f32 %v689, %v977
        %v979 = vpop.f32.mrb[0].mxu0
        %980 = vmatprep.mubr.f32.mxu0 0.0
        %981 = vmatmul.mubr.f32.gmra.mrb[0].mxu0 %v822
        %v982 = vpop.f32.mrb[0].mxu0
        %v983 = vadd.f32 %v694, %v982
        %v984 = vpop.f32.mrb[0].mxu0
        %985 = vmatprep.mubr.f32.mxu0 0.0
        %986 = vmatmul.mubr.f32.gmra.mrb[0].mxu0 %v824
        %v987 = vpop.f32.mrb[0].mxu0
        %v988 = vadd.f32 %v699, %v987
        %v989 = vpop.f32.mrb[0].mxu0
        %990 = vmatprep.mubr.f32.mxu0 0.0
        %991 = vmatmul.mubr.f32.gmra.mrb[0].mxu0 %v826
        %v992 = vpop.f32.mrb[0].mxu0
        %v993 = vadd.f32 %v704, %v992
        %v994 = vpop.f32.mrb[0].mxu0
        %995 = vmatprep.mubr.f32.mxu0 0.0
        %996 = vmatmul.mubr.f32.gmra.mrb[0].mxu0 %v828
        %v997 = vpop.f32.mrb[0].mxu0
        %v998 = vadd.f32 %v709, %v997
        %v999 = vpop.f32.mrb[0].mxu0
        %1000 = vmatprep.mubr.f32.mxu0 0.0
        %1001 = vmatmul.mubr.f32.gmra.mrb[0].mxu0 %v830
        %v1002 = vpop.f32.mrb[0].mxu0
        %v1003 = vadd.f32 %v714, %v1002
        %v1004 = vpop.f32.mrb[0].mxu0
        %1005 = vmatprep.mubr.f32.mxu0 0.0
        %1006 = vmatmul.mubr.f32.gmra.mrb[0].mxu0 %v832
        %v1007 = vpop.f32.mrb[0].mxu0
        %v1008 = vadd.f32 %v719, %v1007
        %v1009 = vpop.f32.mrb[0].mxu0
        %1010 = vmatprep.mubr.f32.mxu0 0.0
        %1011 = vmatmul.mubr.f32.gmra.mrb[0].mxu0 %v834
        %v1012 = vpop.f32.mrb[0].mxu0
        %v1013 = vadd.f32 %v724, %v1012
        %v1014 = vpop.f32.mrb[0].mxu0
        %1015 = vmatprep.mubr.f32.mxu0 0.0
        %1016 = vmatmul.mubr.f32.gmra.mrb[0].mxu0 %v836
        %v1017 = vpop.f32.mrb[0].mxu0
        %v1018 = vadd.f32 %v729, %v1017
        %v1019 = vpop.f32.mrb[0].mxu0
        %1020 = vmatprep.mubr.f32.mxu0 0.0
        %1021 = vmatmul.mubr.f32.gmra.mrb[0].mxu0 %v838
        %v1022 = vpop.f32.mrb[0].mxu0
        %v1023 = vadd.f32 %v734, %v1022
        %v1024 = vpop.f32.mrb[0].mxu0
        %1025 = vmatprep.mubr.f32.mxu0 0.0
        %1026 = vmatmul.mubr.f32.gmra.mrb[0].mxu0 %v840
        %v1027 = vpop.f32.mrb[0].mxu0
        %v1028 = vadd.f32 %v739, %v1027
        %v1029 = vpop.f32.mrb[0].mxu0
        %1030 = vmatprep.mubr.f32.mxu0 0.0
        %1031 = vmatmul.mubr.f32.gmra.mrb[0].mxu0 %v842
        %v1032 = vpop.f32.mrb[0].mxu0
        %v1033 = vadd.f32 %v744, %v1032
        %v1034 = vpop.f32.mrb[0].mxu0
        %1035 = vmatprep.mubr.f32.mxu0 0.0
        %1036 = vmatmul.mubr.f32.gmra.mrb[0].mxu0 %v844
        %v1037 = vpop.f32.mrb[0].mxu0
        %v1038 = vadd.f32 %v749, %v1037
        %v1039 = vpop.f32.mrb[0].mxu0
        %1040 = vmatprep.mubr.f32.mxu0 0.0
        %1041 = vmatmul.mubr.f32.gmra.mrb[0].mxu0 %v846
        %v1042 = vpop.f32.mrb[0].mxu0
        %v1043 = vadd.f32 %v754, %v1042
        %v1044 = vpop.f32.mrb[0].mxu0
        %1045 = vmatprep.mubr.f32.mxu0 0.0
        %1046 = vmatmul.mubr.f32.gmra.mrb[0].mxu0 %v848
        %v1047 = vpop.f32.mrb[0].mxu0
        %v1048 = vadd.f32 %v759, %v1047
        %v1049 = vpop.f32.mrb[0].mxu0
        %1050 = vmatprep.mubr.f32.mxu0 0.0
        %1051 = vmatmul.mubr.f32.gmra.mrb[0].mxu0 %v850
        %v1052 = vpop.f32.mrb[0].mxu0
        %v1053 = vadd.f32 %v764, %v1052
        %v1054 = vpop.f32.mrb[0].mxu0
        %1055 = vmatprep.mubr.f32.mxu0 0.0
        %1056 = vmatmul.mubr.f32.gmra.mrb[0].mxu0 %v852
        %v1057 = vpop.f32.mrb[0].mxu0
        %v1058 = vadd.f32 %v769, %v1057
        %v1059 = vpop.f32.mrb[0].mxu0
        %1060 = vmatprep.mubr.f32.mxu0 0.0
        %1061 = vmatmul.mubr.f32.gmra.mrb[0].mxu0 %v854
        %v1062 = vpop.f32.mrb[0].mxu0
        %v1063 = vadd.f32 %v774, %v1062
        %v1064 = vpop.f32.mrb[0].mxu0
        %1065 = vmatprep.mubr.f32.mxu0 0.0
        %1066 = vmatmul.mubr.f32.gmra.mrb[0].mxu0 %v856
        %v1067 = vpop.f32.mrb[0].mxu0
        %v1068 = vadd.f32 %v779, %v1067
        %v1069 = vpop.f32.mrb[0].mxu0
        %1070 = vmatprep.mubr.f32.mxu0 0.0
        %1071 = vmatmul.mubr.f32.gmra.mrb[0].mxu0 %v858
        %v1072 = vpop.f32.mrb[0].mxu0
        %v1073 = vadd.f32 %v784, %v1072
        %v1074 = vpop.f32.mrb[0].mxu0
        %1075 = vmatprep.mubr.f32.mxu0 0.0
        %1076 = vmatmul.mubr.f32.gmra.mrb[0].mxu0 %v860
        %v1077 = vpop.f32.mrb[0].mxu0
        %v1078 = vadd.f32 %v789, %v1077
        %v1079 = vpop.f32.mrb[0].mxu0
        %1080 = vmatprep.mubr.f32.mxu0 0.0
        %1081 = vmatmul.mubr.f32.gmra.mrb[0].mxu0 %v862
        %v1082 = vpop.f32.mrb[0].mxu0
        %v1083 = vadd.f32 %v794, %v1082
        %v1084 = vpop.f32.mrb[0].mxu0
        %1085 = vmatprep.mubr.f32.mxu0 0.0
        %1086 = vmatmul.mubr.f32.gmra.mrb[0].mxu0 %v864
        %v1087 = vpop.f32.mrb[0].mxu0
        %v1088 = vadd.f32 %v799, %v1087
        %v1089 = vpop.f32.mrb[0].mxu0
        %1090 = vdwg.mxu0
        %vm1091 = vcmask 1045504
        %v1092 = vrot.slane %v325, 2
        %v1093 = vrot.slane %v326, 2
        %v1094 = vsel %vm1091, %v1092, %v1093
        %v1095 = vrot.slane %v327, 2
        %v1096 = vsel %vm1091, %v1093, %v1095
        %v1097 = vrot.slane %v328, 2
        %v1098 = vrot.slane %v329, 2
        %v1099 = vsel %vm1091, %v1097, %v1098
        %v1100 = vrot.slane %v330, 2
        %v1101 = vsel %vm1091, %v1098, %v1100
        %v1102 = vrot.slane %v331, 2
        %v1103 = vrot.slane %v332, 2
        %v1104 = vsel %vm1091, %v1102, %v1103
        %v1105 = vrot.slane %v333, 2
        %v1106 = vsel %vm1091, %v1103, %v1105
        %v1107 = vrot.slane %v334, 2
        %v1108 = vrot.slane %v335, 2
        %v1109 = vsel %vm1091, %v1107, %v1108
        %v1110 = vrot.slane %v336, 2
        %v1111 = vsel %vm1091, %v1108, %v1110
        %v1112 = vrot.slane %v337, 2
        %v1113 = vrot.slane %v338, 2
        %v1114 = vsel %vm1091, %v1112, %v1113
        %v1115 = vrot.slane %v339, 2
        %v1116 = vsel %vm1091, %v1113, %v1115
        %v1117 = vrot.slane %v340, 2
        %v1118 = vrot.slane %v341, 2
        %v1119 = vsel %vm1091, %v1117, %v1118
        %v1120 = vrot.slane %v342, 2
        %v1121 = vsel %vm1091, %v1118, %v1120
        %v1122 = vrot.slane %v343, 2
        %v1123 = vrot.slane %v344, 2
        %v1124 = vsel %vm1091, %v1122, %v1123
        %v1125 = vrot.slane %v345, 2
        %v1126 = vsel %vm1091, %v1123, %v1125
        %v1127 = vrot.slane %v346, 2
        %v1128 = vrot.slane %v347, 2
        %v1129 = vsel %vm1091, %v1127, %v1128
        %v1130 = vrot.slane %v348, 2
        %v1131 = vsel %vm1091, %v1128, %v1130
        %v1132 = vrot.slane %v349, 2
        %v1133 = vrot.slane %v350, 2
        %v1134 = vsel %vm1091, %v1132, %v1133
        %v1135 = vrot.slane %v351, 2
        %v1136 = vsel %vm1091, %v1133, %v1135
        %v1137 = vrot.slane %v352, 2
        %v1138 = vrot.slane %v353, 2
        %v1139 = vsel %vm1091, %v1137, %v1138
        %v1140 = vrot.slane %v354, 2
        %v1141 = vsel %vm1091, %v1138, %v1140
        %v1142 = vrot.slane %v355, 2
        %v1143 = vrot.slane %v356, 2
        %v1144 = vsel %vm1091, %v1142, %v1143
        %v1145 = vrot.slane %v357, 2
        %v1146 = vsel %vm1091, %v1143, %v1145
        %v1147 = vrot.slane %v358, 2
        %v1148 = vrot.slane %v359, 2
        %v1149 = vsel %vm1091, %v1147, %v1148
        %v1150 = vrot.slane %v360, 2
        %v1151 = vsel %vm1091, %v1148, %v1150
        %v1152 = vrot.slane %v361, 2
        %v1153 = vrot.slane %v362, 2
        %v1154 = vsel %vm1091, %v1152, %v1153
        %v1155 = vrot.slane %v363, 2
        %v1156 = vsel %vm1091, %v1153, %v1155
        %v1157 = vrot.slane %v364, 2
        %v1158 = vrot.slane %v365, 2
        %v1159 = vsel %vm1091, %v1157, %v1158
        %v1160 = vrot.slane %v366, 2
        %v1161 = vsel %vm1091, %v1158, %v1160
        %v1162 = vrot.slane %v367, 2
        %v1163 = vrot.slane %v368, 2
        %v1164 = vsel %vm1091, %v1162, %v1163
        %v1165 = vrot.slane %v369, 2
        %v1166 = vsel %vm1091, %v1163, %v1165
        %v1167 = vrot.slane %v370, 2
        %v1168 = vrot.slane %v371, 2
        %v1169 = vsel %vm1091, %v1167, %v1168
        %v1170 = vrot.slane %v372, 2
        %v1171 = vsel %vm1091, %v1168, %v1170
        %s1172 = scalar_lea.vmem [#allocation6], 32
        %v1173 = vld [vmem:[%s1172] sm:$0xff]
        %v1174 = vld [vmem:[%s1172 + $0x8] sm:$0xff]
        %v1175 = vsel %vm204, %v1094, 0
        %v1177 = vsel %vm204, %v1096, 0
        %v1179 = vsel %vm204, %v1099, 0
        %v1181 = vsel %vm204, %v1101, 0
        %v1183 = vsel %vm204, %v1104, 0
        %v1185 = vsel %vm204, %v1106, 0
        %v1187 = vsel %vm204, %v1109, 0
        %v1189 = vsel %vm204, %v1111, 0
        %v1191 = vsel %vm204, %v1114, 0
        %v1193 = vsel %vm204, %v1116, 0
        %v1195 = vsel %vm204, %v1119, 0
        %v1197 = vsel %vm204, %v1121, 0
        %v1199 = vsel %vm204, %v1124, 0
        %v1201 = vsel %vm204, %v1126, 0
        %v1203 = vsel %vm204, %v1129, 0
        %v1205 = vsel %vm204, %v1131, 0
        %v1207 = vsel %vm204, %v1134, 0
        %v1209 = vsel %vm204, %v1136, 0
        %v1211 = vsel %vm204, %v1139, 0
        %v1213 = vsel %vm204, %v1141, 0
        %v1215 = vsel %vm204, %v1144, 0
        %v1217 = vsel %vm204, %v1146, 0
        %v1219 = vsel %vm204, %v1149, 0
        %v1221 = vsel %vm204, %v1151, 0
        %v1223 = vsel %vm204, %v1154, 0
        %v1225 = vsel %vm204, %v1156, 0
        %v1227 = vsel %vm204, %v1159, 0
        %v1229 = vsel %vm204, %v1161, 0
        %v1231 = vsel %vm204, %v1164, 0
        %v1233 = vsel %vm204, %v1166, 0
        %v1235 = vsel %vm204, %v1169, 0
        %v1237 = vsel %vm204, %v1171, 0
        %1239 = vmatprep.subr.mxu0 0.0
        %1240 = vmatpush1.msra.mxu0 %v1173
        %1241 = vmatprep.subr.mxu0 0.0
        %1242 = vmatpush1.msra.mxu0 %v1174
        %1243 = vmatprep.subr.mxu0 0.0
        %1244 = vmatpush1.msra.mxu0 0.0
        %1245 = vmatprep.subr.mxu0 0.0
        %1246 = vmatpush1.msra.mxu0 0.0
        %1247 = vmatprep.subr.mxu0 0.0
        %1248 = vmatpush1.msra.mxu0 0.0
        %1249 = vmatprep.subr.mxu0 0.0
        %1250 = vmatpush1.msra.mxu0 0.0
        %1251 = vmatprep.subr.mxu0 0.0
        %1252 = vmatpush1.msra.mxu0 0.0
        %1253 = vmatprep.subr.mxu0 0.0
        %1254 = vmatpush1.msra.mxu0 0.0
        %1255 = vmatprep.subr.mxu0 0.0
        %1256 = vmatpush1.msra.mxu0 0.0
        %1257 = vmatprep.subr.mxu0 0.0
        %1258 = vmatpush1.msra.mxu0 0.0
        %1259 = vmatprep.subr.mxu0 0.0
        %1260 = vmatpush1.msra.mxu0 0.0
        %1261 = vmatprep.subr.mxu0 0.0
        %1262 = vmatpush1.msra.mxu0 0.0
        %1263 = vmatprep.subr.mxu0 0.0
        %1264 = vmatpush1.msra.mxu0 0.0
        %1265 = vmatprep.subr.mxu0 0.0
        %1266 = vmatpush1.msra.mxu0 0.0
        %1267 = vmatprep.subr.mxu0 0.0
        %1268 = vmatpush1.msra.mxu0 0.0
        %1269 = vmatprep.subr.mxu0 0.0
        %1270 = vmatpush1.msra.mxu0 0.0
        %1271 = vmatprep.subr.mxu0 0.0
        %1272 = vmatpush1.msra.mxu0 0.0
        %1273 = vmatprep.subr.mxu0 0.0
        %1274 = vmatpush1.msra.mxu0 0.0
        %1275 = vmatprep.subr.mxu0 0.0
        %1276 = vmatpush1.msra.mxu0 0.0
        %1277 = vmatprep.subr.mxu0 0.0
        %1278 = vmatpush1.msra.mxu0 0.0
        %1279 = vmatprep.subr.mxu0 0.0
        %1280 = vmatpush1.msra.mxu0 0.0
        %1281 = vmatprep.subr.mxu0 0.0
        %1282 = vmatpush1.msra.mxu0 0.0
        %1283 = vmatprep.subr.mxu0 0.0
        %1284 = vmatpush1.msra.mxu0 0.0
        %1285 = vmatprep.subr.mxu0 0.0
        %1286 = vmatpush1.msra.mxu0 0.0
        %1287 = vmatprep.subr.mxu0 0.0
        %1288 = vmatpush1.msra.mxu0 0.0
        %1289 = vmatprep.subr.mxu0 0.0
        %1290 = vmatpush1.msra.mxu0 0.0
        %1291 = vmatprep.subr.mxu0 0.0
        %1292 = vmatpush1.msra.mxu0 0.0
        %1293 = vmatprep.subr.mxu0 0.0
        %1294 = vmatpush1.msra.mxu0 0.0
        %1295 = vmatprep.subr.mxu0 0.0
        %1296 = vmatpush1.msra.mxu0 0.0
        %1297 = vmatprep.subr.mxu0 0.0
        %1298 = vmatpush1.msra.mxu0 0.0
        %1299 = vmatprep.subr.mxu0 0.0
        %1300 = vmatpush1.msra.mxu0 0.0
        %1301 = vmatprep.subr.mxu0 0.0
        %1302 = vmatpush1.msra.mxu0 0.0
        %1303 = vmatprep.mubr.f32.mxu0 0.0
        %1304 = vmatmul.mubr.f32.gmra.mrb[0].mxu0 %v1175
        %v1305 = vpop.f32.mrb[0].mxu0
        %v1306 = vadd.f32 0.0, %v1305
        %v1307 = vpop.f32.mrb[0].mxu0
        %1308 = vmatprep.mubr.f32.mxu0 0.0
        %1309 = vmatmul.mubr.f32.gmra.mrb[0].mxu0 %v1177
        %v1310 = vpop.f32.mrb[0].mxu0
        %v1311 = vadd.f32 0.0, %v1310
        %v1312 = vpop.f32.mrb[0].mxu0
        %1313 = vmatprep.mubr.f32.mxu0 0.0
        %1314 = vmatmul.mubr.f32.gmra.mrb[0].mxu0 %v1179
        %v1315 = vpop.f32.mrb[0].mxu0
        %v1316 = vadd.f32 0.0, %v1315
        %v1317 = vpop.f32.mrb[0].mxu0
        %1318 = vmatprep.mubr.f32.mxu0 0.0
        %1319 = vmatmul.mubr.f32.gmra.mrb[0].mxu0 %v1181
        %v1320 = vpop.f32.mrb[0].mxu0
        %v1321 = vadd.f32 0.0, %v1320
        %v1322 = vpop.f32.mrb[0].mxu0
        %1323 = vmatprep.mubr.f32.mxu0 0.0
        %1324 = vmatmul.mubr.f32.gmra.mrb[0].mxu0 %v1183
        %v1325 = vpop.f32.mrb[0].mxu0
        %v1326 = vadd.f32 0.0, %v1325
        %v1327 = vpop.f32.mrb[0].mxu0
        %1328 = vmatprep.mubr.f32.mxu0 0.0
        %1329 = vmatmul.mubr.f32.gmra.mrb[0].mxu0 %v1185
        %v1330 = vpop.f32.mrb[0].mxu0
        %v1331 = vadd.f32 0.0, %v1330
        %v1332 = vpop.f32.mrb[0].mxu0
        %1333 = vmatprep.mubr.f32.mxu0 0.0
        %1334 = vmatmul.mubr.f32.gmra.mrb[0].mxu0 %v1187
        %v1335 = vpop.f32.mrb[0].mxu0
        %v1336 = vadd.f32 0.0, %v1335
        %v1337 = vpop.f32.mrb[0].mxu0
        %1338 = vmatprep.mubr.f32.mxu0 0.0
        %1339 = vmatmul.mubr.f32.gmra.mrb[0].mxu0 %v1189
        %v1340 = vpop.f32.mrb[0].mxu0
        %v1341 = vadd.f32 0.0, %v1340
        %v1342 = vpop.f32.mrb[0].mxu0
        %1343 = vmatprep.mubr.f32.mxu0 0.0
        %1344 = vmatmul.mubr.f32.gmra.mrb[0].mxu0 %v1191
        %v1345 = vpop.f32.mrb[0].mxu0
        %v1346 = vadd.f32 0.0, %v1345
        %v1347 = vpop.f32.mrb[0].mxu0
        %1348 = vmatprep.mubr.f32.mxu0 0.0
        %1349 = vmatmul.mubr.f32.gmra.mrb[0].mxu0 %v1193
        %v1350 = vpop.f32.mrb[0].mxu0
        %v1351 = vadd.f32 0.0, %v1350
        %v1352 = vpop.f32.mrb[0].mxu0
        %1353 = vmatprep.mubr.f32.mxu0 0.0
        %1354 = vmatmul.mubr.f32.gmra.mrb[0].mxu0 %v1195
        %v1355 = vpop.f32.mrb[0].mxu0
        %v1356 = vadd.f32 0.0, %v1355
        %v1357 = vpop.f32.mrb[0].mxu0
        %1358 = vmatprep.mubr.f32.mxu0 0.0
        %1359 = vmatmul.mubr.f32.gmra.mrb[0].mxu0 %v1197
        %v1360 = vpop.f32.mrb[0].mxu0
        %v1361 = vadd.f32 0.0, %v1360
        %v1362 = vpop.f32.mrb[0].mxu0
        %1363 = vmatprep.mubr.f32.mxu0 0.0
        %1364 = vmatmul.mubr.f32.gmra.mrb[0].mxu0 %v1199
        %v1365 = vpop.f32.mrb[0].mxu0
        %v1366 = vadd.f32 0.0, %v1365
        %v1367 = vpop.f32.mrb[0].mxu0
        %1368 = vmatprep.mubr.f32.mxu0 0.0
        %1369 = vmatmul.mubr.f32.gmra.mrb[0].mxu0 %v1201
        %v1370 = vpop.f32.mrb[0].mxu0
        %v1371 = vadd.f32 0.0, %v1370
        %v1372 = vpop.f32.mrb[0].mxu0
        %1373 = vmatprep.mubr.f32.mxu0 0.0
        %1374 = vmatmul.mubr.f32.gmra.mrb[0].mxu0 %v1203
        %v1375 = vpop.f32.mrb[0].mxu0
        %v1376 = vadd.f32 0.0, %v1375
        %v1377 = vpop.f32.mrb[0].mxu0
        %1378 = vmatprep.mubr.f32.mxu0 0.0
        %1379 = vmatmul.mubr.f32.gmra.mrb[0].mxu0 %v1205
        %v1380 = vpop.f32.mrb[0].mxu0
        %v1381 = vadd.f32 0.0, %v1380
        %v1382 = vpop.f32.mrb[0].mxu0
        %1383 = vmatprep.mubr.f32.mxu0 0.0
        %1384 = vmatmul.mubr.f32.gmra.mrb[0].mxu0 %v1207
        %v1385 = vpop.f32.mrb[0].mxu0
        %v1386 = vadd.f32 0.0, %v1385
        %v1387 = vpop.f32.mrb[0].mxu0
        %1388 = vmatprep.mubr.f32.mxu0 0.0
        %1389 = vmatmul.mubr.f32.gmra.mrb[0].mxu0 %v1209
        %v1390 = vpop.f32.mrb[0].mxu0
        %v1391 = vadd.f32 0.0, %v1390
        %v1392 = vpop.f32.mrb[0].mxu0
        %1393 = vmatprep.mubr.f32.mxu0 0.0
        %1394 = vmatmul.mubr.f32.gmra.mrb[0].mxu0 %v1211
        %v1395 = vpop.f32.mrb[0].mxu0
        %v1396 = vadd.f32 0.0, %v1395
        %v1397 = vpop.f32.mrb[0].mxu0
        %1398 = vmatprep.mubr.f32.mxu0 0.0
        %1399 = vmatmul.mubr.f32.gmra.mrb[0].mxu0 %v1213
        %v1400 = vpop.f32.mrb[0].mxu0
        %v1401 = vadd.f32 0.0, %v1400
        %v1402 = vpop.f32.mrb[0].mxu0
        %1403 = vmatprep.mubr.f32.mxu0 0.0
        %1404 = vmatmul.mubr.f32.gmra.mrb[0].mxu0 %v1215
        %v1405 = vpop.f32.mrb[0].mxu0
        %v1406 = vadd.f32 0.0, %v1405
        %v1407 = vpop.f32.mrb[0].mxu0
        %1408 = vmatprep.mubr.f32.mxu0 0.0
        %1409 = vmatmul.mubr.f32.gmra.mrb[0].mxu0 %v1217
        %v1410 = vpop.f32.mrb[0].mxu0
        %v1411 = vadd.f32 0.0, %v1410
        %v1412 = vpop.f32.mrb[0].mxu0
        %1413 = vmatprep.mubr.f32.mxu0 0.0
        %1414 = vmatmul.mubr.f32.gmra.mrb[0].mxu0 %v1219
        %v1415 = vpop.f32.mrb[0].mxu0
        %v1416 = vadd.f32 0.0, %v1415
        %v1417 = vpop.f32.mrb[0].mxu0
        %1418 = vmatprep.mubr.f32.mxu0 0.0
        %1419 = vmatmul.mubr.f32.gmra.mrb[0].mxu0 %v1221
        %v1420 = vpop.f32.mrb[0].mxu0
        %v1421 = vadd.f32 0.0, %v1420
        %v1422 = vpop.f32.mrb[0].mxu0
        %1423 = vmatprep.mubr.f32.mxu0 0.0
        %1424 = vmatmul.mubr.f32.gmra.mrb[0].mxu0 %v1223
        %v1425 = vpop.f32.mrb[0].mxu0
        %v1426 = vadd.f32 0.0, %v1425
        %v1427 = vpop.f32.mrb[0].mxu0
        %1428 = vmatprep.mubr.f32.mxu0 0.0
        %1429 = vmatmul.mubr.f32.gmra.mrb[0].mxu0 %v1225
        %v1430 = vpop.f32.mrb[0].mxu0
        %v1431 = vadd.f32 0.0, %v1430
        %v1432 = vpop.f32.mrb[0].mxu0
        %1433 = vmatprep.mubr.f32.mxu0 0.0
        %1434 = vmatmul.mubr.f32.gmra.mrb[0].mxu0 %v1227
        %v1435 = vpop.f32.mrb[0].mxu0
        %v1436 = vadd.f32 0.0, %v1435
        %v1437 = vpop.f32.mrb[0].mxu0
        %1438 = vmatprep.mubr.f32.mxu0 0.0
        %1439 = vmatmul.mubr.f32.gmra.mrb[0].mxu0 %v1229
        %v1440 = vpop.f32.mrb[0].mxu0
        %v1441 = vadd.f32 0.0, %v1440
        %v1442 = vpop.f32.mrb[0].mxu0
        %1443 = vmatprep.mubr.f32.mxu0 0.0
        %1444 = vmatmul.mubr.f32.gmra.mrb[0].mxu0 %v1231
        %v1445 = vpop.f32.mrb[0].mxu0
        %v1446 = vadd.f32 0.0, %v1445
        %v1447 = vpop.f32.mrb[0].mxu0
        %1448 = vmatprep.mubr.f32.mxu0 0.0
        %1449 = vmatmul.mubr.f32.gmra.mrb[0].mxu0 %v1233
        %v1450 = vpop.f32.mrb[0].mxu0
        %v1451 = vadd.f32 0.0, %v1450
        %v1452 = vpop.f32.mrb[0].mxu0
        %1453 = vmatprep.mubr.f32.mxu0 0.0
        %1454 = vmatmul.mubr.f32.gmra.mrb[0].mxu0 %v1235
        %v1455 = vpop.f32.mrb[0].mxu0
        %v1456 = vadd.f32 0.0, %v1455
        %v1457 = vpop.f32.mrb[0].mxu0
        %1458 = vmatprep.mubr.f32.mxu0 0.0
        %1459 = vmatmul.mubr.f32.gmra.mrb[0].mxu0 %v1237
        %v1460 = vpop.f32.mrb[0].mxu0
        %v1461 = vadd.f32 0.0, %v1460
        %v1462 = vpop.f32.mrb[0].mxu0
        %1463 = vdwg.mxu0
        %v1464 = vadd.f32 %v933, %v1306
        %v1465 = vadd.f32 %v938, %v1311
        %v1466 = vadd.f32 %v943, %v1316
        %v1467 = vadd.f32 %v948, %v1321
        %v1468 = vadd.f32 %v953, %v1326
        %v1469 = vadd.f32 %v958, %v1331
        %v1470 = vadd.f32 %v963, %v1336
        %v1471 = vadd.f32 %v968, %v1341
        %v1472 = vadd.f32 %v973, %v1346
        %v1473 = vadd.f32 %v978, %v1351
        %v1474 = vadd.f32 %v983, %v1356
        %v1475 = vadd.f32 %v988, %v1361
        %v1476 = vadd.f32 %v993, %v1366
        %v1477 = vadd.f32 %v998, %v1371
        %v1478 = vadd.f32 %v1003, %v1376
        %v1479 = vadd.f32 %v1008, %v1381
        %v1480 = vadd.f32 %v1013, %v1386
        %v1481 = vadd.f32 %v1018, %v1391
        %v1482 = vadd.f32 %v1023, %v1396
        %v1483 = vadd.f32 %v1028, %v1401
        %v1484 = vadd.f32 %v1033, %v1406
        %v1485 = vadd.f32 %v1038, %v1411
        %v1486 = vadd.f32 %v1043, %v1416
        %v1487 = vadd.f32 %v1048, %v1421
        %v1488 = vadd.f32 %v1053, %v1426
        %v1489 = vadd.f32 %v1058, %v1431
        %v1490 = vadd.f32 %v1063, %v1436
        %v1491 = vadd.f32 %v1068, %v1441
        %v1492 = vadd.f32 %v1073, %v1446
        %v1493 = vadd.f32 %v1078, %v1451
        %v1494 = vadd.f32 %v1083, %v1456
        %v1495 = vadd.f32 %v1088, %v1461
        %s1496 = scalar_lea.vmem [#allocation6], 48
        %v1497 = vld [vmem:[%s1496] sm:$0xff]
        %v1498 = vld [vmem:[%s1496 + $0x8] sm:$0xff]
        %v1500 = vsel %vm204, %v373, 0
        %v1503 = vsel %vm204, %v374, 0
        %1505 = vmatprep.subr.mxu0 0.0
        %1506 = vmatpush1.msra.mxu0 %v1497
        %1507 = vmatprep.subr.mxu0 0.0
        %1508 = vmatpush1.msra.mxu0 %v1498
        %1509 = vmatprep.subr.mxu0 0.0
        %1510 = vmatpush1.msra.mxu0 0.0
        %1511 = vmatprep.subr.mxu0 0.0
        %1512 = vmatpush1.msra.mxu0 0.0
        %1513 = vmatprep.subr.mxu0 0.0
        %1514 = vmatpush1.msra.mxu0 0.0
        %1515 = vmatprep.subr.mxu0 0.0
        %1516 = vmatpush1.msra.mxu0 0.0
        %1517 = vmatprep.subr.mxu0 0.0
        %1518 = vmatpush1.msra.mxu0 0.0
        %1519 = vmatprep.subr.mxu0 0.0
        %1520 = vmatpush1.msra.mxu0 0.0
        %1521 = vmatprep.subr.mxu0 0.0
        %1522 = vmatpush1.msra.mxu0 0.0
        %1523 = vmatprep.subr.mxu0 0.0
        %1524 = vmatpush1.msra.mxu0 0.0
        %1525 = vmatprep.subr.mxu0 0.0
        %1526 = vmatpush1.msra.mxu0 0.0
        %1527 = vmatprep.subr.mxu0 0.0
        %1528 = vmatpush1.msra.mxu0 0.0
        %1529 = vmatprep.subr.mxu0 0.0
        %1530 = vmatpush1.msra.mxu0 0.0
        %1531 = vmatprep.subr.mxu0 0.0
        %1532 = vmatpush1.msra.mxu0 0.0
        %1533 = vmatprep.subr.mxu0 0.0
        %1534 = vmatpush1.msra.mxu0 0.0
        %1535 = vmatprep.subr.mxu0 0.0
        %1536 = vmatpush1.msra.mxu0 0.0
        %1537 = vmatprep.subr.mxu0 0.0
        %1538 = vmatpush1.msra.mxu0 0.0
        %1539 = vmatprep.subr.mxu0 0.0
        %1540 = vmatpush1.msra.mxu0 0.0
        %1541 = vmatprep.subr.mxu0 0.0
        %1542 = vmatpush1.msra.mxu0 0.0
        %1543 = vmatprep.subr.mxu0 0.0
        %1544 = vmatpush1.msra.mxu0 0.0
        %1545 = vmatprep.subr.mxu0 0.0
        %1546 = vmatpush1.msra.mxu0 0.0
        %1547 = vmatprep.subr.mxu0 0.0
        %1548 = vmatpush1.msra.mxu0 0.0
        %1549 = vmatprep.subr.mxu0 0.0
        %1550 = vmatpush1.msra.mxu0 0.0
        %1551 = vmatprep.subr.mxu0 0.0
        %1552 = vmatpush1.msra.mxu0 0.0
        %1553 = vmatprep.subr.mxu0 0.0
        %1554 = vmatpush1.msra.mxu0 0.0
        %1555 = vmatprep.subr.mxu0 0.0
        %1556 = vmatpush1.msra.mxu0 0.0
        %1557 = vmatprep.subr.mxu0 0.0
        %1558 = vmatpush1.msra.mxu0 0.0
        %1559 = vmatprep.subr.mxu0 0.0
        %1560 = vmatpush1.msra.mxu0 0.0
        %1561 = vmatprep.subr.mxu0 0.0
        %1562 = vmatpush1.msra.mxu0 0.0
        %1563 = vmatprep.subr.mxu0 0.0
        %1564 = vmatpush1.msra.mxu0 0.0
        %1565 = vmatprep.subr.mxu0 0.0
        %1566 = vmatpush1.msra.mxu0 0.0
        %1567 = vmatprep.subr.mxu0 0.0
        %1568 = vmatpush1.msra.mxu0 0.0
        %1569 = vmatprep.mubr.f32.mxu0 0.0
        %1570 = vmatmul.mubr.f32.gmra.mrb[0].mxu0 %v806
        %v1571 = vpop.f32.mrb[0].mxu0
        %v1572 = vadd.f32 0.0, %v1571
        %v1573 = vpop.f32.mrb[0].mxu0
        %1574 = vmatprep.mubr.f32.mxu0 0.0
        %1575 = vmatmul.mubr.f32.gmra.mrb[0].mxu0 %v808
        %v1576 = vpop.f32.mrb[0].mxu0
        %v1577 = vadd.f32 0.0, %v1576
        %v1578 = vpop.f32.mrb[0].mxu0
        %1579 = vmatprep.mubr.f32.mxu0 0.0
        %1580 = vmatmul.mubr.f32.gmra.mrb[0].mxu0 %v810
        %v1581 = vpop.f32.mrb[0].mxu0
        %v1582 = vadd.f32 0.0, %v1581
        %v1583 = vpop.f32.mrb[0].mxu0
        %1584 = vmatprep.mubr.f32.mxu0 0.0
        %1585 = vmatmul.mubr.f32.gmra.mrb[0].mxu0 %v812
        %v1586 = vpop.f32.mrb[0].mxu0
        %v1587 = vadd.f32 0.0, %v1586
        %v1588 = vpop.f32.mrb[0].mxu0
        %1589 = vmatprep.mubr.f32.mxu0 0.0
        %1590 = vmatmul.mubr.f32.gmra.mrb[0].mxu0 %v814
        %v1591 = vpop.f32.mrb[0].mxu0
        %v1592 = vadd.f32 0.0, %v1591
        %v1593 = vpop.f32.mrb[0].mxu0
        %1594 = vmatprep.mubr.f32.mxu0 0.0
        %1595 = vmatmul.mubr.f32.gmra.mrb[0].mxu0 %v816
        %v1596 = vpop.f32.mrb[0].mxu0
        %v1597 = vadd.f32 0.0, %v1596
        %v1598 = vpop.f32.mrb[0].mxu0
        %1599 = vmatprep.mubr.f32.mxu0 0.0
        %1600 = vmatmul.mubr.f32.gmra.mrb[0].mxu0 %v818
        %v1601 = vpop.f32.mrb[0].mxu0
        %v1602 = vadd.f32 0.0, %v1601
        %v1603 = vpop.f32.mrb[0].mxu0
        %1604 = vmatprep.mubr.f32.mxu0 0.0
        %1605 = vmatmul.mubr.f32.gmra.mrb[0].mxu0 %v820
        %v1606 = vpop.f32.mrb[0].mxu0
        %v1607 = vadd.f32 0.0, %v1606
        %v1608 = vpop.f32.mrb[0].mxu0
        %1609 = vmatprep.mubr.f32.mxu0 0.0
        %1610 = vmatmul.mubr.f32.gmra.mrb[0].mxu0 %v822
        %v1611 = vpop.f32.mrb[0].mxu0
        %v1612 = vadd.f32 0.0, %v1611
        %v1613 = vpop.f32.mrb[0].mxu0
        %1614 = vmatprep.mubr.f32.mxu0 0.0
        %1615 = vmatmul.mubr.f32.gmra.mrb[0].mxu0 %v824
        %v1616 = vpop.f32.mrb[0].mxu0
        %v1617 = vadd.f32 0.0, %v1616
        %v1618 = vpop.f32.mrb[0].mxu0
        %1619 = vmatprep.mubr.f32.mxu0 0.0
        %1620 = vmatmul.mubr.f32.gmra.mrb[0].mxu0 %v826
        %v1621 = vpop.f32.mrb[0].mxu0
        %v1622 = vadd.f32 0.0, %v1621
        %v1623 = vpop.f32.mrb[0].mxu0
        %1624 = vmatprep.mubr.f32.mxu0 0.0
        %1625 = vmatmul.mubr.f32.gmra.mrb[0].mxu0 %v828
        %v1626 = vpop.f32.mrb[0].mxu0
        %v1627 = vadd.f32 0.0, %v1626
        %v1628 = vpop.f32.mrb[0].mxu0
        %1629 = vmatprep.mubr.f32.mxu0 0.0
        %1630 = vmatmul.mubr.f32.gmra.mrb[0].mxu0 %v830
        %v1631 = vpop.f32.mrb[0].mxu0
        %v1632 = vadd.f32 0.0, %v1631
        %v1633 = vpop.f32.mrb[0].mxu0
        %1634 = vmatprep.mubr.f32.mxu0 0.0
        %1635 = vmatmul.mubr.f32.gmra.mrb[0].mxu0 %v832
        %v1636 = vpop.f32.mrb[0].mxu0
        %v1637 = vadd.f32 0.0, %v1636
        %v1638 = vpop.f32.mrb[0].mxu0
        %1639 = vmatprep.mubr.f32.mxu0 0.0
        %1640 = vmatmul.mubr.f32.gmra.mrb[0].mxu0 %v834
        %v1641 = vpop.f32.mrb[0].mxu0
        %v1642 = vadd.f32 0.0, %v1641
        %v1643 = vpop.f32.mrb[0].mxu0
        %1644 = vmatprep.mubr.f32.mxu0 0.0
        %1645 = vmatmul.mubr.f32.gmra.mrb[0].mxu0 %v836
        %v1646 = vpop.f32.mrb[0].mxu0
        %v1647 = vadd.f32 0.0, %v1646
        %v1648 = vpop.f32.mrb[0].mxu0
        %1649 = vmatprep.mubr.f32.mxu0 0.0
        %1650 = vmatmul.mubr.f32.gmra.mrb[0].mxu0 %v838
        %v1651 = vpop.f32.mrb[0].mxu0
        %v1652 = vadd.f32 0.0, %v1651
        %v1653 = vpop.f32.mrb[0].mxu0
        %1654 = vmatprep.mubr.f32.mxu0 0.0
        %1655 = vmatmul.mubr.f32.gmra.mrb[0].mxu0 %v840
        %v1656 = vpop.f32.mrb[0].mxu0
        %v1657 = vadd.f32 0.0, %v1656
        %v1658 = vpop.f32.mrb[0].mxu0
        %1659 = vmatprep.mubr.f32.mxu0 0.0
        %1660 = vmatmul.mubr.f32.gmra.mrb[0].mxu0 %v842
        %v1661 = vpop.f32.mrb[0].mxu0
        %v1662 = vadd.f32 0.0, %v1661
        %v1663 = vpop.f32.mrb[0].mxu0
        %1664 = vmatprep.mubr.f32.mxu0 0.0
        %1665 = vmatmul.mubr.f32.gmra.mrb[0].mxu0 %v844
        %v1666 = vpop.f32.mrb[0].mxu0
        %v1667 = vadd.f32 0.0, %v1666
        %v1668 = vpop.f32.mrb[0].mxu0
        %1669 = vmatprep.mubr.f32.mxu0 0.0
        %1670 = vmatmul.mubr.f32.gmra.mrb[0].mxu0 %v846
        %v1671 = vpop.f32.mrb[0].mxu0
        %v1672 = vadd.f32 0.0, %v1671
        %v1673 = vpop.f32.mrb[0].mxu0
        %1674 = vmatprep.mubr.f32.mxu0 0.0
        %1675 = vmatmul.mubr.f32.gmra.mrb[0].mxu0 %v848
        %v1676 = vpop.f32.mrb[0].mxu0
        %v1677 = vadd.f32 0.0, %v1676
        %v1678 = vpop.f32.mrb[0].mxu0
        %1679 = vmatprep.mubr.f32.mxu0 0.0
        %1680 = vmatmul.mubr.f32.gmra.mrb[0].mxu0 %v850
        %v1681 = vpop.f32.mrb[0].mxu0
        %v1682 = vadd.f32 0.0, %v1681
        %v1683 = vpop.f32.mrb[0].mxu0
        %1684 = vmatprep.mubr.f32.mxu0 0.0
        %1685 = vmatmul.mubr.f32.gmra.mrb[0].mxu0 %v852
        %v1686 = vpop.f32.mrb[0].mxu0
        %v1687 = vadd.f32 0.0, %v1686
        %v1688 = vpop.f32.mrb[0].mxu0
        %1689 = vmatprep.mubr.f32.mxu0 0.0
        %1690 = vmatmul.mubr.f32.gmra.mrb[0].mxu0 %v854
        %v1691 = vpop.f32.mrb[0].mxu0
        %v1692 = vadd.f32 0.0, %v1691
        %v1693 = vpop.f32.mrb[0].mxu0
        %1694 = vmatprep.mubr.f32.mxu0 0.0
        %1695 = vmatmul.mubr.f32.gmra.mrb[0].mxu0 %v856
        %v1696 = vpop.f32.mrb[0].mxu0
        %v1697 = vadd.f32 0.0, %v1696
        %v1698 = vpop.f32.mrb[0].mxu0
        %1699 = vmatprep.mubr.f32.mxu0 0.0
        %1700 = vmatmul.mubr.f32.gmra.mrb[0].mxu0 %v858
        %v1701 = vpop.f32.mrb[0].mxu0
        %v1702 = vadd.f32 0.0, %v1701
        %v1703 = vpop.f32.mrb[0].mxu0
        %1704 = vmatprep.mubr.f32.mxu0 0.0
        %1705 = vmatmul.mubr.f32.gmra.mrb[0].mxu0 %v860
        %v1706 = vpop.f32.mrb[0].mxu0
        %v1707 = vadd.f32 0.0, %v1706
        %v1708 = vpop.f32.mrb[0].mxu0
        %1709 = vmatprep.mubr.f32.mxu0 0.0
        %1710 = vmatmul.mubr.f32.gmra.mrb[0].mxu0 %v862
        %v1711 = vpop.f32.mrb[0].mxu0
        %v1712 = vadd.f32 0.0, %v1711
        %v1713 = vpop.f32.mrb[0].mxu0
        %1714 = vmatprep.mubr.f32.mxu0 0.0
        %1715 = vmatmul.mubr.f32.gmra.mrb[0].mxu0 %v864
        %v1716 = vpop.f32.mrb[0].mxu0
        %v1717 = vadd.f32 0.0, %v1716
        %v1718 = vpop.f32.mrb[0].mxu0
        %1719 = vmatprep.mubr.f32.mxu0 0.0
        %1720 = vmatmul.mubr.f32.gmra.mrb[0].mxu0 %v1500
        %v1721 = vpop.f32.mrb[0].mxu0
        %v1722 = vadd.f32 0.0, %v1721
        %v1723 = vpop.f32.mrb[0].mxu0
        %1724 = vmatprep.mubr.f32.mxu0 0.0
        %1725 = vmatmul.mubr.f32.gmra.mrb[0].mxu0 %v1503
        %v1726 = vpop.f32.mrb[0].mxu0
        %v1727 = vadd.f32 0.0, %v1726
        %v1728 = vpop.f32.mrb[0].mxu0
        %1729 = vdwg.mxu0
        %v1730 = vadd.f32 %v1464, %v1572
        %v1731 = vadd.f32 %v1465, %v1577
        %v1732 = vadd.f32 %v1466, %v1582
        %v1733 = vadd.f32 %v1467, %v1587
        %v1734 = vadd.f32 %v1468, %v1592
        %v1735 = vadd.f32 %v1469, %v1597
        %v1736 = vadd.f32 %v1470, %v1602
        %v1737 = vadd.f32 %v1471, %v1607
        %v1738 = vadd.f32 %v1472, %v1612
        %v1739 = vadd.f32 %v1473, %v1617
        %v1740 = vadd.f32 %v1474, %v1622
        %v1741 = vadd.f32 %v1475, %v1627
        %v1742 = vadd.f32 %v1476, %v1632
        %v1743 = vadd.f32 %v1477, %v1637
        %v1744 = vadd.f32 %v1478, %v1642
        %v1745 = vadd.f32 %v1479, %v1647
        %v1746 = vadd.f32 %v1480, %v1652
        %v1747 = vadd.f32 %v1481, %v1657
        %v1748 = vadd.f32 %v1482, %v1662
        %v1749 = vadd.f32 %v1483, %v1667
        %v1750 = vadd.f32 %v1484, %v1672
        %v1751 = vadd.f32 %v1485, %v1677
        %v1752 = vadd.f32 %v1486, %v1682
        %v1753 = vadd.f32 %v1487, %v1687
        %v1754 = vadd.f32 %v1488, %v1692
        %v1755 = vadd.f32 %v1489, %v1697
        %v1756 = vadd.f32 %v1490, %v1702
        %v1757 = vadd.f32 %v1491, %v1707
        %v1758 = vadd.f32 %v1492, %v1712
        %v1759 = vadd.f32 %v1493, %v1717
        %v1760 = vadd.f32 %v1494, %v1722
        %v1761 = vadd.f32 %v1495, %v1727
        %v1763 = vrot.slane %v373, 1
        %v1764 = vrot.slane %v374, 1
        %v1765 = vsel %vm429, %v1763, %v1764
        %v1766 = vrot.slane %v375, 1
        %v1767 = vsel %vm429, %v1764, %v1766
        %s1768 = scalar_lea.vmem [#allocation6], 64
        %v1769 = vld [vmem:[%s1768] sm:$0xff]
        %v1770 = vld [vmem:[%s1768 + $0x8] sm:$0xff]
        %v1771 = vsel %vm204, %v1765, 0
        %v1773 = vsel %vm204, %v1767, 0
        %1775 = vmatprep.subr.mxu0 0.0
        %1776 = vmatpush1.msra.mxu0 %v1769
        %1777 = vmatprep.subr.mxu0 0.0
        %1778 = vmatpush1.msra.mxu0 %v1770
        %1779 = vmatprep.subr.mxu0 0.0
        %1780 = vmatpush1.msra.mxu0 0.0
        %1781 = vmatprep.subr.mxu0 0.0
        %1782 = vmatpush1.msra.mxu0 0.0
        %1783 = vmatprep.subr.mxu0 0.0
        %1784 = vmatpush1.msra.mxu0 0.0
        %1785 = vmatprep.subr.mxu0 0.0
        %1786 = vmatpush1.msra.mxu0 0.0
        %1787 = vmatprep.subr.mxu0 0.0
        %1788 = vmatpush1.msra.mxu0 0.0
        %1789 = vmatprep.subr.mxu0 0.0
        %1790 = vmatpush1.msra.mxu0 0.0
        %1791 = vmatprep.subr.mxu0 0.0
        %1792 = vmatpush1.msra.mxu0 0.0
        %1793 = vmatprep.subr.mxu0 0.0
        %1794 = vmatpush1.msra.mxu0 0.0
        %1795 = vmatprep.subr.mxu0 0.0
        %1796 = vmatpush1.msra.mxu0 0.0
        %1797 = vmatprep.subr.mxu0 0.0
        %1798 = vmatpush1.msra.mxu0 0.0
        %1799 = vmatprep.subr.mxu0 0.0
        %1800 = vmatpush1.msra.mxu0 0.0
        %1801 = vmatprep.subr.mxu0 0.0
        %1802 = vmatpush1.msra.mxu0 0.0
        %1803 = vmatprep.subr.mxu0 0.0
        %1804 = vmatpush1.msra.mxu0 0.0
        %1805 = vmatprep.subr.mxu0 0.0
        %1806 = vmatpush1.msra.mxu0 0.0
        %1807 = vmatprep.subr.mxu0 0.0
        %1808 = vmatpush1.msra.mxu0 0.0
        %1809 = vmatprep.subr.mxu0 0.0
        %1810 = vmatpush1.msra.mxu0 0.0
        %1811 = vmatprep.subr.mxu0 0.0
        %1812 = vmatpush1.msra.mxu0 0.0
        %1813 = vmatprep.subr.mxu0 0.0
        %1814 = vmatpush1.msra.mxu0 0.0
        %1815 = vmatprep.subr.mxu0 0.0
        %1816 = vmatpush1.msra.mxu0 0.0
        %1817 = vmatprep.subr.mxu0 0.0
        %1818 = vmatpush1.msra.mxu0 0.0
        %1819 = vmatprep.subr.mxu0 0.0
        %1820 = vmatpush1.msra.mxu0 0.0
        %1821 = vmatprep.subr.mxu0 0.0
        %1822 = vmatpush1.msra.mxu0 0.0
        %1823 = vmatprep.subr.mxu0 0.0
        %1824 = vmatpush1.msra.mxu0 0.0
        %1825 = vmatprep.subr.mxu0 0.0
        %1826 = vmatpush1.msra.mxu0 0.0
        %1827 = vmatprep.subr.mxu0 0.0
        %1828 = vmatpush1.msra.mxu0 0.0
        %1829 = vmatprep.subr.mxu0 0.0
        %1830 = vmatpush1.msra.mxu0 0.0
        %1831 = vmatprep.subr.mxu0 0.0
        %1832 = vmatpush1.msra.mxu0 0.0
        %1833 = vmatprep.subr.mxu0 0.0
        %1834 = vmatpush1.msra.mxu0 0.0
        %1835 = vmatprep.subr.mxu0 0.0
        %1836 = vmatpush1.msra.mxu0 0.0
        %1837 = vmatprep.subr.mxu0 0.0
        %1838 = vmatpush1.msra.mxu0 0.0
        %1839 = vmatprep.mubr.f32.mxu0 0.0
        %1840 = vmatmul.mubr.f32.gmra.mrb[0].mxu0 %v517
        %v1841 = vpop.f32.mrb[0].mxu0
        %v1842 = vadd.f32 0.0, %v1841
        %v1843 = vpop.f32.mrb[0].mxu0
        %1844 = vmatprep.mubr.f32.mxu0 0.0
        %1845 = vmatmul.mubr.f32.gmra.mrb[0].mxu0 %v519
        %v1846 = vpop.f32.mrb[0].mxu0
        %v1847 = vadd.f32 0.0, %v1846
        %v1848 = vpop.f32.mrb[0].mxu0
        %1849 = vmatprep.mubr.f32.mxu0 0.0
        %1850 = vmatmul.mubr.f32.gmra.mrb[0].mxu0 %v521
        %v1851 = vpop.f32.mrb[0].mxu0
        %v1852 = vadd.f32 0.0, %v1851
        %v1853 = vpop.f32.mrb[0].mxu0
        %1854 = vmatprep.mubr.f32.mxu0 0.0
        %1855 = vmatmul.mubr.f32.gmra.mrb[0].mxu0 %v523
        %v1856 = vpop.f32.mrb[0].mxu0
        %v1857 = vadd.f32 0.0, %v1856
        %v1858 = vpop.f32.mrb[0].mxu0
        %1859 = vmatprep.mubr.f32.mxu0 0.0
        %1860 = vmatmul.mubr.f32.gmra.mrb[0].mxu0 %v525
        %v1861 = vpop.f32.mrb[0].mxu0
        %v1862 = vadd.f32 0.0, %v1861
        %v1863 = vpop.f32.mrb[0].mxu0
        %1864 = vmatprep.mubr.f32.mxu0 0.0
        %1865 = vmatmul.mubr.f32.gmra.mrb[0].mxu0 %v527
        %v1866 = vpop.f32.mrb[0].mxu0
        %v1867 = vadd.f32 0.0, %v1866
        %v1868 = vpop.f32.mrb[0].mxu0
        %1869 = vmatprep.mubr.f32.mxu0 0.0
        %1870 = vmatmul.mubr.f32.gmra.mrb[0].mxu0 %v529
        %v1871 = vpop.f32.mrb[0].mxu0
        %v1872 = vadd.f32 0.0, %v1871
        %v1873 = vpop.f32.mrb[0].mxu0
        %1874 = vmatprep.mubr.f32.mxu0 0.0
        %1875 = vmatmul.mubr.f32.gmra.mrb[0].mxu0 %v531
        %v1876 = vpop.f32.mrb[0].mxu0
        %v1877 = vadd.f32 0.0, %v1876
        %v1878 = vpop.f32.mrb[0].mxu0
        %1879 = vmatprep.mubr.f32.mxu0 0.0
        %1880 = vmatmul.mubr.f32.gmra.mrb[0].mxu0 %v533
        %v1881 = vpop.f32.mrb[0].mxu0
        %v1882 = vadd.f32 0.0, %v1881
        %v1883 = vpop.f32.mrb[0].mxu0
        %1884 = vmatprep.mubr.f32.mxu0 0.0
        %1885 = vmatmul.mubr.f32.gmra.mrb[0].mxu0 %v535
        %v1886 = vpop.f32.mrb[0].mxu0
        %v1887 = vadd.f32 0.0, %v1886
        %v1888 = vpop.f32.mrb[0].mxu0
        %1889 = vmatprep.mubr.f32.mxu0 0.0
        %1890 = vmatmul.mubr.f32.gmra.mrb[0].mxu0 %v537
        %v1891 = vpop.f32.mrb[0].mxu0
        %v1892 = vadd.f32 0.0, %v1891
        %v1893 = vpop.f32.mrb[0].mxu0
        %1894 = vmatprep.mubr.f32.mxu0 0.0
        %1895 = vmatmul.mubr.f32.gmra.mrb[0].mxu0 %v539
        %v1896 = vpop.f32.mrb[0].mxu0
        %v1897 = vadd.f32 0.0, %v1896
        %v1898 = vpop.f32.mrb[0].mxu0
        %1899 = vmatprep.mubr.f32.mxu0 0.0
        %1900 = vmatmul.mubr.f32.gmra.mrb[0].mxu0 %v541
        %v1901 = vpop.f32.mrb[0].mxu0
        %v1902 = vadd.f32 0.0, %v1901
        %v1903 = vpop.f32.mrb[0].mxu0
        %1904 = vmatprep.mubr.f32.mxu0 0.0
        %1905 = vmatmul.mubr.f32.gmra.mrb[0].mxu0 %v543
        %v1906 = vpop.f32.mrb[0].mxu0
        %v1907 = vadd.f32 0.0, %v1906
        %v1908 = vpop.f32.mrb[0].mxu0
        %1909 = vmatprep.mubr.f32.mxu0 0.0
        %1910 = vmatmul.mubr.f32.gmra.mrb[0].mxu0 %v545
        %v1911 = vpop.f32.mrb[0].mxu0
        %v1912 = vadd.f32 0.0, %v1911
        %v1913 = vpop.f32.mrb[0].mxu0
        %1914 = vmatprep.mubr.f32.mxu0 0.0
        %1915 = vmatmul.mubr.f32.gmra.mrb[0].mxu0 %v547
        %v1916 = vpop.f32.mrb[0].mxu0
        %v1917 = vadd.f32 0.0, %v1916
        %v1918 = vpop.f32.mrb[0].mxu0
        %1919 = vmatprep.mubr.f32.mxu0 0.0
        %1920 = vmatmul.mubr.f32.gmra.mrb[0].mxu0 %v549
        %v1921 = vpop.f32.mrb[0].mxu0
        %v1922 = vadd.f32 0.0, %v1921
        %v1923 = vpop.f32.mrb[0].mxu0
        %1924 = vmatprep.mubr.f32.mxu0 0.0
        %1925 = vmatmul.mubr.f32.gmra.mrb[0].mxu0 %v551
        %v1926 = vpop.f32.mrb[0].mxu0
        %v1927 = vadd.f32 0.0, %v1926
        %v1928 = vpop.f32.mrb[0].mxu0
        %1929 = vmatprep.mubr.f32.mxu0 0.0
        %1930 = vmatmul.mubr.f32.gmra.mrb[0].mxu0 %v553
        %v1931 = vpop.f32.mrb[0].mxu0
        %v1932 = vadd.f32 0.0, %v1931
        %v1933 = vpop.f32.mrb[0].mxu0
        %1934 = vmatprep.mubr.f32.mxu0 0.0
        %1935 = vmatmul.mubr.f32.gmra.mrb[0].mxu0 %v555
        %v1936 = vpop.f32.mrb[0].mxu0
        %v1937 = vadd.f32 0.0, %v1936
        %v1938 = vpop.f32.mrb[0].mxu0
        %1939 = vmatprep.mubr.f32.mxu0 0.0
        %1940 = vmatmul.mubr.f32.gmra.mrb[0].mxu0 %v557
        %v1941 = vpop.f32.mrb[0].mxu0
        %v1942 = vadd.f32 0.0, %v1941
        %v1943 = vpop.f32.mrb[0].mxu0
        %1944 = vmatprep.mubr.f32.mxu0 0.0
        %1945 = vmatmul.mubr.f32.gmra.mrb[0].mxu0 %v559
        %v1946 = vpop.f32.mrb[0].mxu0
        %v1947 = vadd.f32 0.0, %v1946
        %v1948 = vpop.f32.mrb[0].mxu0
        %1949 = vmatprep.mubr.f32.mxu0 0.0
        %1950 = vmatmul.mubr.f32.gmra.mrb[0].mxu0 %v561
        %v1951 = vpop.f32.mrb[0].mxu0
        %v1952 = vadd.f32 0.0, %v1951
        %v1953 = vpop.f32.mrb[0].mxu0
        %1954 = vmatprep.mubr.f32.mxu0 0.0
        %1955 = vmatmul.mubr.f32.gmra.mrb[0].mxu0 %v563
        %v1956 = vpop.f32.mrb[0].mxu0
        %v1957 = vadd.f32 0.0, %v1956
        %v1958 = vpop.f32.mrb[0].mxu0
        %1959 = vmatprep.mubr.f32.mxu0 0.0
        %1960 = vmatmul.mubr.f32.gmra.mrb[0].mxu0 %v565
        %v1961 = vpop.f32.mrb[0].mxu0
        %v1962 = vadd.f32 0.0, %v1961
        %v1963 = vpop.f32.mrb[0].mxu0
        %1964 = vmatprep.mubr.f32.mxu0 0.0
        %1965 = vmatmul.mubr.f32.gmra.mrb[0].mxu0 %v567
        %v1966 = vpop.f32.mrb[0].mxu0
        %v1967 = vadd.f32 0.0, %v1966
        %v1968 = vpop.f32.mrb[0].mxu0
        %1969 = vmatprep.mubr.f32.mxu0 0.0
        %1970 = vmatmul.mubr.f32.gmra.mrb[0].mxu0 %v569
        %v1971 = vpop.f32.mrb[0].mxu0
        %v1972 = vadd.f32 0.0, %v1971
        %v1973 = vpop.f32.mrb[0].mxu0
        %1974 = vmatprep.mubr.f32.mxu0 0.0
        %1975 = vmatmul.mubr.f32.gmra.mrb[0].mxu0 %v571
        %v1976 = vpop.f32.mrb[0].mxu0
        %v1977 = vadd.f32 0.0, %v1976
        %v1978 = vpop.f32.mrb[0].mxu0
        %1979 = vmatprep.mubr.f32.mxu0 0.0
        %1980 = vmatmul.mubr.f32.gmra.mrb[0].mxu0 %v573
        %v1981 = vpop.f32.mrb[0].mxu0
        %v1982 = vadd.f32 0.0, %v1981
        %v1983 = vpop.f32.mrb[0].mxu0
        %1984 = vmatprep.mubr.f32.mxu0 0.0
        %1985 = vmatmul.mubr.f32.gmra.mrb[0].mxu0 %v575
        %v1986 = vpop.f32.mrb[0].mxu0
        %v1987 = vadd.f32 0.0, %v1986
        %v1988 = vpop.f32.mrb[0].mxu0
        %1989 = vmatprep.mubr.f32.mxu0 0.0
        %1990 = vmatmul.mubr.f32.gmra.mrb[0].mxu0 %v1771
        %v1991 = vpop.f32.mrb[0].mxu0
        %v1992 = vadd.f32 0.0, %v1991
        %v1993 = vpop.f32.mrb[0].mxu0
        %1994 = vmatprep.mubr.f32.mxu0 0.0
        %1995 = vmatmul.mubr.f32.gmra.mrb[0].mxu0 %v1773
        %v1996 = vpop.f32.mrb[0].mxu0
        %v1997 = vadd.f32 0.0, %v1996
        %v1998 = vpop.f32.mrb[0].mxu0
        %1999 = vdwg.mxu0
        %v2000 = vadd.f32 %v1730, %v1842
        %v2001 = vadd.f32 %v1731, %v1847
        %v2002 = vadd.f32 %v1732, %v1852
        %v2003 = vadd.f32 %v1733, %v1857
        %v2004 = vadd.f32 %v1734, %v1862
        %v2005 = vadd.f32 %v1735, %v1867
        %v2006 = vadd.f32 %v1736, %v1872
        %v2007 = vadd.f32 %v1737, %v1877
        %v2008 = vadd.f32 %v1738, %v1882
        %v2009 = vadd.f32 %v1739, %v1887
        %v2010 = vadd.f32 %v1740, %v1892
        %v2011 = vadd.f32 %v1741, %v1897
        %v2012 = vadd.f32 %v1742, %v1902
        %v2013 = vadd.f32 %v1743, %v1907
        %v2014 = vadd.f32 %v1744, %v1912
        %v2015 = vadd.f32 %v1745, %v1917
        %v2016 = vadd.f32 %v1746, %v1922
        %v2017 = vadd.f32 %v1747, %v1927
        %v2018 = vadd.f32 %v1748, %v1932
        %v2019 = vadd.f32 %v1749, %v1937
        %v2020 = vadd.f32 %v1750, %v1942
        %v2021 = vadd.f32 %v1751, %v1947
        %v2022 = vadd.f32 %v1752, %v1952
        %v2023 = vadd.f32 %v1753, %v1957
        %v2024 = vadd.f32 %v1754, %v1962
        %v2025 = vadd.f32 %v1755, %v1967
        %v2026 = vadd.f32 %v1756, %v1972
        %v2027 = vadd.f32 %v1757, %v1977
        %v2028 = vadd.f32 %v1758, %v1982
        %v2029 = vadd.f32 %v1759, %v1987
        %v2030 = vadd.f32 %v1760, %v1992
        %v2031 = vadd.f32 %v1761, %v1997
        %v2032 = vrot.slane %v373, 2
        %v2033 = vrot.slane %v374, 2
        %v2034 = vsel %vm1091, %v2032, %v2033
        %v2035 = vrot.slane %v375, 2
        %v2036 = vsel %vm1091, %v2033, %v2035
        %s2037 = scalar_lea.vmem [#allocation6], 80
        %v2038 = vld [vmem:[%s2037] sm:$0xff]
        %v2039 = vld [vmem:[%s2037 + $0x8] sm:$0xff]
        %v2040 = vsel %vm204, %v2034, 0
        %v2042 = vsel %vm204, %v2036, 0
        %2044 = vmatprep.subr.mxu0 0.0
        %2045 = vmatpush1.msra.mxu0 %v2038
        %2046 = vmatprep.subr.mxu0 0.0
        %2047 = vmatpush1.msra.mxu0 %v2039
        %2048 = vmatprep.subr.mxu0 0.0
        %2049 = vmatpush1.msra.mxu0 0.0
        %2050 = vmatprep.subr.mxu0 0.0
        %2051 = vmatpush1.msra.mxu0 0.0
        %2052 = vmatprep.subr.mxu0 0.0
        %2053 = vmatpush1.msra.mxu0 0.0
        %2054 = vmatprep.subr.mxu0 0.0
        %2055 = vmatpush1.msra.mxu0 0.0
        %2056 = vmatprep.subr.mxu0 0.0
        %2057 = vmatpush1.msra.mxu0 0.0
        %2058 = vmatprep.subr.mxu0 0.0
        %2059 = vmatpush1.msra.mxu0 0.0
        %2060 = vmatprep.subr.mxu0 0.0
        %2061 = vmatpush1.msra.mxu0 0.0
        %2062 = vmatprep.subr.mxu0 0.0
        %2063 = vmatpush1.msra.mxu0 0.0
        %2064 = vmatprep.subr.mxu0 0.0
        %2065 = vmatpush1.msra.mxu0 0.0
        %2066 = vmatprep.subr.mxu0 0.0
        %2067 = vmatpush1.msra.mxu0 0.0
        %2068 = vmatprep.subr.mxu0 0.0
        %2069 = vmatpush1.msra.mxu0 0.0
        %2070 = vmatprep.subr.mxu0 0.0
        %2071 = vmatpush1.msra.mxu0 0.0
        %2072 = vmatprep.subr.mxu0 0.0
        %2073 = vmatpush1.msra.mxu0 0.0
        %2074 = vmatprep.subr.mxu0 0.0
        %2075 = vmatpush1.msra.mxu0 0.0
        %2076 = vmatprep.subr.mxu0 0.0
        %2077 = vmatpush1.msra.mxu0 0.0
        %2078 = vmatprep.subr.mxu0 0.0
        %2079 = vmatpush1.msra.mxu0 0.0
        %2080 = vmatprep.subr.mxu0 0.0
        %2081 = vmatpush1.msra.mxu0 0.0
        %2082 = vmatprep.subr.mxu0 0.0
        %2083 = vmatpush1.msra.mxu0 0.0
        %2084 = vmatprep.subr.mxu0 0.0
        %2085 = vmatpush1.msra.mxu0 0.0
        %2086 = vmatprep.subr.mxu0 0.0
        %2087 = vmatpush1.msra.mxu0 0.0
        %2088 = vmatprep.subr.mxu0 0.0
        %2089 = vmatpush1.msra.mxu0 0.0
        %2090 = vmatprep.subr.mxu0 0.0
        %2091 = vmatpush1.msra.mxu0 0.0
        %2092 = vmatprep.subr.mxu0 0.0
        %2093 = vmatpush1.msra.mxu0 0.0
        %2094 = vmatprep.subr.mxu0 0.0
        %2095 = vmatpush1.msra.mxu0 0.0
        %2096 = vmatprep.subr.mxu0 0.0
        %2097 = vmatpush1.msra.mxu0 0.0
        %2098 = vmatprep.subr.mxu0 0.0
        %2099 = vmatpush1.msra.mxu0 0.0
        %2100 = vmatprep.subr.mxu0 0.0
        %2101 = vmatpush1.msra.mxu0 0.0
        %2102 = vmatprep.subr.mxu0 0.0
        %2103 = vmatpush1.msra.mxu0 0.0
        %2104 = vmatprep.subr.mxu0 0.0
        %2105 = vmatpush1.msra.mxu0 0.0
        %2106 = vmatprep.subr.mxu0 0.0
        %2107 = vmatpush1.msra.mxu0 0.0
        %2108 = vmatprep.mubr.f32.mxu0 0.0
        %2109 = vmatmul.mubr.f32.gmra.mrb[0].mxu0 %v1179
        %v2110 = vpop.f32.mrb[0].mxu0
        %v2111 = vadd.f32 0.0, %v2110
        %v2112 = vpop.f32.mrb[0].mxu0
        %2113 = vmatprep.mubr.f32.mxu0 0.0
        %2114 = vmatmul.mubr.f32.gmra.mrb[0].mxu0 %v1181
        %v2115 = vpop.f32.mrb[0].mxu0
        %v2116 = vadd.f32 0.0, %v2115
        %v2117 = vpop.f32.mrb[0].mxu0
        %2118 = vmatprep.mubr.f32.mxu0 0.0
        %2119 = vmatmul.mubr.f32.gmra.mrb[0].mxu0 %v1183
        %v2120 = vpop.f32.mrb[0].mxu0
        %v2121 = vadd.f32 0.0, %v2120
        %v2122 = vpop.f32.mrb[0].mxu0
        %2123 = vmatprep.mubr.f32.mxu0 0.0
        %2124 = vmatmul.mubr.f32.gmra.mrb[0].mxu0 %v1185
        %v2125 = vpop.f32.mrb[0].mxu0
        %v2126 = vadd.f32 0.0, %v2125
        %v2127 = vpop.f32.mrb[0].mxu0
        %2128 = vmatprep.mubr.f32.mxu0 0.0
        %2129 = vmatmul.mubr.f32.gmra.mrb[0].mxu0 %v1187
        %v2130 = vpop.f32.mrb[0].mxu0
        %v2131 = vadd.f32 0.0, %v2130
        %v2132 = vpop.f32.mrb[0].mxu0
        %2133 = vmatprep.mubr.f32.mxu0 0.0
        %2134 = vmatmul.mubr.f32.gmra.mrb[0].mxu0 %v1189
        %v2135 = vpop.f32.mrb[0].mxu0
        %v2136 = vadd.f32 0.0, %v2135
        %v2137 = vpop.f32.mrb[0].mxu0
        %2138 = vmatprep.mubr.f32.mxu0 0.0
        %2139 = vmatmul.mubr.f32.gmra.mrb[0].mxu0 %v1191
        %v2140 = vpop.f32.mrb[0].mxu0
        %v2141 = vadd.f32 0.0, %v2140
        %v2142 = vpop.f32.mrb[0].mxu0
        %2143 = vmatprep.mubr.f32.mxu0 0.0
        %2144 = vmatmul.mubr.f32.gmra.mrb[0].mxu0 %v1193
        %v2145 = vpop.f32.mrb[0].mxu0
        %v2146 = vadd.f32 0.0, %v2145
        %v2147 = vpop.f32.mrb[0].mxu0
        %2148 = vmatprep.mubr.f32.mxu0 0.0
        %2149 = vmatmul.mubr.f32.gmra.mrb[0].mxu0 %v1195
        %v2150 = vpop.f32.mrb[0].mxu0
        %v2151 = vadd.f32 0.0, %v2150
        %v2152 = vpop.f32.mrb[0].mxu0
        %2153 = vmatprep.mubr.f32.mxu0 0.0
        %2154 = vmatmul.mubr.f32.gmra.mrb[0].mxu0 %v1197
        %v2155 = vpop.f32.mrb[0].mxu0
        %v2156 = vadd.f32 0.0, %v2155
        %v2157 = vpop.f32.mrb[0].mxu0
        %2158 = vmatprep.mubr.f32.mxu0 0.0
        %2159 = vmatmul.mubr.f32.gmra.mrb[0].mxu0 %v1199
        %v2160 = vpop.f32.mrb[0].mxu0
        %v2161 = vadd.f32 0.0, %v2160
        %v2162 = vpop.f32.mrb[0].mxu0
        %2163 = vmatprep.mubr.f32.mxu0 0.0
        %2164 = vmatmul.mubr.f32.gmra.mrb[0].mxu0 %v1201
        %v2165 = vpop.f32.mrb[0].mxu0
        %v2166 = vadd.f32 0.0, %v2165
        %v2167 = vpop.f32.mrb[0].mxu0
        %2168 = vmatprep.mubr.f32.mxu0 0.0
        %2169 = vmatmul.mubr.f32.gmra.mrb[0].mxu0 %v1203
        %v2170 = vpop.f32.mrb[0].mxu0
        %v2171 = vadd.f32 0.0, %v2170
        %v2172 = vpop.f32.mrb[0].mxu0
        %2173 = vmatprep.mubr.f32.mxu0 0.0
        %2174 = vmatmul.mubr.f32.gmra.mrb[0].mxu0 %v1205
        %v2175 = vpop.f32.mrb[0].mxu0
        %v2176 = vadd.f32 0.0, %v2175
        %v2177 = vpop.f32.mrb[0].mxu0
        %2178 = vmatprep.mubr.f32.mxu0 0.0
        %2179 = vmatmul.mubr.f32.gmra.mrb[0].mxu0 %v1207
        %v2180 = vpop.f32.mrb[0].mxu0
        %v2181 = vadd.f32 0.0, %v2180
        %v2182 = vpop.f32.mrb[0].mxu0
        %2183 = vmatprep.mubr.f32.mxu0 0.0
        %2184 = vmatmul.mubr.f32.gmra.mrb[0].mxu0 %v1209
        %v2185 = vpop.f32.mrb[0].mxu0
        %v2186 = vadd.f32 0.0, %v2185
        %v2187 = vpop.f32.mrb[0].mxu0
        %2188 = vmatprep.mubr.f32.mxu0 0.0
        %2189 = vmatmul.mubr.f32.gmra.mrb[0].mxu0 %v1211
        %v2190 = vpop.f32.mrb[0].mxu0
        %v2191 = vadd.f32 0.0, %v2190
        %v2192 = vpop.f32.mrb[0].mxu0
        %2193 = vmatprep.mubr.f32.mxu0 0.0
        %2194 = vmatmul.mubr.f32.gmra.mrb[0].mxu0 %v1213
        %v2195 = vpop.f32.mrb[0].mxu0
        %v2196 = vadd.f32 0.0, %v2195
        %v2197 = vpop.f32.mrb[0].mxu0
        %2198 = vmatprep.mubr.f32.mxu0 0.0
        %2199 = vmatmul.mubr.f32.gmra.mrb[0].mxu0 %v1215
        %v2200 = vpop.f32.mrb[0].mxu0
        %v2201 = vadd.f32 0.0, %v2200
        %v2202 = vpop.f32.mrb[0].mxu0
        %2203 = vmatprep.mubr.f32.mxu0 0.0
        %2204 = vmatmul.mubr.f32.gmra.mrb[0].mxu0 %v1217
        %v2205 = vpop.f32.mrb[0].mxu0
        %v2206 = vadd.f32 0.0, %v2205
        %v2207 = vpop.f32.mrb[0].mxu0
        %2208 = vmatprep.mubr.f32.mxu0 0.0
        %2209 = vmatmul.mubr.f32.gmra.mrb[0].mxu0 %v1219
        %v2210 = vpop.f32.mrb[0].mxu0
        %v2211 = vadd.f32 0.0, %v2210
        %v2212 = vpop.f32.mrb[0].mxu0
        %2213 = vmatprep.mubr.f32.mxu0 0.0
        %2214 = vmatmul.mubr.f32.gmra.mrb[0].mxu0 %v1221
        %v2215 = vpop.f32.mrb[0].mxu0
        %v2216 = vadd.f32 0.0, %v2215
        %v2217 = vpop.f32.mrb[0].mxu0
        %2218 = vmatprep.mubr.f32.mxu0 0.0
        %2219 = vmatmul.mubr.f32.gmra.mrb[0].mxu0 %v1223
        %v2220 = vpop.f32.mrb[0].mxu0
        %v2221 = vadd.f32 0.0, %v2220
        %v2222 = vpop.f32.mrb[0].mxu0
        %2223 = vmatprep.mubr.f32.mxu0 0.0
        %2224 = vmatmul.mubr.f32.gmra.mrb[0].mxu0 %v1225
        %v2225 = vpop.f32.mrb[0].mxu0
        %v2226 = vadd.f32 0.0, %v2225
        %v2227 = vpop.f32.mrb[0].mxu0
        %2228 = vmatprep.mubr.f32.mxu0 0.0
        %2229 = vmatmul.mubr.f32.gmra.mrb[0].mxu0 %v1227
        %v2230 = vpop.f32.mrb[0].mxu0
        %v2231 = vadd.f32 0.0, %v2230
        %v2232 = vpop.f32.mrb[0].mxu0
        %2233 = vmatprep.mubr.f32.mxu0 0.0
        %2234 = vmatmul.mubr.f32.gmra.mrb[0].mxu0 %v1229
        %v2235 = vpop.f32.mrb[0].mxu0
        %v2236 = vadd.f32 0.0, %v2235
        %v2237 = vpop.f32.mrb[0].mxu0
        %2238 = vmatprep.mubr.f32.mxu0 0.0
        %2239 = vmatmul.mubr.f32.gmra.mrb[0].mxu0 %v1231
        %v2240 = vpop.f32.mrb[0].mxu0
        %v2241 = vadd.f32 0.0, %v2240
        %v2242 = vpop.f32.mrb[0].mxu0
        %2243 = vmatprep.mubr.f32.mxu0 0.0
        %2244 = vmatmul.mubr.f32.gmra.mrb[0].mxu0 %v1233
        %v2245 = vpop.f32.mrb[0].mxu0
        %v2246 = vadd.f32 0.0, %v2245
        %v2247 = vpop.f32.mrb[0].mxu0
        %2248 = vmatprep.mubr.f32.mxu0 0.0
        %2249 = vmatmul.mubr.f32.gmra.mrb[0].mxu0 %v1235
        %v2250 = vpop.f32.mrb[0].mxu0
        %v2251 = vadd.f32 0.0, %v2250
        %v2252 = vpop.f32.mrb[0].mxu0
        %2253 = vmatprep.mubr.f32.mxu0 0.0
        %2254 = vmatmul.mubr.f32.gmra.mrb[0].mxu0 %v1237
        %v2255 = vpop.f32.mrb[0].mxu0
        %v2256 = vadd.f32 0.0, %v2255
        %v2257 = vpop.f32.mrb[0].mxu0
        %2258 = vmatprep.mubr.f32.mxu0 0.0
        %2259 = vmatmul.mubr.f32.gmra.mrb[0].mxu0 %v2040
        %v2260 = vpop.f32.mrb[0].mxu0
        %v2261 = vadd.f32 0.0, %v2260
        %v2262 = vpop.f32.mrb[0].mxu0
        %2263 = vmatprep.mubr.f32.mxu0 0.0
        %2264 = vmatmul.mubr.f32.gmra.mrb[0].mxu0 %v2042
        %v2265 = vpop.f32.mrb[0].mxu0
        %v2266 = vadd.f32 0.0, %v2265
        %v2267 = vpop.f32.mrb[0].mxu0
        %2268 = vdwg.mxu0
        %v2269 = vadd.f32 %v2000, %v2111
        %v2270 = vadd.f32 %v2001, %v2116
        %v2271 = vadd.f32 %v2002, %v2121
        %v2272 = vadd.f32 %v2003, %v2126
        %v2273 = vadd.f32 %v2004, %v2131
        %v2274 = vadd.f32 %v2005, %v2136
        %v2275 = vadd.f32 %v2006, %v2141
        %v2276 = vadd.f32 %v2007, %v2146
        %v2277 = vadd.f32 %v2008, %v2151
        %v2278 = vadd.f32 %v2009, %v2156
        %v2279 = vadd.f32 %v2010, %v2161
        %v2280 = vadd.f32 %v2011, %v2166
        %v2281 = vadd.f32 %v2012, %v2171
        %v2282 = vadd.f32 %v2013, %v2176
        %v2283 = vadd.f32 %v2014, %v2181
        %v2284 = vadd.f32 %v2015, %v2186
        %v2285 = vadd.f32 %v2016, %v2191
        %v2286 = vadd.f32 %v2017, %v2196
        %v2287 = vadd.f32 %v2018, %v2201
        %v2288 = vadd.f32 %v2019, %v2206
        %v2289 = vadd.f32 %v2020, %v2211
        %v2290 = vadd.f32 %v2021, %v2216
        %v2291 = vadd.f32 %v2022, %v2221
        %v2292 = vadd.f32 %v2023, %v2226
        %v2293 = vadd.f32 %v2024, %v2231
        %v2294 = vadd.f32 %v2025, %v2236
        %v2295 = vadd.f32 %v2026, %v2241
        %v2296 = vadd.f32 %v2027, %v2246
        %v2297 = vadd.f32 %v2028, %v2251
        %v2298 = vadd.f32 %v2029, %v2256
        %v2299 = vadd.f32 %v2030, %v2261
        %v2300 = vadd.f32 %v2031, %v2266
        %s2301 = scalar_lea.vmem [#allocation6], 96
        %v2302 = vld [vmem:[%s2301] sm:$0xff]
        %v2303 = vld [vmem:[%s2301 + $0x8] sm:$0xff]
        %v2305 = vsel %vm204, %v376, 0
        %v2308 = vsel %vm204, %v377, 0
        %2310 = vmatprep.subr.mxu0 0.0
        %2311 = vmatpush1.msra.mxu0 %v2302
        %2312 = vmatprep.subr.mxu0 0.0
        %2313 = vmatpush1.msra.mxu0 %v2303
        %2314 = vmatprep.subr.mxu0 0.0
        %2315 = vmatpush1.msra.mxu0 0.0
        %2316 = vmatprep.subr.mxu0 0.0
        %2317 = vmatpush1.msra.mxu0 0.0
        %2318 = vmatprep.subr.mxu0 0.0
        %2319 = vmatpush1.msra.mxu0 0.0
        %2320 = vmatprep.subr.mxu0 0.0
        %2321 = vmatpush1.msra.mxu0 0.0
        %2322 = vmatprep.subr.mxu0 0.0
        %2323 = vmatpush1.msra.mxu0 0.0
        %2324 = vmatprep.subr.mxu0 0.0
        %2325 = vmatpush1.msra.mxu0 0.0
        %2326 = vmatprep.subr.mxu0 0.0
        %2327 = vmatpush1.msra.mxu0 0.0
        %2328 = vmatprep.subr.mxu0 0.0
        %2329 = vmatpush1.msra.mxu0 0.0
        %2330 = vmatprep.subr.mxu0 0.0
        %2331 = vmatpush1.msra.mxu0 0.0
        %2332 = vmatprep.subr.mxu0 0.0
        %2333 = vmatpush1.msra.mxu0 0.0
        %2334 = vmatprep.subr.mxu0 0.0
        %2335 = vmatpush1.msra.mxu0 0.0
        %2336 = vmatprep.subr.mxu0 0.0
        %2337 = vmatpush1.msra.mxu0 0.0
        %2338 = vmatprep.subr.mxu0 0.0
        %2339 = vmatpush1.msra.mxu0 0.0
        %2340 = vmatprep.subr.mxu0 0.0
        %2341 = vmatpush1.msra.mxu0 0.0
        %2342 = vmatprep.subr.mxu0 0.0
        %2343 = vmatpush1.msra.mxu0 0.0
        %2344 = vmatprep.subr.mxu0 0.0
        %2345 = vmatpush1.msra.mxu0 0.0
        %2346 = vmatprep.subr.mxu0 0.0
        %2347 = vmatpush1.msra.mxu0 0.0
        %2348 = vmatprep.subr.mxu0 0.0
        %2349 = vmatpush1.msra.mxu0 0.0
        %2350 = vmatprep.subr.mxu0 0.0
        %2351 = vmatpush1.msra.mxu0 0.0
        %2352 = vmatprep.subr.mxu0 0.0
        %2353 = vmatpush1.msra.mxu0 0.0
        %2354 = vmatprep.subr.mxu0 0.0
        %2355 = vmatpush1.msra.mxu0 0.0
        %2356 = vmatprep.subr.mxu0 0.0
        %2357 = vmatpush1.msra.mxu0 0.0
        %2358 = vmatprep.subr.mxu0 0.0
        %2359 = vmatpush1.msra.mxu0 0.0
        %2360 = vmatprep.subr.mxu0 0.0
        %2361 = vmatpush1.msra.mxu0 0.0
        %2362 = vmatprep.subr.mxu0 0.0
        %2363 = vmatpush1.msra.mxu0 0.0
        %2364 = vmatprep.subr.mxu0 0.0
        %2365 = vmatpush1.msra.mxu0 0.0
        %2366 = vmatprep.subr.mxu0 0.0
        %2367 = vmatpush1.msra.mxu0 0.0
        %2368 = vmatprep.subr.mxu0 0.0
        %2369 = vmatpush1.msra.mxu0 0.0
        %2370 = vmatprep.subr.mxu0 0.0
        %2371 = vmatpush1.msra.mxu0 0.0
        %2372 = vmatprep.subr.mxu0 0.0
        %2373 = vmatpush1.msra.mxu0 0.0
        %2374 = vmatprep.mubr.f32.mxu0 0.0
        %2375 = vmatmul.mubr.f32.gmra.mrb[0].mxu0 %v810
        %v2376 = vpop.f32.mrb[0].mxu0
        %v2377 = vadd.f32 0.0, %v2376
        %v2378 = vpop.f32.mrb[0].mxu0
        %2379 = vmatprep.mubr.f32.mxu0 0.0
        %2380 = vmatmul.mubr.f32.gmra.mrb[0].mxu0 %v812
        %v2381 = vpop.f32.mrb[0].mxu0
        %v2382 = vadd.f32 0.0, %v2381
        %v2383 = vpop.f32.mrb[0].mxu0
        %2384 = vmatprep.mubr.f32.mxu0 0.0
        %2385 = vmatmul.mubr.f32.gmra.mrb[0].mxu0 %v814
        %v2386 = vpop.f32.mrb[0].mxu0
        %v2387 = vadd.f32 0.0, %v2386
        %v2388 = vpop.f32.mrb[0].mxu0
        %2389 = vmatprep.mubr.f32.mxu0 0.0
        %2390 = vmatmul.mubr.f32.gmra.mrb[0].mxu0 %v816
        %v2391 = vpop.f32.mrb[0].mxu0
        %v2392 = vadd.f32 0.0, %v2391
        %v2393 = vpop.f32.mrb[0].mxu0
        %2394 = vmatprep.mubr.f32.mxu0 0.0
        %2395 = vmatmul.mubr.f32.gmra.mrb[0].mxu0 %v818
        %v2396 = vpop.f32.mrb[0].mxu0
        %v2397 = vadd.f32 0.0, %v2396
        %v2398 = vpop.f32.mrb[0].mxu0
        %2399 = vmatprep.mubr.f32.mxu0 0.0
        %2400 = vmatmul.mubr.f32.gmra.mrb[0].mxu0 %v820
        %v2401 = vpop.f32.mrb[0].mxu0
        %v2402 = vadd.f32 0.0, %v2401
        %v2403 = vpop.f32.mrb[0].mxu0
        %2404 = vmatprep.mubr.f32.mxu0 0.0
        %2405 = vmatmul.mubr.f32.gmra.mrb[0].mxu0 %v822
        %v2406 = vpop.f32.mrb[0].mxu0
        %v2407 = vadd.f32 0.0, %v2406
        %v2408 = vpop.f32.mrb[0].mxu0
        %2409 = vmatprep.mubr.f32.mxu0 0.0
        %2410 = vmatmul.mubr.f32.gmra.mrb[0].mxu0 %v824
        %v2411 = vpop.f32.mrb[0].mxu0
        %v2412 = vadd.f32 0.0, %v2411
        %v2413 = vpop.f32.mrb[0].mxu0
        %2414 = vmatprep.mubr.f32.mxu0 0.0
        %2415 = vmatmul.mubr.f32.gmra.mrb[0].mxu0 %v826
        %v2416 = vpop.f32.mrb[0].mxu0
        %v2417 = vadd.f32 0.0, %v2416
        %v2418 = vpop.f32.mrb[0].mxu0
        %2419 = vmatprep.mubr.f32.mxu0 0.0
        %2420 = vmatmul.mubr.f32.gmra.mrb[0].mxu0 %v828
        %v2421 = vpop.f32.mrb[0].mxu0
        %v2422 = vadd.f32 0.0, %v2421
        %v2423 = vpop.f32.mrb[0].mxu0
        %2424 = vmatprep.mubr.f32.mxu0 0.0
        %2425 = vmatmul.mubr.f32.gmra.mrb[0].mxu0 %v830
        %v2426 = vpop.f32.mrb[0].mxu0
        %v2427 = vadd.f32 0.0, %v2426
        %v2428 = vpop.f32.mrb[0].mxu0
        %2429 = vmatprep.mubr.f32.mxu0 0.0
        %2430 = vmatmul.mubr.f32.gmra.mrb[0].mxu0 %v832
        %v2431 = vpop.f32.mrb[0].mxu0
        %v2432 = vadd.f32 0.0, %v2431
        %v2433 = vpop.f32.mrb[0].mxu0
        %2434 = vmatprep.mubr.f32.mxu0 0.0
        %2435 = vmatmul.mubr.f32.gmra.mrb[0].mxu0 %v834
        %v2436 = vpop.f32.mrb[0].mxu0
        %v2437 = vadd.f32 0.0, %v2436
        %v2438 = vpop.f32.mrb[0].mxu0
        %2439 = vmatprep.mubr.f32.mxu0 0.0
        %2440 = vmatmul.mubr.f32.gmra.mrb[0].mxu0 %v836
        %v2441 = vpop.f32.mrb[0].mxu0
        %v2442 = vadd.f32 0.0, %v2441
        %v2443 = vpop.f32.mrb[0].mxu0
        %2444 = vmatprep.mubr.f32.mxu0 0.0
        %2445 = vmatmul.mubr.f32.gmra.mrb[0].mxu0 %v838
        %v2446 = vpop.f32.mrb[0].mxu0
        %v2447 = vadd.f32 0.0, %v2446
        %v2448 = vpop.f32.mrb[0].mxu0
        %2449 = vmatprep.mubr.f32.mxu0 0.0
        %2450 = vmatmul.mubr.f32.gmra.mrb[0].mxu0 %v840
        %v2451 = vpop.f32.mrb[0].mxu0
        %v2452 = vadd.f32 0.0, %v2451
        %v2453 = vpop.f32.mrb[0].mxu0
        %2454 = vmatprep.mubr.f32.mxu0 0.0
        %2455 = vmatmul.mubr.f32.gmra.mrb[0].mxu0 %v842
        %v2456 = vpop.f32.mrb[0].mxu0
        %v2457 = vadd.f32 0.0, %v2456
        %v2458 = vpop.f32.mrb[0].mxu0
        %2459 = vmatprep.mubr.f32.mxu0 0.0
        %2460 = vmatmul.mubr.f32.gmra.mrb[0].mxu0 %v844
        %v2461 = vpop.f32.mrb[0].mxu0
        %v2462 = vadd.f32 0.0, %v2461
        %v2463 = vpop.f32.mrb[0].mxu0
        %2464 = vmatprep.mubr.f32.mxu0 0.0
        %2465 = vmatmul.mubr.f32.gmra.mrb[0].mxu0 %v846
        %v2466 = vpop.f32.mrb[0].mxu0
        %v2467 = vadd.f32 0.0, %v2466
        %v2468 = vpop.f32.mrb[0].mxu0
        %2469 = vmatprep.mubr.f32.mxu0 0.0
        %2470 = vmatmul.mubr.f32.gmra.mrb[0].mxu0 %v848
        %v2471 = vpop.f32.mrb[0].mxu0
        %v2472 = vadd.f32 0.0, %v2471
        %v2473 = vpop.f32.mrb[0].mxu0
        %2474 = vmatprep.mubr.f32.mxu0 0.0
        %2475 = vmatmul.mubr.f32.gmra.mrb[0].mxu0 %v850
        %v2476 = vpop.f32.mrb[0].mxu0
        %v2477 = vadd.f32 0.0, %v2476
        %v2478 = vpop.f32.mrb[0].mxu0
        %2479 = vmatprep.mubr.f32.mxu0 0.0
        %2480 = vmatmul.mubr.f32.gmra.mrb[0].mxu0 %v852
        %v2481 = vpop.f32.mrb[0].mxu0
        %v2482 = vadd.f32 0.0, %v2481
        %v2483 = vpop.f32.mrb[0].mxu0
        %2484 = vmatprep.mubr.f32.mxu0 0.0
        %2485 = vmatmul.mubr.f32.gmra.mrb[0].mxu0 %v854
        %v2486 = vpop.f32.mrb[0].mxu0
        %v2487 = vadd.f32 0.0, %v2486
        %v2488 = vpop.f32.mrb[0].mxu0
        %2489 = vmatprep.mubr.f32.mxu0 0.0
        %2490 = vmatmul.mubr.f32.gmra.mrb[0].mxu0 %v856
        %v2491 = vpop.f32.mrb[0].mxu0
        %v2492 = vadd.f32 0.0, %v2491
        %v2493 = vpop.f32.mrb[0].mxu0
        %2494 = vmatprep.mubr.f32.mxu0 0.0
        %2495 = vmatmul.mubr.f32.gmra.mrb[0].mxu0 %v858
        %v2496 = vpop.f32.mrb[0].mxu0
        %v2497 = vadd.f32 0.0, %v2496
        %v2498 = vpop.f32.mrb[0].mxu0
        %2499 = vmatprep.mubr.f32.mxu0 0.0
        %2500 = vmatmul.mubr.f32.gmra.mrb[0].mxu0 %v860
        %v2501 = vpop.f32.mrb[0].mxu0
        %v2502 = vadd.f32 0.0, %v2501
        %v2503 = vpop.f32.mrb[0].mxu0
        %2504 = vmatprep.mubr.f32.mxu0 0.0
        %2505 = vmatmul.mubr.f32.gmra.mrb[0].mxu0 %v862
        %v2506 = vpop.f32.mrb[0].mxu0
        %v2507 = vadd.f32 0.0, %v2506
        %v2508 = vpop.f32.mrb[0].mxu0
        %2509 = vmatprep.mubr.f32.mxu0 0.0
        %2510 = vmatmul.mubr.f32.gmra.mrb[0].mxu0 %v864
        %v2511 = vpop.f32.mrb[0].mxu0
        %v2512 = vadd.f32 0.0, %v2511
        %v2513 = vpop.f32.mrb[0].mxu0
        %2514 = vmatprep.mubr.f32.mxu0 0.0
        %2515 = vmatmul.mubr.f32.gmra.mrb[0].mxu0 %v1500
        %v2516 = vpop.f32.mrb[0].mxu0
        %v2517 = vadd.f32 0.0, %v2516
        %v2518 = vpop.f32.mrb[0].mxu0
        %2519 = vmatprep.mubr.f32.mxu0 0.0
        %2520 = vmatmul.mubr.f32.gmra.mrb[0].mxu0 %v1503
        %v2521 = vpop.f32.mrb[0].mxu0
        %v2522 = vadd.f32 0.0, %v2521
        %v2523 = vpop.f32.mrb[0].mxu0
        %2524 = vmatprep.mubr.f32.mxu0 0.0
        %2525 = vmatmul.mubr.f32.gmra.mrb[0].mxu0 %v2305
        %v2526 = vpop.f32.mrb[0].mxu0
        %v2527 = vadd.f32 0.0, %v2526
        %v2528 = vpop.f32.mrb[0].mxu0
        %2529 = vmatprep.mubr.f32.mxu0 0.0
        %2530 = vmatmul.mubr.f32.gmra.mrb[0].mxu0 %v2308
        %v2531 = vpop.f32.mrb[0].mxu0
        %v2532 = vadd.f32 0.0, %v2531
        %v2533 = vpop.f32.mrb[0].mxu0
        %2534 = vdwg.mxu0
        %v2535 = vadd.f32 %v2269, %v2377
        %v2536 = vadd.f32 %v2270, %v2382
        %v2537 = vadd.f32 %v2271, %v2387
        %v2538 = vadd.f32 %v2272, %v2392
        %v2539 = vadd.f32 %v2273, %v2397
        %v2540 = vadd.f32 %v2274, %v2402
        %v2541 = vadd.f32 %v2275, %v2407
        %v2542 = vadd.f32 %v2276, %v2412
        %v2543 = vadd.f32 %v2277, %v2417
        %v2544 = vadd.f32 %v2278, %v2422
        %v2545 = vadd.f32 %v2279, %v2427
        %v2546 = vadd.f32 %v2280, %v2432
        %v2547 = vadd.f32 %v2281, %v2437
        %v2548 = vadd.f32 %v2282, %v2442
        %v2549 = vadd.f32 %v2283, %v2447
        %v2550 = vadd.f32 %v2284, %v2452
        %v2551 = vadd.f32 %v2285, %v2457
        %v2552 = vadd.f32 %v2286, %v2462
        %v2553 = vadd.f32 %v2287, %v2467
        %v2554 = vadd.f32 %v2288, %v2472
        %v2555 = vadd.f32 %v2289, %v2477
        %v2556 = vadd.f32 %v2290, %v2482
        %v2557 = vadd.f32 %v2291, %v2487
        %v2558 = vadd.f32 %v2292, %v2492
        %v2559 = vadd.f32 %v2293, %v2497
        %v2560 = vadd.f32 %v2294, %v2502
        %v2561 = vadd.f32 %v2295, %v2507
        %v2562 = vadd.f32 %v2296, %v2512
        %v2563 = vadd.f32 %v2297, %v2517
        %v2564 = vadd.f32 %v2298, %v2522
        %v2565 = vadd.f32 %v2299, %v2527
        %v2566 = vadd.f32 %v2300, %v2532
        %v2568 = vrot.slane %v376, 1
        %v2569 = vrot.slane %v377, 1
        %v2570 = vsel %vm429, %v2568, %v2569
        %v2571 = vrot.slane %v378, 1
        %v2572 = vsel %vm429, %v2569, %v2571
        %s2573 = scalar_lea.vmem [#allocation6], 112
        %v2574 = vld [vmem:[%s2573] sm:$0xff]
        %v2575 = vld [vmem:[%s2573 + $0x8] sm:$0xff]
        %v2576 = vsel %vm204, %v2570, 0
        %v2578 = vsel %vm204, %v2572, 0
        %2580 = vmatprep.subr.mxu0 0.0
        %2581 = vmatpush1.msra.mxu0 %v2574
        %2582 = vmatprep.subr.mxu0 0.0
        %2583 = vmatpush1.msra.mxu0 %v2575
        %2584 = vmatprep.subr.mxu0 0.0
        %2585 = vmatpush1.msra.mxu0 0.0
        %2586 = vmatprep.subr.mxu0 0.0
        %2587 = vmatpush1.msra.mxu0 0.0
        %2588 = vmatprep.subr.mxu0 0.0
        %2589 = vmatpush1.msra.mxu0 0.0
        %2590 = vmatprep.subr.mxu0 0.0
        %2591 = vmatpush1.msra.mxu0 0.0
        %2592 = vmatprep.subr.mxu0 0.0
        %2593 = vmatpush1.msra.mxu0 0.0
        %2594 = vmatprep.subr.mxu0 0.0
        %2595 = vmatpush1.msra.mxu0 0.0
        %2596 = vmatprep.subr.mxu0 0.0
        %2597 = vmatpush1.msra.mxu0 0.0
        %2598 = vmatprep.subr.mxu0 0.0
        %2599 = vmatpush1.msra.mxu0 0.0
        %2600 = vmatprep.subr.mxu0 0.0
        %2601 = vmatpush1.msra.mxu0 0.0
        %2602 = vmatprep.subr.mxu0 0.0
        %2603 = vmatpush1.msra.mxu0 0.0
        %2604 = vmatprep.subr.mxu0 0.0
        %2605 = vmatpush1.msra.mxu0 0.0
        %2606 = vmatprep.subr.mxu0 0.0
        %2607 = vmatpush1.msra.mxu0 0.0
        %2608 = vmatprep.subr.mxu0 0.0
        %2609 = vmatpush1.msra.mxu0 0.0
        %2610 = vmatprep.subr.mxu0 0.0
        %2611 = vmatpush1.msra.mxu0 0.0
        %2612 = vmatprep.subr.mxu0 0.0
        %2613 = vmatpush1.msra.mxu0 0.0
        %2614 = vmatprep.subr.mxu0 0.0
        %2615 = vmatpush1.msra.mxu0 0.0
        %2616 = vmatprep.subr.mxu0 0.0
        %2617 = vmatpush1.msra.mxu0 0.0
        %2618 = vmatprep.subr.mxu0 0.0
        %2619 = vmatpush1.msra.mxu0 0.0
        %2620 = vmatprep.subr.mxu0 0.0
        %2621 = vmatpush1.msra.mxu0 0.0
        %2622 = vmatprep.subr.mxu0 0.0
        %2623 = vmatpush1.msra.mxu0 0.0
        %2624 = vmatprep.subr.mxu0 0.0
        %2625 = vmatpush1.msra.mxu0 0.0
        %2626 = vmatprep.subr.mxu0 0.0
        %2627 = vmatpush1.msra.mxu0 0.0
        %2628 = vmatprep.subr.mxu0 0.0
        %2629 = vmatpush1.msra.mxu0 0.0
        %2630 = vmatprep.subr.mxu0 0.0
        %2631 = vmatpush1.msra.mxu0 0.0
        %2632 = vmatprep.subr.mxu0 0.0
        %2633 = vmatpush1.msra.mxu0 0.0
        %2634 = vmatprep.subr.mxu0 0.0
        %2635 = vmatpush1.msra.mxu0 0.0
        %2636 = vmatprep.subr.mxu0 0.0
        %2637 = vmatpush1.msra.mxu0 0.0
        %2638 = vmatprep.subr.mxu0 0.0
        %2639 = vmatpush1.msra.mxu0 0.0
        %2640 = vmatprep.subr.mxu0 0.0
        %2641 = vmatpush1.msra.mxu0 0.0
        %2642 = vmatprep.subr.mxu0 0.0
        %2643 = vmatpush1.msra.mxu0 0.0
        %2644 = vmatprep.mubr.f32.mxu0 0.0
        %2645 = vmatmul.mubr.f32.gmra.mrb[0].mxu0 %v521
        %v2646 = vpop.f32.mrb[0].mxu0
        %v2647 = vadd.f32 0.0, %v2646
        %v2648 = vpop.f32.mrb[0].mxu0
        %2649 = vmatprep.mubr.f32.mxu0 0.0
        %2650 = vmatmul.mubr.f32.gmra.mrb[0].mxu0 %v523
        %v2651 = vpop.f32.mrb[0].mxu0
        %v2652 = vadd.f32 0.0, %v2651
        %v2653 = vpop.f32.mrb[0].mxu0
        %2654 = vmatprep.mubr.f32.mxu0 0.0
        %2655 = vmatmul.mubr.f32.gmra.mrb[0].mxu0 %v525
        %v2656 = vpop.f32.mrb[0].mxu0
        %v2657 = vadd.f32 0.0, %v2656
        %v2658 = vpop.f32.mrb[0].mxu0
        %2659 = vmatprep.mubr.f32.mxu0 0.0
        %2660 = vmatmul.mubr.f32.gmra.mrb[0].mxu0 %v527
        %v2661 = vpop.f32.mrb[0].mxu0
        %v2662 = vadd.f32 0.0, %v2661
        %v2663 = vpop.f32.mrb[0].mxu0
        %2664 = vmatprep.mubr.f32.mxu0 0.0
        %2665 = vmatmul.mubr.f32.gmra.mrb[0].mxu0 %v529
        %v2666 = vpop.f32.mrb[0].mxu0
        %v2667 = vadd.f32 0.0, %v2666
        %v2668 = vpop.f32.mrb[0].mxu0
        %2669 = vmatprep.mubr.f32.mxu0 0.0
        %2670 = vmatmul.mubr.f32.gmra.mrb[0].mxu0 %v531
        %v2671 = vpop.f32.mrb[0].mxu0
        %v2672 = vadd.f32 0.0, %v2671
        %v2673 = vpop.f32.mrb[0].mxu0
        %2674 = vmatprep.mubr.f32.mxu0 0.0
        %2675 = vmatmul.mubr.f32.gmra.mrb[0].mxu0 %v533
        %v2676 = vpop.f32.mrb[0].mxu0
        %v2677 = vadd.f32 0.0, %v2676
        %v2678 = vpop.f32.mrb[0].mxu0
        %2679 = vmatprep.mubr.f32.mxu0 0.0
        %2680 = vmatmul.mubr.f32.gmra.mrb[0].mxu0 %v535
        %v2681 = vpop.f32.mrb[0].mxu0
        %v2682 = vadd.f32 0.0, %v2681
        %v2683 = vpop.f32.mrb[0].mxu0
        %2684 = vmatprep.mubr.f32.mxu0 0.0
        %2685 = vmatmul.mubr.f32.gmra.mrb[0].mxu0 %v537
        %v2686 = vpop.f32.mrb[0].mxu0
        %v2687 = vadd.f32 0.0, %v2686
        %v2688 = vpop.f32.mrb[0].mxu0
        %2689 = vmatprep.mubr.f32.mxu0 0.0
        %2690 = vmatmul.mubr.f32.gmra.mrb[0].mxu0 %v539
        %v2691 = vpop.f32.mrb[0].mxu0
        %v2692 = vadd.f32 0.0, %v2691
        %v2693 = vpop.f32.mrb[0].mxu0
        %2694 = vmatprep.mubr.f32.mxu0 0.0
        %2695 = vmatmul.mubr.f32.gmra.mrb[0].mxu0 %v541
        %v2696 = vpop.f32.mrb[0].mxu0
        %v2697 = vadd.f32 0.0, %v2696
        %v2698 = vpop.f32.mrb[0].mxu0
        %2699 = vmatprep.mubr.f32.mxu0 0.0
        %2700 = vmatmul.mubr.f32.gmra.mrb[0].mxu0 %v543
        %v2701 = vpop.f32.mrb[0].mxu0
        %v2702 = vadd.f32 0.0, %v2701
        %v2703 = vpop.f32.mrb[0].mxu0
        %2704 = vmatprep.mubr.f32.mxu0 0.0
        %2705 = vmatmul.mubr.f32.gmra.mrb[0].mxu0 %v545
        %v2706 = vpop.f32.mrb[0].mxu0
        %v2707 = vadd.f32 0.0, %v2706
        %v2708 = vpop.f32.mrb[0].mxu0
        %2709 = vmatprep.mubr.f32.mxu0 0.0
        %2710 = vmatmul.mubr.f32.gmra.mrb[0].mxu0 %v547
        %v2711 = vpop.f32.mrb[0].mxu0
        %v2712 = vadd.f32 0.0, %v2711
        %v2713 = vpop.f32.mrb[0].mxu0
        %2714 = vmatprep.mubr.f32.mxu0 0.0
        %2715 = vmatmul.mubr.f32.gmra.mrb[0].mxu0 %v549
        %v2716 = vpop.f32.mrb[0].mxu0
        %v2717 = vadd.f32 0.0, %v2716
        %v2718 = vpop.f32.mrb[0].mxu0
        %2719 = vmatprep.mubr.f32.mxu0 0.0
        %2720 = vmatmul.mubr.f32.gmra.mrb[0].mxu0 %v551
        %v2721 = vpop.f32.mrb[0].mxu0
        %v2722 = vadd.f32 0.0, %v2721
        %v2723 = vpop.f32.mrb[0].mxu0
        %2724 = vmatprep.mubr.f32.mxu0 0.0
        %2725 = vmatmul.mubr.f32.gmra.mrb[0].mxu0 %v553
        %v2726 = vpop.f32.mrb[0].mxu0
        %v2727 = vadd.f32 0.0, %v2726
        %v2728 = vpop.f32.mrb[0].mxu0
        %2729 = vmatprep.mubr.f32.mxu0 0.0
        %2730 = vmatmul.mubr.f32.gmra.mrb[0].mxu0 %v555
        %v2731 = vpop.f32.mrb[0].mxu0
        %v2732 = vadd.f32 0.0, %v2731
        %v2733 = vpop.f32.mrb[0].mxu0
        %2734 = vmatprep.mubr.f32.mxu0 0.0
        %2735 = vmatmul.mubr.f32.gmra.mrb[0].mxu0 %v557
        %v2736 = vpop.f32.mrb[0].mxu0
        %v2737 = vadd.f32 0.0, %v2736
        %v2738 = vpop.f32.mrb[0].mxu0
        %2739 = vmatprep.mubr.f32.mxu0 0.0
        %2740 = vmatmul.mubr.f32.gmra.mrb[0].mxu0 %v559
        %v2741 = vpop.f32.mrb[0].mxu0
        %v2742 = vadd.f32 0.0, %v2741
        %v2743 = vpop.f32.mrb[0].mxu0
        %2744 = vmatprep.mubr.f32.mxu0 0.0
        %2745 = vmatmul.mubr.f32.gmra.mrb[0].mxu0 %v561
        %v2746 = vpop.f32.mrb[0].mxu0
        %v2747 = vadd.f32 0.0, %v2746
        %v2748 = vpop.f32.mrb[0].mxu0
        %2749 = vmatprep.mubr.f32.mxu0 0.0
        %2750 = vmatmul.mubr.f32.gmra.mrb[0].mxu0 %v563
        %v2751 = vpop.f32.mrb[0].mxu0
        %v2752 = vadd.f32 0.0, %v2751
        %v2753 = vpop.f32.mrb[0].mxu0
        %2754 = vmatprep.mubr.f32.mxu0 0.0
        %2755 = vmatmul.mubr.f32.gmra.mrb[0].mxu0 %v565
        %v2756 = vpop.f32.mrb[0].mxu0
        %v2757 = vadd.f32 0.0, %v2756
        %v2758 = vpop.f32.mrb[0].mxu0
        %2759 = vmatprep.mubr.f32.mxu0 0.0
        %2760 = vmatmul.mubr.f32.gmra.mrb[0].mxu0 %v567
        %v2761 = vpop.f32.mrb[0].mxu0
        %v2762 = vadd.f32 0.0, %v2761
        %v2763 = vpop.f32.mrb[0].mxu0
        %2764 = vmatprep.mubr.f32.mxu0 0.0
        %2765 = vmatmul.mubr.f32.gmra.mrb[0].mxu0 %v569
        %v2766 = vpop.f32.mrb[0].mxu0
        %v2767 = vadd.f32 0.0, %v2766
        %v2768 = vpop.f32.mrb[0].mxu0
        %2769 = vmatprep.mubr.f32.mxu0 0.0
        %2770 = vmatmul.mubr.f32.gmra.mrb[0].mxu0 %v571
        %v2771 = vpop.f32.mrb[0].mxu0
        %v2772 = vadd.f32 0.0, %v2771
        %v2773 = vpop.f32.mrb[0].mxu0
        %2774 = vmatprep.mubr.f32.mxu0 0.0
        %2775 = vmatmul.mubr.f32.gmra.mrb[0].mxu0 %v573
        %v2776 = vpop.f32.mrb[0].mxu0
        %v2777 = vadd.f32 0.0, %v2776
        %v2778 = vpop.f32.mrb[0].mxu0
        %2779 = vmatprep.mubr.f32.mxu0 0.0
        %2780 = vmatmul.mubr.f32.gmra.mrb[0].mxu0 %v575
        %v2781 = vpop.f32.mrb[0].mxu0
        %v2782 = vadd.f32 0.0, %v2781
        %v2783 = vpop.f32.mrb[0].mxu0
        %2784 = vmatprep.mubr.f32.mxu0 0.0
        %2785 = vmatmul.mubr.f32.gmra.mrb[0].mxu0 %v1771
        %v2786 = vpop.f32.mrb[0].mxu0
        %v2787 = vadd.f32 0.0, %v2786
        %v2788 = vpop.f32.mrb[0].mxu0
        %2789 = vmatprep.mubr.f32.mxu0 0.0
        %2790 = vmatmul.mubr.f32.gmra.mrb[0].mxu0 %v1773
        %v2791 = vpop.f32.mrb[0].mxu0
        %v2792 = vadd.f32 0.0, %v2791
        %v2793 = vpop.f32.mrb[0].mxu0
        %2794 = vmatprep.mubr.f32.mxu0 0.0
        %2795 = vmatmul.mubr.f32.gmra.mrb[0].mxu0 %v2576
        %v2796 = vpop.f32.mrb[0].mxu0
        %v2797 = vadd.f32 0.0, %v2796
        %v2798 = vpop.f32.mrb[0].mxu0
        %2799 = vmatprep.mubr.f32.mxu0 0.0
        %2800 = vmatmul.mubr.f32.gmra.mrb[0].mxu0 %v2578
        %v2801 = vpop.f32.mrb[0].mxu0
        %v2802 = vadd.f32 0.0, %v2801
        %v2803 = vpop.f32.mrb[0].mxu0
        %2804 = vdwg.mxu0
        %v2805 = vadd.f32 %v2535, %v2647
        %v2806 = vadd.f32 %v2536, %v2652
        %v2807 = vadd.f32 %v2537, %v2657
        %v2808 = vadd.f32 %v2538, %v2662
        %v2809 = vadd.f32 %v2539, %v2667
        %v2810 = vadd.f32 %v2540, %v2672
        %v2811 = vadd.f32 %v2541, %v2677
        %v2812 = vadd.f32 %v2542, %v2682
        %v2813 = vadd.f32 %v2543, %v2687
        %v2814 = vadd.f32 %v2544, %v2692
        %v2815 = vadd.f32 %v2545, %v2697
        %v2816 = vadd.f32 %v2546, %v2702
        %v2817 = vadd.f32 %v2547, %v2707
        %v2818 = vadd.f32 %v2548, %v2712
        %v2819 = vadd.f32 %v2549, %v2717
        %v2820 = vadd.f32 %v2550, %v2722
        %v2821 = vadd.f32 %v2551, %v2727
        %v2822 = vadd.f32 %v2552, %v2732
        %v2823 = vadd.f32 %v2553, %v2737
        %v2824 = vadd.f32 %v2554, %v2742
        %v2825 = vadd.f32 %v2555, %v2747
        %v2826 = vadd.f32 %v2556, %v2752
        %v2827 = vadd.f32 %v2557, %v2757
        %v2828 = vadd.f32 %v2558, %v2762
        %v2829 = vadd.f32 %v2559, %v2767
        %v2830 = vadd.f32 %v2560, %v2772
        %v2831 = vadd.f32 %v2561, %v2777
        %v2832 = vadd.f32 %v2562, %v2782
        %v2833 = vadd.f32 %v2563, %v2787
        %v2834 = vadd.f32 %v2564, %v2792
        %v2835 = vadd.f32 %v2565, %v2797
        %v2836 = vadd.f32 %v2566, %v2802
        %v2837 = vrot.slane %v376, 2
        %v2838 = vrot.slane %v377, 2
        %v2839 = vsel %vm1091, %v2837, %v2838
        %v2840 = vrot.slane %v378, 2
        %v2841 = vsel %vm1091, %v2838, %v2840
        %s2842 = scalar_lea.vmem [#allocation6], 128
        %v2843 = vld [vmem:[%s2842] sm:$0xff]
        %v2844 = vld [vmem:[%s2842 + $0x8] sm:$0xff]
        %v2845 = vsel %vm204, %v2839, 0
        %v2847 = vsel %vm204, %v2841, 0
        %2849 = vmatprep.subr.mxu0 0.0
        %2850 = vmatpush1.msra.mxu0 %v2843
        %2851 = vmatprep.subr.mxu0 0.0
        %2852 = vmatpush1.msra.mxu0 %v2844
        %2853 = vmatprep.subr.mxu0 0.0
        %2854 = vmatpush1.msra.mxu0 0.0
        %2855 = vmatprep.subr.mxu0 0.0
        %2856 = vmatpush1.msra.mxu0 0.0
        %2857 = vmatprep.subr.mxu0 0.0
        %2858 = vmatpush1.msra.mxu0 0.0
        %2859 = vmatprep.subr.mxu0 0.0
        %2860 = vmatpush1.msra.mxu0 0.0
        %2861 = vmatprep.subr.mxu0 0.0
        %2862 = vmatpush1.msra.mxu0 0.0
        %2863 = vmatprep.subr.mxu0 0.0
        %2864 = vmatpush1.msra.mxu0 0.0
        %2865 = vmatprep.subr.mxu0 0.0
        %2866 = vmatpush1.msra.mxu0 0.0
        %2867 = vmatprep.subr.mxu0 0.0
        %2868 = vmatpush1.msra.mxu0 0.0
        %2869 = vmatprep.subr.mxu0 0.0
        %2870 = vmatpush1.msra.mxu0 0.0
        %2871 = vmatprep.subr.mxu0 0.0
        %2872 = vmatpush1.msra.mxu0 0.0
        %2873 = vmatprep.subr.mxu0 0.0
        %2874 = vmatpush1.msra.mxu0 0.0
        %2875 = vmatprep.subr.mxu0 0.0
        %2876 = vmatpush1.msra.mxu0 0.0
        %2877 = vmatprep.subr.mxu0 0.0
        %2878 = vmatpush1.msra.mxu0 0.0
        %2879 = vmatprep.subr.mxu0 0.0
        %2880 = vmatpush1.msra.mxu0 0.0
        %2881 = vmatprep.subr.mxu0 0.0
        %2882 = vmatpush1.msra.mxu0 0.0
        %2883 = vmatprep.subr.mxu0 0.0
        %2884 = vmatpush1.msra.mxu0 0.0
        %2885 = vmatprep.subr.mxu0 0.0
        %2886 = vmatpush1.msra.mxu0 0.0
        %2887 = vmatprep.subr.mxu0 0.0
        %2888 = vmatpush1.msra.mxu0 0.0
        %2889 = vmatprep.subr.mxu0 0.0
        %2890 = vmatpush1.msra.mxu0 0.0
        %2891 = vmatprep.subr.mxu0 0.0
        %2892 = vmatpush1.msra.mxu0 0.0
        %2893 = vmatprep.subr.mxu0 0.0
        %2894 = vmatpush1.msra.mxu0 0.0
        %2895 = vmatprep.subr.mxu0 0.0
        %2896 = vmatpush1.msra.mxu0 0.0
        %2897 = vmatprep.subr.mxu0 0.0
        %2898 = vmatpush1.msra.mxu0 0.0
        %2899 = vmatprep.subr.mxu0 0.0
        %2900 = vmatpush1.msra.mxu0 0.0
        %2901 = vmatprep.subr.mxu0 0.0
        %2902 = vmatpush1.msra.mxu0 0.0
        %2903 = vmatprep.subr.mxu0 0.0
        %2904 = vmatpush1.msra.mxu0 0.0
        %2905 = vmatprep.subr.mxu0 0.0
        %2906 = vmatpush1.msra.mxu0 0.0
        %2907 = vmatprep.subr.mxu0 0.0
        %2908 = vmatpush1.msra.mxu0 0.0
        %2909 = vmatprep.subr.mxu0 0.0
        %2910 = vmatpush1.msra.mxu0 0.0
        %2911 = vmatprep.subr.mxu0 0.0
        %2912 = vmatpush1.msra.mxu0 0.0
        %2913 = vmatprep.mubr.f32.mxu0 0.0
        %2914 = vmatmul.mubr.f32.gmra.mrb[0].mxu0 %v1183
        %v2915 = vpop.f32.mrb[0].mxu0
        %v2916 = vadd.f32 0.0, %v2915
        %v2917 = vpop.f32.mrb[0].mxu0
        %2918 = vmatprep.mubr.f32.mxu0 0.0
        %2919 = vmatmul.mubr.f32.gmra.mrb[0].mxu0 %v1185
        %v2920 = vpop.f32.mrb[0].mxu0
        %v2921 = vadd.f32 0.0, %v2920
        %v2922 = vpop.f32.mrb[0].mxu0
        %2923 = vmatprep.mubr.f32.mxu0 0.0
        %2924 = vmatmul.mubr.f32.gmra.mrb[0].mxu0 %v1187
        %v2925 = vpop.f32.mrb[0].mxu0
        %v2926 = vadd.f32 0.0, %v2925
        %v2927 = vpop.f32.mrb[0].mxu0
        %2928 = vmatprep.mubr.f32.mxu0 0.0
        %2929 = vmatmul.mubr.f32.gmra.mrb[0].mxu0 %v1189
        %v2930 = vpop.f32.mrb[0].mxu0
        %v2931 = vadd.f32 0.0, %v2930
        %v2932 = vpop.f32.mrb[0].mxu0
        %2933 = vmatprep.mubr.f32.mxu0 0.0
        %2934 = vmatmul.mubr.f32.gmra.mrb[0].mxu0 %v1191
        %v2935 = vpop.f32.mrb[0].mxu0
        %v2936 = vadd.f32 0.0, %v2935
        %v2937 = vpop.f32.mrb[0].mxu0
        %2938 = vmatprep.mubr.f32.mxu0 0.0
        %2939 = vmatmul.mubr.f32.gmra.mrb[0].mxu0 %v1193
        %v2940 = vpop.f32.mrb[0].mxu0
        %v2941 = vadd.f32 0.0, %v2940
        %v2942 = vpop.f32.mrb[0].mxu0
        %2943 = vmatprep.mubr.f32.mxu0 0.0
        %2944 = vmatmul.mubr.f32.gmra.mrb[0].mxu0 %v1195
        %v2945 = vpop.f32.mrb[0].mxu0
        %v2946 = vadd.f32 0.0, %v2945
        %v2947 = vpop.f32.mrb[0].mxu0
        %2948 = vmatprep.mubr.f32.mxu0 0.0
        %2949 = vmatmul.mubr.f32.gmra.mrb[0].mxu0 %v1197
        %v2950 = vpop.f32.mrb[0].mxu0
        %v2951 = vadd.f32 0.0, %v2950
        %v2952 = vpop.f32.mrb[0].mxu0
        %2953 = vmatprep.mubr.f32.mxu0 0.0
        %2954 = vmatmul.mubr.f32.gmra.mrb[0].mxu0 %v1199
        %v2955 = vpop.f32.mrb[0].mxu0
        %v2956 = vadd.f32 0.0, %v2955
        %v2957 = vpop.f32.mrb[0].mxu0
        %2958 = vmatprep.mubr.f32.mxu0 0.0
        %2959 = vmatmul.mubr.f32.gmra.mrb[0].mxu0 %v1201
        %v2960 = vpop.f32.mrb[0].mxu0
        %v2961 = vadd.f32 0.0, %v2960
        %v2962 = vpop.f32.mrb[0].mxu0
        %2963 = vmatprep.mubr.f32.mxu0 0.0
        %2964 = vmatmul.mubr.f32.gmra.mrb[0].mxu0 %v1203
        %v2965 = vpop.f32.mrb[0].mxu0
        %v2966 = vadd.f32 0.0, %v2965
        %v2967 = vpop.f32.mrb[0].mxu0
        %2968 = vmatprep.mubr.f32.mxu0 0.0
        %2969 = vmatmul.mubr.f32.gmra.mrb[0].mxu0 %v1205
        %v2970 = vpop.f32.mrb[0].mxu0
        %v2971 = vadd.f32 0.0, %v2970
        %v2972 = vpop.f32.mrb[0].mxu0
        %2973 = vmatprep.mubr.f32.mxu0 0.0
        %2974 = vmatmul.mubr.f32.gmra.mrb[0].mxu0 %v1207
        %v2975 = vpop.f32.mrb[0].mxu0
        %v2976 = vadd.f32 0.0, %v2975
        %v2977 = vpop.f32.mrb[0].mxu0
        %2978 = vmatprep.mubr.f32.mxu0 0.0
        %2979 = vmatmul.mubr.f32.gmra.mrb[0].mxu0 %v1209
        %v2980 = vpop.f32.mrb[0].mxu0
        %v2981 = vadd.f32 0.0, %v2980
        %v2982 = vpop.f32.mrb[0].mxu0
        %2983 = vmatprep.mubr.f32.mxu0 0.0
        %2984 = vmatmul.mubr.f32.gmra.mrb[0].mxu0 %v1211
        %v2985 = vpop.f32.mrb[0].mxu0
        %v2986 = vadd.f32 0.0, %v2985
        %v2987 = vpop.f32.mrb[0].mxu0
        %2988 = vmatprep.mubr.f32.mxu0 0.0
        %2989 = vmatmul.mubr.f32.gmra.mrb[0].mxu0 %v1213
        %v2990 = vpop.f32.mrb[0].mxu0
        %v2991 = vadd.f32 0.0, %v2990
        %v2992 = vpop.f32.mrb[0].mxu0
        %2993 = vmatprep.mubr.f32.mxu0 0.0
        %2994 = vmatmul.mubr.f32.gmra.mrb[0].mxu0 %v1215
        %v2995 = vpop.f32.mrb[0].mxu0
        %v2996 = vadd.f32 0.0, %v2995
        %v2997 = vpop.f32.mrb[0].mxu0
        %2998 = vmatprep.mubr.f32.mxu0 0.0
        %2999 = vmatmul.mubr.f32.gmra.mrb[0].mxu0 %v1217
        %v3000 = vpop.f32.mrb[0].mxu0
        %v3001 = vadd.f32 0.0, %v3000
        %v3002 = vpop.f32.mrb[0].mxu0
        %3003 = vmatprep.mubr.f32.mxu0 0.0
        %3004 = vmatmul.mubr.f32.gmra.mrb[0].mxu0 %v1219
        %v3005 = vpop.f32.mrb[0].mxu0
        %v3006 = vadd.f32 0.0, %v3005
        %v3007 = vpop.f32.mrb[0].mxu0
        %3008 = vmatprep.mubr.f32.mxu0 0.0
        %3009 = vmatmul.mubr.f32.gmra.mrb[0].mxu0 %v1221
        %v3010 = vpop.f32.mrb[0].mxu0
        %v3011 = vadd.f32 0.0, %v3010
        %v3012 = vpop.f32.mrb[0].mxu0
        %3013 = vmatprep.mubr.f32.mxu0 0.0
        %3014 = vmatmul.mubr.f32.gmra.mrb[0].mxu0 %v1223
        %v3015 = vpop.f32.mrb[0].mxu0
        %v3016 = vadd.f32 0.0, %v3015
        %v3017 = vpop.f32.mrb[0].mxu0
        %3018 = vmatprep.mubr.f32.mxu0 0.0
        %3019 = vmatmul.mubr.f32.gmra.mrb[0].mxu0 %v1225
        %v3020 = vpop.f32.mrb[0].mxu0
        %v3021 = vadd.f32 0.0, %v3020
        %v3022 = vpop.f32.mrb[0].mxu0
        %3023 = vmatprep.mubr.f32.mxu0 0.0
        %3024 = vmatmul.mubr.f32.gmra.mrb[0].mxu0 %v1227
        %v3025 = vpop.f32.mrb[0].mxu0
        %v3026 = vadd.f32 0.0, %v3025
        %v3027 = vpop.f32.mrb[0].mxu0
        %3028 = vmatprep.mubr.f32.mxu0 0.0
        %3029 = vmatmul.mubr.f32.gmra.mrb[0].mxu0 %v1229
        %v3030 = vpop.f32.mrb[0].mxu0
        %v3031 = vadd.f32 0.0, %v3030
        %v3032 = vpop.f32.mrb[0].mxu0
        %3033 = vmatprep.mubr.f32.mxu0 0.0
        %3034 = vmatmul.mubr.f32.gmra.mrb[0].mxu0 %v1231
        %v3035 = vpop.f32.mrb[0].mxu0
        %v3036 = vadd.f32 0.0, %v3035
        %v3037 = vpop.f32.mrb[0].mxu0
        %3038 = vmatprep.mubr.f32.mxu0 0.0
        %3039 = vmatmul.mubr.f32.gmra.mrb[0].mxu0 %v1233
        %v3040 = vpop.f32.mrb[0].mxu0
        %v3041 = vadd.f32 0.0, %v3040
        %v3042 = vpop.f32.mrb[0].mxu0
        %3043 = vmatprep.mubr.f32.mxu0 0.0
        %3044 = vmatmul.mubr.f32.gmra.mrb[0].mxu0 %v1235
        %v3045 = vpop.f32.mrb[0].mxu0
        %v3046 = vadd.f32 0.0, %v3045
        %v3047 = vpop.f32.mrb[0].mxu0
        %3048 = vmatprep.mubr.f32.mxu0 0.0
        %3049 = vmatmul.mubr.f32.gmra.mrb[0].mxu0 %v1237
        %v3050 = vpop.f32.mrb[0].mxu0
        %v3051 = vadd.f32 0.0, %v3050
        %v3052 = vpop.f32.mrb[0].mxu0
        %3053 = vmatprep.mubr.f32.mxu0 0.0
        %3054 = vmatmul.mubr.f32.gmra.mrb[0].mxu0 %v2040
        %v3055 = vpop.f32.mrb[0].mxu0
        %v3056 = vadd.f32 0.0, %v3055
        %v3057 = vpop.f32.mrb[0].mxu0
        %3058 = vmatprep.mubr.f32.mxu0 0.0
        %3059 = vmatmul.mubr.f32.gmra.mrb[0].mxu0 %v2042
        %v3060 = vpop.f32.mrb[0].mxu0
        %v3061 = vadd.f32 0.0, %v3060
        %v3062 = vpop.f32.mrb[0].mxu0
        %3063 = vmatprep.mubr.f32.mxu0 0.0
        %3064 = vmatmul.mubr.f32.gmra.mrb[0].mxu0 %v2845
        %v3065 = vpop.f32.mrb[0].mxu0
        %v3066 = vadd.f32 0.0, %v3065
        %v3067 = vpop.f32.mrb[0].mxu0
        %3068 = vmatprep.mubr.f32.mxu0 0.0
        %3069 = vmatmul.mubr.f32.gmra.mrb[0].mxu0 %v2847
        %v3070 = vpop.f32.mrb[0].mxu0
        %v3071 = vadd.f32 0.0, %v3070
        %v3072 = vpop.f32.mrb[0].mxu0
        %3073 = vdwg.mxu0
        %v3074 = vadd.f32 %v2805, %v2916
        %v3075 = vadd.f32 %v2806, %v2921
        %v3076 = vadd.f32 %v2807, %v2926
        %v3077 = vadd.f32 %v2808, %v2931
        %v3078 = vadd.f32 %v2809, %v2936
        %v3079 = vadd.f32 %v2810, %v2941
        %v3080 = vadd.f32 %v2811, %v2946
        %v3081 = vadd.f32 %v2812, %v2951
        %v3082 = vadd.f32 %v2813, %v2956
        %v3083 = vadd.f32 %v2814, %v2961
        %v3084 = vadd.f32 %v2815, %v2966
        %v3085 = vadd.f32 %v2816, %v2971
        %v3086 = vadd.f32 %v2817, %v2976
        %v3087 = vadd.f32 %v2818, %v2981
        %v3088 = vadd.f32 %v2819, %v2986
        %v3089 = vadd.f32 %v2820, %v2991
        %v3090 = vadd.f32 %v2821, %v2996
        %v3091 = vadd.f32 %v2822, %v3001
        %v3092 = vadd.f32 %v2823, %v3006
        %v3093 = vadd.f32 %v2824, %v3011
        %v3094 = vadd.f32 %v2825, %v3016
        %v3095 = vadd.f32 %v2826, %v3021
        %v3096 = vadd.f32 %v2827, %v3026
        %v3097 = vadd.f32 %v2828, %v3031
        %v3098 = vadd.f32 %v2829, %v3036
        %v3099 = vadd.f32 %v2830, %v3041
        %v3100 = vadd.f32 %v2831, %v3046
        %v3101 = vadd.f32 %v2832, %v3051
        %v3102 = vadd.f32 %v2833, %v3056
        %v3103 = vadd.f32 %v2834, %v3061
        %v3104 = vadd.f32 %v2835, %v3066
        %v3105 = vadd.f32 %v2836, %v3071
        %v3106 = vld [vmem:[%s2] sm:$0x1]
        %v3107 = vlaneseq
        %v3108 = vshrl.u32 %v3107, 7
        %v3109 = vsub.s32 0, %v3108
        %v3110 = vrot.slane %v3106, %v3109
        %v3111 = vadd.f32 %v3074, %v3110
        %v3112 = vadd.f32 %v3075, %v3110
        %v3113 = vadd.f32 %v3076, %v3110
        %v3114 = vadd.f32 %v3077, %v3110
        %v3115 = vadd.f32 %v3078, %v3110
        %v3116 = vadd.f32 %v3079, %v3110
        %v3117 = vadd.f32 %v3080, %v3110
        %v3118 = vadd.f32 %v3081, %v3110
        %v3119 = vadd.f32 %v3082, %v3110
        %v3120 = vadd.f32 %v3083, %v3110
        %v3121 = vadd.f32 %v3084, %v3110
        %v3122 = vadd.f32 %v3085, %v3110
        %v3123 = vadd.f32 %v3086, %v3110
        %v3124 = vadd.f32 %v3087, %v3110
        %v3125 = vadd.f32 %v3088, %v3110
        %v3126 = vadd.f32 %v3089, %v3110
        %v3127 = vadd.f32 %v3090, %v3110
        %v3128 = vadd.f32 %v3091, %v3110
        %v3129 = vadd.f32 %v3092, %v3110
        %v3130 = vadd.f32 %v3093, %v3110
        %v3131 = vadd.f32 %v3094, %v3110
        %v3132 = vadd.f32 %v3095, %v3110
        %v3133 = vadd.f32 %v3096, %v3110
        %v3134 = vadd.f32 %v3097, %v3110
        %v3135 = vadd.f32 %v3098, %v3110
        %v3136 = vadd.f32 %v3099, %v3110
        %v3137 = vadd.f32 %v3100, %v3110
        %v3138 = vadd.f32 %v3101, %v3110
        %v3139 = vadd.f32 %v3102, %v3110
        %v3140 = vadd.f32 %v3103, %v3110
        %v3141 = vadd.f32 %v3104, %v3110
        %v3142 = vadd.f32 %v3105, %v3110
        %v3143 = vmax.f32 %v3111, 0.0
        %v3144 = vmax.f32 %v3112, 0.0
        %v3145 = vmax.f32 %v3113, 0.0
        %v3146 = vmax.f32 %v3114, 0.0
        %v3147 = vmax.f32 %v3115, 0.0
        %v3148 = vmax.f32 %v3116, 0.0
        %v3149 = vmax.f32 %v3117, 0.0
        %v3150 = vmax.f32 %v3118, 0.0
        %v3151 = vmax.f32 %v3119, 0.0
        %v3152 = vmax.f32 %v3120, 0.0
        %v3153 = vmax.f32 %v3121, 0.0
        %v3154 = vmax.f32 %v3122, 0.0
        %v3155 = vmax.f32 %v3123, 0.0
        %v3156 = vmax.f32 %v3124, 0.0
        %v3157 = vmax.f32 %v3125, 0.0
        %v3158 = vmax.f32 %v3126, 0.0
        %v3159 = vmax.f32 %v3127, 0.0
        %v3160 = vmax.f32 %v3128, 0.0
        %v3161 = vmax.f32 %v3129, 0.0
        %v3162 = vmax.f32 %v3130, 0.0
        %v3163 = vmax.f32 %v3131, 0.0
        %v3164 = vmax.f32 %v3132, 0.0
        %v3165 = vmax.f32 %v3133, 0.0
        %v3166 = vmax.f32 %v3134, 0.0
        %v3167 = vmax.f32 %v3135, 0.0
        %v3168 = vmax.f32 %v3136, 0.0
        %v3169 = vmax.f32 %v3137, 0.0
        %v3170 = vmax.f32 %v3138, 0.0
        %v3171 = vmax.f32 %v3139, 0.0
        %v3172 = vmax.f32 %v3140, 0.0
        %v3173 = vmax.f32 %v3141, 0.0
        %v3174 = vmax.f32 %v3142, 0.0
        %v3175 = vld [vmem:[%s2 + $0x1] sm:$0x1]
        %v3176 = vlaneseq
        %v3177 = vshrl.u32 %v3176, 7
        %v3178 = vsub.s32 0, %v3177
        %v3179 = vrot.slane %v3175, %v3178
        %v3180 = vmul.f32 %v3143, %v3179
        %v3181 = vmul.f32 %v3144, %v3179
        %v3182 = vmul.f32 %v3145, %v3179
        %v3183 = vmul.f32 %v3146, %v3179
        %v3184 = vmul.f32 %v3147, %v3179
        %v3185 = vmul.f32 %v3148, %v3179
        %v3186 = vmul.f32 %v3149, %v3179
        %v3187 = vmul.f32 %v3150, %v3179
        %v3188 = vmul.f32 %v3151, %v3179
        %v3189 = vmul.f32 %v3152, %v3179
        %v3190 = vmul.f32 %v3153, %v3179
        %v3191 = vmul.f32 %v3154, %v3179
        %v3192 = vmul.f32 %v3155, %v3179
        %v3193 = vmul.f32 %v3156, %v3179
        %v3194 = vmul.f32 %v3157, %v3179
        %v3195 = vmul.f32 %v3158, %v3179
        %v3196 = vmul.f32 %v3159, %v3179
        %v3197 = vmul.f32 %v3160, %v3179
        %v3198 = vmul.f32 %v3161, %v3179
        %v3199 = vmul.f32 %v3162, %v3179
        %v3200 = vmul.f32 %v3163, %v3179
        %v3201 = vmul.f32 %v3164, %v3179
        %v3202 = vmul.f32 %v3165, %v3179
        %v3203 = vmul.f32 %v3166, %v3179
        %v3204 = vmul.f32 %v3167, %v3179
        %v3205 = vmul.f32 %v3168, %v3179
        %v3206 = vmul.f32 %v3169, %v3179
        %v3207 = vmul.f32 %v3170, %v3179
        %v3208 = vmul.f32 %v3171, %v3179
        %v3209 = vmul.f32 %v3172, %v3179
        %v3210 = vmul.f32 %v3173, %v3179
        %v3211 = vmul.f32 %v3174, %v3179
        %v3212 = vld [vmem:[%s2 + $0x2] sm:$0x1]
        %v3213 = vlaneseq
        %v3214 = vshrl.u32 %v3213, 7
        %v3215 = vsub.s32 0, %v3214
        %v3216 = vrot.slane %v3212, %v3215
        %v3217 = vadd.f32 %v3180, %v3216
        %v3218 = vadd.f32 %v3181, %v3216
        %v3219 = vadd.f32 %v3182, %v3216
        %v3220 = vadd.f32 %v3183, %v3216
        %v3221 = vadd.f32 %v3184, %v3216
        %v3222 = vadd.f32 %v3185, %v3216
        %v3223 = vadd.f32 %v3186, %v3216
        %v3224 = vadd.f32 %v3187, %v3216
        %v3225 = vadd.f32 %v3188, %v3216
        %v3226 = vadd.f32 %v3189, %v3216
        %v3227 = vadd.f32 %v3190, %v3216
        %v3228 = vadd.f32 %v3191, %v3216
        %v3229 = vadd.f32 %v3192, %v3216
        %v3230 = vadd.f32 %v3193, %v3216
        %v3231 = vadd.f32 %v3194, %v3216
        %v3232 = vadd.f32 %v3195, %v3216
        %v3233 = vadd.f32 %v3196, %v3216
        %v3234 = vadd.f32 %v3197, %v3216
        %v3235 = vadd.f32 %v3198, %v3216
        %v3236 = vadd.f32 %v3199, %v3216
        %v3237 = vadd.f32 %v3200, %v3216
        %v3238 = vadd.f32 %v3201, %v3216
        %v3239 = vadd.f32 %v3202, %v3216
        %v3240 = vadd.f32 %v3203, %v3216
        %v3241 = vadd.f32 %v3204, %v3216
        %v3242 = vadd.f32 %v3205, %v3216
        %v3243 = vadd.f32 %v3206, %v3216
        %v3244 = vadd.f32 %v3207, %v3216
        %v3245 = vadd.f32 %v3208, %v3216
        %v3246 = vadd.f32 %v3209, %v3216
        %v3247 = vadd.f32 %v3210, %v3216
        %v3248 = vadd.f32 %v3211, %v3216
        %vm3249 = vcmask 261120
        %3250 = vst.msk [vmem:[%s203] sm:$0xff] %vm3249, %v3217
        %3251 = vst.msk [vmem:[%s203 + $0x8] sm:$0xff] %vm3249, %v3218
        %3252 = vst.msk [vmem:[%s203 + $0x10] sm:$0xff] %vm3249, %v3219
        %3253 = vst.msk [vmem:[%s203 + $0x18] sm:$0xff] %vm3249, %v3220
        %3254 = vst.msk [vmem:[%s203 + $0x20] sm:$0xff] %vm3249, %v3221
        %3255 = vst.msk [vmem:[%s203 + $0x28] sm:$0xff] %vm3249, %v3222
        %3256 = vst.msk [vmem:[%s203 + $0x30] sm:$0xff] %vm3249, %v3223
        %3257 = vst.msk [vmem:[%s203 + $0x38] sm:$0xff] %vm3249, %v3224
        %3258 = vst.msk [vmem:[%s203 + $0x40] sm:$0xff] %vm3249, %v3225
        %3259 = vst.msk [vmem:[%s203 + $0x48] sm:$0xff] %vm3249, %v3226
        %3260 = vst.msk [vmem:[%s203 + $0x50] sm:$0xff] %vm3249, %v3227
        %3261 = vst.msk [vmem:[%s203 + $0x58] sm:$0xff] %vm3249, %v3228
        %3262 = vst.msk [vmem:[%s203 + $0x60] sm:$0xff] %vm3249, %v3229
        %3263 = vst.msk [vmem:[%s203 + $0x68] sm:$0xff] %vm3249, %v3230
        %3264 = vst.msk [vmem:[%s203 + $0x70] sm:$0xff] %vm3249, %v3231
        %3265 = vst.msk [vmem:[%s203 + $0x78] sm:$0xff] %vm3249, %v3232
        %3266 = vst.msk [vmem:[%s203 + $0x80] sm:$0xff] %vm3249, %v3233
        %3267 = vst.msk [vmem:[%s203 + $0x88] sm:$0xff] %vm3249, %v3234
        %3268 = vst.msk [vmem:[%s203 + $0x90] sm:$0xff] %vm3249, %v3235
        %3269 = vst.msk [vmem:[%s203 + $0x98] sm:$0xff] %vm3249, %v3236
        %3270 = vst.msk [vmem:[%s203 + $0xa0] sm:$0xff] %vm3249, %v3237
        %3271 = vst.msk [vmem:[%s203 + $0xa8] sm:$0xff] %vm3249, %v3238
        %3272 = vst.msk [vmem:[%s203 + $0xb0] sm:$0xff] %vm3249, %v3239
        %3273 = vst.msk [vmem:[%s203 + $0xb8] sm:$0xff] %vm3249, %v3240
        %3274 = vst.msk [vmem:[%s203 + $0xc0] sm:$0xff] %vm3249, %v3241
        %3275 = vst.msk [vmem:[%s203 + $0xc8] sm:$0xff] %vm3249, %v3242
        %3276 = vst.msk [vmem:[%s203 + $0xd0] sm:$0xff] %vm3249, %v3243
        %3277 = vst.msk [vmem:[%s203 + $0xd8] sm:$0xff] %vm3249, %v3244
        %3278 = vst.msk [vmem:[%s203 + $0xe0] sm:$0xff] %vm3249, %v3245
        %3279 = vst.msk [vmem:[%s203 + $0xe8] sm:$0xff] %vm3249, %v3246
        %3280 = vst.msk [vmem:[%s203 + $0xf0] sm:$0xff] %vm3249, %v3247
        %3281 = vst.msk [vmem:[%s203 + $0xf8] sm:$0xff] %vm3249, %v3248
        %s3282 = sand.u32 %s97, 1
        %s3283 = scalar_lea.sflag [#allocation5], %s3282
        %s3284 = sand.u32 %s97, 1
        %s3285 = smul.addr %s3284, 256
        %s3286 = scalar_lea.vmem [#allocation8], %s3285
        // Predicated region
        $region41: #{tpu_custom_call.1} parent=31 // pred_check
          %p3287 = pneg %p107
        $region42: #{tpu_custom_call.1} parent=31 // pred_check_branch
          %3289 = sbr.rel (%p3287) target = $region44
        $region43: #{tpu_custom_call.1} parent=31 // pred_region
          %s3291 = ssub.s32 4096, 4096
          %3292 = vsyncadd %s3283, %s3291
          %s3293 = smul.addr %s21, 32
          %s3294 = smul.addr %s3293, 128
          %s3295 = scalar_lea.hbm %s3, %s3294
          %s3296 = sshll.u32 %s3286, 4
          %s3297 = int_to_ptr.vmem [resolvable:$true] %s3296
          %3302 = dma.vmem_to_hbm [thread:$0]  %s3297, 4096, %s3295, %s3283, 128, 128, 8
        $region44: #{tpu_custom_call.1} parent=31 // pred_fallthru
          _
      $region32: #{tpu_custom_call.1} parent=5 // pred_fallthru
        _
      %p3303 = scmp.le.s32.totalorder 2, %s16
      // Predicated region
      $region45: #{tpu_custom_call.1} parent=5 // pred_check
        %p3304 = pneg %p3303
      $region46: #{tpu_custom_call.1} parent=5 // pred_check_branch
        %3306 = sbr.rel (%p3304) target = $region48
      $region47: #{tpu_custom_call.1} parent=5 // pred_region
        %s3307 = ssub.s32 %s16, 2
        // Predicated region
        $region49: #{tpu_custom_call.1} parent=47 // pred_check
          %p3308 = pneg %p113
        $region50: #{tpu_custom_call.1} parent=47 // pred_check_branch
          %3310 = sbr.rel (%p3308) target = $region52
        $region51: #{tpu_custom_call.1} parent=47 // pred_region
          %s3311 = sand.u32 %s98, 1
          %s3312 = scalar_lea.sflag [#allocation5], %s3311
          %s3313 = sand.u32 %s98, 1
          %s3314 = smul.addr %s3313, 256
          %s3315 = scalar_lea.vmem [#allocation8], %s3314
          %3316 = dma.done %s3312, 4096
        $region52: #{tpu_custom_call.1} parent=47 // pred_fallthru
          _
      $region48: #{tpu_custom_call.1} parent=5 // pred_fallthru
        _
    $region6: #{tpu_custom_call.1} parent=1 // loop_footer
      %s20 = sadd.s32 1, %s16
    $region7: #{tpu_custom_call.1} parent=1 // loop_footer_branch
      %15 = sbr.rel target = $region3
    $region8: #{tpu_custom_call.1} parent=1 // loop_exit
      _
    %3317 = vsyncpa [#allocation4], 1
    %s3318 = scalar_lea.sflag [#allocation4], 1
    %3319 = vsyncpa %s3318, 1
    %3320 = vsyncpa [#allocation7], 1
    %3321 = vsyncpa [#allocation5], 1
    %s3322 = scalar_lea.sflag [#allocation5], 1
    %3323 = vsyncpa %s3322, 1

</llo_original>
